<compile_context>
chip_gen: v6e
topology: v6e:2x2x1
jax: 0.10.0
libtpu: 0.0.40
codegen_flags: <defaults>
</compile_context>

<pallas_src>
import math

import jax
import jax.numpy as jnp
from jax.experimental import pallas as pl
from jax.experimental.pallas import tpu as pltpu

_LEAKY_SLOPE = 0.2
_BN_EPS = 0.8
_H1 = 128
_H2 = 256

_FUSED_VMEM_BUDGET = 12 * 1024 * 1024   # stay well under v5e's 16 MiB scoped default
_HEAD_TILE = 512                         # lane-dense tile for the big-out_dim fallback


def _round_up(x, m):
    return ((x + m - 1) // m) * m


def _leaky_relu(x):
    # identical to where(x > 0, x, slope * x) for slope in (0, 1)
    return jnp.maximum(x, _LEAKY_SLOPE * x)


def _trunk(z, w1, b1, w2, b2, gamma, beta):
    """z -> LeakyReLU(BN(Linear2(LeakyReLU(Linear1(z)))))  -> (B, 256) f32."""
    # Block 1: Linear(latent -> 128) + LeakyReLU (no normalization). latent is tiny,
    # keep the first dot in f32.
    h1 = jnp.dot(z, w1, preferred_element_type=jnp.float32) + b1
    h1 = _leaky_relu(h1)

    # Block 2: Linear(128 -> 256) (bf16 operands, f32 accumulation) + BatchNorm1d
    # (training-mode batch stats, eps=0.8) + LeakyReLU.
    h2 = jnp.dot(h1.astype(jnp.bfloat16), w2, preferred_element_type=jnp.float32) + b2
    mean = jnp.mean(h2, axis=0, keepdims=True)
    centered = h2 - mean                                     # two-pass, exact variance
    var = jnp.mean(centered * centered, axis=0, keepdims=True)
    h2n = centered * jax.lax.rsqrt(var + _BN_EPS)
    h2n = h2n * gamma + beta
    return _leaky_relu(h2n)


def fused_kernel(z_ref, w1_ref, b1_ref, w2_ref, b2_ref, gamma_ref, beta_ref,
                 w3_ref, b3_ref, out_ref):
    """Whole forward pass in one grid-less call; everything resident in VMEM."""
    h = _trunk(z_ref[...], w1_ref[...], b1_ref[...], w2_ref[...], b2_ref[...],
               gamma_ref[...], beta_ref[...])
    acc = jnp.dot(h.astype(jnp.bfloat16), w3_ref[...],
                  preferred_element_type=jnp.float32) + b3_ref[...]
    out_ref[...] = jax.nn.sigmoid(acc)


def fused_tiled_kernel(z_ref, w1_ref, b1_ref, w2_ref, b2_ref, gamma_ref, beta_ref,
                       w3_ref, b3_ref, out_ref, h_ref):
    """Large-out_dim fallback: trunk once at step 0 into VMEM scratch, then one
    lane-dense 512-wide column tile of Linear(256 -> out) + Sigmoid per step."""
    @pl.when(pl.program_id(0) == 0)
    def _():
        h = _trunk(z_ref[...], w1_ref[...], b1_ref[...], w2_ref[...], b2_ref[...],
                   gamma_ref[...], beta_ref[...])
        h_ref[...] = h.astype(h_ref.dtype)

    acc = jnp.dot(h_ref[...], w3_ref[...], preferred_element_type=jnp.float32)
    out_ref[...] = jax.nn.sigmoid(acc + b3_ref[...])


def generator_forward(z, params, img_shape, *, force_tiled=False):
    """z: (B, latent_dim) float32 -> (B, *img_shape) float32."""
    B, latent = z.shape
    out_dim = math.prod(img_shape)

    w1, b1 = params["w1"], params["b1"]
    w2, b2 = params["w2"].astype(jnp.bfloat16), params["b2"]
    gamma, beta = params["gamma"], params["beta"]
    w3, b3 = params["w3"].astype(jnp.bfloat16), params["b3"]

    # Fused working-set estimate (output + w3 dominate; rest is < 300 KiB).
    fused_bytes = B * out_dim * 4 + _H2 * out_dim * 2 + 3 * B * _H2 * 4 + 300 * 1024

    if not force_tiled and fused_bytes <= _FUSED_VMEM_BUDGET:
        # Single fused kernel: no grid, no HBM round-trip for h, no per-step overhead.
        # Output keeps the true out_dim (only the tail of the last 128-lane chunk is
        # a masked store), so the reshape below is a free bitcast (no XLA slice pass).
        flat = pl.pallas_call(
            fused_kernel,
            out_shape=jax.ShapeDtypeStruct((B, out_dim), jnp.float32),
        )(z, w1, b1, w2, b2, gamma, beta, w3, b3)
        return flat.reshape(B, *img_shape)

    # ---- big-out_dim fallback: column-tiled head, trunk fused at step 0 ----
    tn = _HEAD_TILE
    out_dim_p = _round_up(out_dim, tn)
    n_tiles = out_dim_p // tn
    if out_dim_p != out_dim:
        w3 = jnp.pad(w3, ((0, 0), (0, out_dim_p - out_dim)))
        b3 = jnp.pad(b3, ((0, 0), (0, out_dim_p - out_dim)))

    flat = pl.pallas_call(
        fused_tiled_kernel,
        out_shape=jax.ShapeDtypeStruct((B, out_dim_p), jnp.float32),
        grid=(n_tiles,),
        in_specs=[
            pl.BlockSpec((B, latent), lambda j: (0, 0)),     # resident trunk operands
            pl.BlockSpec((latent, _H1), lambda j: (0, 0)),
            pl.BlockSpec((1, _H1), lambda j: (0, 0)),
            pl.BlockSpec((_H1, _H2), lambda j: (0, 0)),
            pl.BlockSpec((1, _H2), lambda j: (0, 0)),
            pl.BlockSpec((1, _H2), lambda j: (0, 0)),
            pl.BlockSpec((1, _H2), lambda j: (0, 0)),
            pl.BlockSpec((_H2, tn), lambda j: (0, j)),       # stream bf16 w3 column tiles
            pl.BlockSpec((1, tn), lambda j: (0, j)),
        ],
        out_specs=pl.BlockSpec((B, tn), lambda j: (0, j)),
        scratch_shapes=[pltpu.VMEM((B, _H2), jnp.bfloat16)],
        compiler_params=pltpu.CompilerParams(
            # trunk scratch carries across grid steps -> sequential axis
            dimension_semantics=("arbitrary",),
            vmem_limit_bytes=32 * 1024 * 1024,
        ),
    )(z, w1, b1, w2, b2, gamma, beta, w3, b3)

    return flat[:, :out_dim].reshape(B, *img_shape)


def init_params(key, latent_dim, img_shape):
    """Deterministic init; weights stored as (in, out) so kernels compute x @ W + b."""
    out_dim = math.prod(img_shape)
    k1, k2, k3, k4, k5, k6 = jax.random.split(key, 6)

    def linear_init(kw, kb, fan_in, fan_out):
        # mimic PyTorch default U(-1/sqrt(fan_in), 1/sqrt(fan_in))
        bound = 1.0 / jnp.sqrt(jnp.float32(fan_in))
        w = jax.random.uniform(kw, (fan_in, fan_out), jnp.float32, -bound, bound)
        b = jax.random.uniform(kb, (1, fan_out), jnp.float32, -bound, bound)
        return w, b

    w1, b1 = linear_init(k1, k2, latent_dim, _H1)
    w2, b2 = linear_init(k3, k4, _H1, _H2)
    w3, b3 = linear_init(k5, k6, _H2, out_dim)
    gamma = jnp.ones((1, _H2), jnp.float32)   # BatchNorm1d default weight
    beta = jnp.zeros((1, _H2), jnp.float32)   # BatchNorm1d default bias
    return {"w1": w1, "b1": b1, "w2": w2, "b2": b2,
            "gamma": gamma, "beta": beta, "w3": w3, "b3": b3}


def _reference_forward(z, params, img_shape):
    """Pure-JAX f32 reference matching the PyTorch module (training-mode BN)."""
    h1 = z @ params["w1"] + params["b1"]
    h1 = jnp.where(h1 > 0, h1, _LEAKY_SLOPE * h1)
    h2 = h1 @ params["w2"] + params["b2"]
    mean = jnp.mean(h2, axis=0, keepdims=True)
    var = jnp.mean((h2 - mean) ** 2, axis=0, keepdims=True)
    h2n = (h2 - mean) / jnp.sqrt(var + _BN_EPS)
    h2n = h2n * params["gamma"] + params["beta"]
    h2n = jnp.where(h2n > 0, h2n, _LEAKY_SLOPE * h2n)
    h3 = h2n @ params["w3"] + params["b3"]
    return jax.nn.sigmoid(h3).reshape(z.shape[0], *img_shape)


if __name__ == "__main__":
    img_shape = (1, 28, 28)   # prod = 784
    latent_dim = 64
    batch = 256               # fills the MXU M dimension

    key = jax.random.PRNGKey(0)
    kz, kp = jax.random.split(key)
    z = jax.random.normal(kz, (batch, latent_dim), jnp.float32)
    params = init_params(kp, latent_dim, img_shape)

    ref = _reference_forward(z, params, img_shape)

    # --- primary (fully fused, single grid-less pallas_call) path ---
    img = generator_forward(z, params, img_shape)
    jax.block_until_ready(img)
    assert img.shape == (batch,) + img_shape, img.shape
    assert bool(jnp.all(jnp.isfinite(img)))
    assert bool(jnp.all((img >= 0.0) & (img <= 1.0)))   # sigmoid output range
    max_err = float(jnp.max(jnp.abs(img - ref)))
    assert max_err < 3e-2, max_err                      # bf16 operands, f32 accumulation

    # --- also exercise the large-out_dim column-tiled fallback path ---
    img_tiled = generator_forward(z, params, img_shape, force_tiled=True)
    jax.block_until_ready(img_tiled)
    assert img_tiled.shape == (batch,) + img_shape, img_tiled.shape
    max_err_tiled = float(jnp.max(jnp.abs(img_tiled - ref)))
    assert max_err_tiled < 3e-2, max_err_tiled

    print("KERNEL_OK")
</pallas_src>

<mosaic_0001>
module attributes {stable_mosaic.version = 11 : i64} {
  func.func @fused_kernel(%arg0: memref<256x64xf32, #tpu.memory_space<vmem>>, %arg1: memref<64x128xf32, #tpu.memory_space<vmem>>, %arg2: memref<1x128xf32, #tpu.memory_space<vmem>>, %arg3: memref<128x256xbf16, #tpu.memory_space<vmem>>, %arg4: memref<1x256xf32, #tpu.memory_space<vmem>>, %arg5: memref<1x256xf32, #tpu.memory_space<vmem>>, %arg6: memref<1x256xf32, #tpu.memory_space<vmem>>, %arg7: memref<256x784xbf16, #tpu.memory_space<vmem>>, %arg8: memref<1x784xf32, #tpu.memory_space<vmem>>, %arg9: memref<256x784xf32, #tpu.memory_space<vmem>>) attributes {dimension_semantics = [], scalar_prefetch = 0 : i64, scratch_operands = 0 : i64, tpu.core_type = #tpu.core_type<tc>} {
    %c0 = arith.constant 0 : index
    %c0_0 = arith.constant 0 : index
    %0 = vector.load %arg0[%c0, %c0_0] : memref<256x64xf32, #tpu.memory_space<vmem>>, vector<256x64xf32>
    %c0_1 = arith.constant 0 : index
    %c0_2 = arith.constant 0 : index
    %1 = vector.load %arg1[%c0_1, %c0_2] : memref<64x128xf32, #tpu.memory_space<vmem>>, vector<64x128xf32>
    %c0_3 = arith.constant 0 : index
    %c0_4 = arith.constant 0 : index
    %2 = vector.load %arg2[%c0_3, %c0_4] : memref<1x128xf32, #tpu.memory_space<vmem>>, vector<1x128xf32>
    %c0_5 = arith.constant 0 : index
    %c0_6 = arith.constant 0 : index
    %3 = vector.load %arg3[%c0_5, %c0_6] : memref<128x256xbf16, #tpu.memory_space<vmem>>, vector<128x256xbf16>
    %c0_7 = arith.constant 0 : index
    %c0_8 = arith.constant 0 : index
    %4 = vector.load %arg4[%c0_7, %c0_8] : memref<1x256xf32, #tpu.memory_space<vmem>>, vector<1x256xf32>
    %c0_9 = arith.constant 0 : index
    %c0_10 = arith.constant 0 : index
    %5 = vector.load %arg5[%c0_9, %c0_10] : memref<1x256xf32, #tpu.memory_space<vmem>>, vector<1x256xf32>
    %c0_11 = arith.constant 0 : index
    %c0_12 = arith.constant 0 : index
    %6 = vector.load %arg6[%c0_11, %c0_12] : memref<1x256xf32, #tpu.memory_space<vmem>>, vector<1x256xf32>
    %cst = arith.constant dense<0.000000e+00> : vector<256x128xf32>
    %7 = tpu.matmul %0, %1, %cst {dimension_numbers = #tpu.dot_dimension_numbers<[1], [0], [0], [1], [0, 0, 1, 1], [], []>} : vector<256x64xf32>, vector<64x128xf32>, vector<256x128xf32> -> vector<256x128xf32>
    %8 = vector.broadcast %2 : vector<1x128xf32> to vector<256x128xf32>
    %9 = arith.addf %7, %8 : vector<256x128xf32>
    %cst_13 = arith.constant 2.000000e-01 : f32
    %10 = vector.broadcast %cst_13 : f32 to vector<256x128xf32>
    %11 = arith.mulf %10, %9 : vector<256x128xf32>
    %12 = arith.maximumf %9, %11 : vector<256x128xf32>
    %13 = arith.truncf %12 : vector<256x128xf32> to vector<256x128xbf16>
    %cst_14 = arith.constant dense<0.000000e+00> : vector<256x256xf32>
    %14 = tpu.matmul %13, %3, %cst_14 {dimension_numbers = #tpu.dot_dimension_numbers<[1], [0], [0], [1], [0, 0, 1, 1], [], []>} : vector<256x128xbf16>, vector<128x256xbf16>, vector<256x256xf32> -> vector<256x256xf32>
    %15 = vector.broadcast %4 : vector<1x256xf32> to vector<256x256xf32>
    %16 = arith.addf %14, %15 : vector<256x256xf32>
    %cst_15 = arith.constant dense<0.000000e+00> : vector<256xf32>
    %17 = vector.multi_reduction <add>, %16, %cst_15 [0] : vector<256x256xf32> to vector<256xf32>
    %18 = vector.shape_cast %17 : vector<256xf32> to vector<1x256xf32>
    %cst_16 = arith.constant 2.560000e+02 : f32
    %19 = vector.broadcast %cst_16 : f32 to vector<1x256xf32>
    %20 = arith.divf %18, %19 : vector<1x256xf32>
    %21 = vector.broadcast %20 : vector<1x256xf32> to vector<256x256xf32>
    %22 = arith.subf %16, %21 : vector<256x256xf32>
    %23 = arith.mulf %22, %22 : vector<256x256xf32>
    %cst_17 = arith.constant dense<0.000000e+00> : vector<256xf32>
    %24 = vector.multi_reduction <add>, %23, %cst_17 [0] : vector<256x256xf32> to vector<256xf32>
    %25 = vector.shape_cast %24 : vector<256xf32> to vector<1x256xf32>
    %cst_18 = arith.constant 2.560000e+02 : f32
    %26 = vector.broadcast %cst_18 : f32 to vector<1x256xf32>
    %27 = arith.divf %25, %26 : vector<1x256xf32>
    %cst_19 = arith.constant 8.000000e-01 : f32
    %28 = vector.broadcast %cst_19 : f32 to vector<1x256xf32>
    %29 = arith.addf %27, %28 : vector<1x256xf32>
    %30 = math.rsqrt %29 : vector<1x256xf32>
    %31 = vector.broadcast %30 : vector<1x256xf32> to vector<256x256xf32>
    %32 = arith.mulf %22, %31 : vector<256x256xf32>
    %33 = vector.broadcast %5 : vector<1x256xf32> to vector<256x256xf32>
    %34 = arith.mulf %32, %33 : vector<256x256xf32>
    %35 = vector.broadcast %6 : vector<1x256xf32> to vector<256x256xf32>
    %36 = arith.addf %34, %35 : vector<256x256xf32>
    %cst_20 = arith.constant 2.000000e-01 : f32
    %37 = vector.broadcast %cst_20 : f32 to vector<256x256xf32>
    %38 = arith.mulf %37, %36 : vector<256x256xf32>
    %39 = arith.maximumf %36, %38 : vector<256x256xf32>
    %40 = arith.truncf %39 : vector<256x256xf32> to vector<256x256xbf16>
    %c0_21 = arith.constant 0 : index
    %c0_22 = arith.constant 0 : index
    %41 = vector.load %arg7[%c0_21, %c0_22] : memref<256x784xbf16, #tpu.memory_space<vmem>>, vector<256x784xbf16>
    %cst_23 = arith.constant dense<0.000000e+00> : vector<256x784xf32>
    %42 = tpu.matmul %40, %41, %cst_23 {dimension_numbers = #tpu.dot_dimension_numbers<[1], [0], [0], [1], [0, 0, 1, 1], [], []>} : vector<256x256xbf16>, vector<256x784xbf16>, vector<256x784xf32> -> vector<256x784xf32>
    %c0_24 = arith.constant 0 : index
    %c0_25 = arith.constant 0 : index
    %43 = vector.load %arg8[%c0_24, %c0_25] : memref<1x784xf32, #tpu.memory_space<vmem>>, vector<1x784xf32>
    %44 = vector.broadcast %43 : vector<1x784xf32> to vector<256x784xf32>
    %45 = arith.addf %42, %44 : vector<256x784xf32>
    %46 = arith.negf %45 : vector<256x784xf32>
    %47 = math.exp %46 : vector<256x784xf32>
    %cst_26 = arith.constant 1.000000e+00 : f32
    %48 = vector.broadcast %cst_26 : f32 to vector<256x784xf32>
    %49 = arith.addf %48, %47 : vector<256x784xf32>
    %50 = arith.divf %48, %49 : vector<256x784xf32>
    %c0_27 = arith.constant 0 : index
    %c0_28 = arith.constant 0 : index
    %51 = vector.load %arg9[%c0_27, %c0_28] : memref<256x784xf32, #tpu.memory_space<vmem>>, vector<256x784xf32>
    tpu.vector_store %arg9[%c0_27, %c0_28], %50 {strides = array<i32>} : memref<256x784xf32, #tpu.memory_space<vmem>>, vector<256x784xf32>,
    return
  }
}

</mosaic_0001>

<llo_original>
// kernel: tpu_custom_call.1
$region0: #{tpu_custom_call.1}
  #allocation0 [shape = 'u32[]', space=smem, size = 0x4, offset = 0x4, fixed_abs, tag = 'smem constant byte address 0x4 - core index']
  #allocation1 [shape = 'u32[144,128]{1,0:T(1,128)}', space=vmem, size = 0x12000, scoped, tag = 'internal scratch']
  %s0 = inlined_call_operand.vmem [shape: f32[256,64], index: 0, kind: input, shape index: {}]
  %s1 = inlined_call_operand.vmem [shape: f32[64,128], index: 1, kind: input, shape index: {}]
  %s2 = inlined_call_operand.vmem [shape: f32[1,128], index: 2, kind: input, shape index: {}]
  %s3 = inlined_call_operand.vmem [shape: bf16[128,256], index: 3, kind: input, shape index: {}]
  %s4 = inlined_call_operand.vmem [shape: f32[1,256], index: 4, kind: input, shape index: {}]
  %s5 = inlined_call_operand.vmem [shape: f32[1,256], index: 5, kind: input, shape index: {}]
  %s6 = inlined_call_operand.vmem [shape: f32[1,256], index: 6, kind: input, shape index: {}]
  %s7 = inlined_call_operand.vmem [shape: bf16[256,784], index: 7, kind: input, shape index: {}]
  %s8 = inlined_call_operand.vmem [shape: f32[1,784], index: 8, kind: input, shape index: {}]
  %s9 = inlined_call_operand.vmem [shape: f32[256,784], index: 9, kind: output, shape index: {}]
  %s10 = sld [smem:[#allocation0]]
  $region46: #{tpu_custom_call.1} parent=0
    _
  %s12 = ssub.s32 1, %s10
  %s13 = scalar_select 0, %s12, %s10
  // Predicated region
  $region2: #{tpu_custom_call.1} parent=0 // pred_check
    _
  $region3: #{tpu_custom_call.1} parent=0 // pred_check_branch
    %15 = sbr.rel (0) target = $region5
  $region4: #{tpu_custom_call.1} parent=0 // pred_region
    _
  $region5: #{tpu_custom_call.1} parent=0 // pred_fallthru
    _
  // Predicated region
  $region6: #{tpu_custom_call.1} parent=0 // pred_check
    _
  $region7: #{tpu_custom_call.1} parent=0 // pred_check_branch
    %17 = sbr.rel (0) target = $region9
  $region8: #{tpu_custom_call.1} parent=0 // pred_region
    _
  $region9: #{tpu_custom_call.1} parent=0 // pred_fallthru
    _
  // Predicated region
  $region10: #{tpu_custom_call.1} parent=0 // pred_check
    _
  $region11: #{tpu_custom_call.1} parent=0 // pred_check_branch
    %19 = sbr.rel (0) target = $region13
  $region12: #{tpu_custom_call.1} parent=0 // pred_region
    _
  $region13: #{tpu_custom_call.1} parent=0 // pred_fallthru
    _
  // Predicated region
  $region14: #{tpu_custom_call.1} parent=0 // pred_check
    _
  $region15: #{tpu_custom_call.1} parent=0 // pred_check_branch
    %21 = sbr.rel (0) target = $region17
  $region16: #{tpu_custom_call.1} parent=0 // pred_region
    _
  $region17: #{tpu_custom_call.1} parent=0 // pred_fallthru
    _
  // Predicated region
  $region18: #{tpu_custom_call.1} parent=0 // pred_check
    _
  $region19: #{tpu_custom_call.1} parent=0 // pred_check_branch
    %23 = sbr.rel (0) target = $region21
  $region20: #{tpu_custom_call.1} parent=0 // pred_region
    _
  $region21: #{tpu_custom_call.1} parent=0 // pred_fallthru
    _
  // Predicated region
  $region22: #{tpu_custom_call.1} parent=0 // pred_check
    _
  $region23: #{tpu_custom_call.1} parent=0 // pred_check_branch
    %25 = sbr.rel (0) target = $region25
  $region24: #{tpu_custom_call.1} parent=0 // pred_region
    _
  $region25: #{tpu_custom_call.1} parent=0 // pred_fallthru
    _
  // Predicated region
  $region26: #{tpu_custom_call.1} parent=0 // pred_check
    _
  $region27: #{tpu_custom_call.1} parent=0 // pred_check_branch
    %27 = sbr.rel (0) target = $region29
  $region28: #{tpu_custom_call.1} parent=0 // pred_region
    _
  $region29: #{tpu_custom_call.1} parent=0 // pred_fallthru
    _
  // Predicated region
  $region30: #{tpu_custom_call.1} parent=0 // pred_check
    _
  $region31: #{tpu_custom_call.1} parent=0 // pred_check_branch
    %29 = sbr.rel (0) target = $region33
  $region32: #{tpu_custom_call.1} parent=0 // pred_region
    _
  $region33: #{tpu_custom_call.1} parent=0 // pred_fallthru
    _
  // Predicated region
  $region34: #{tpu_custom_call.1} parent=0 // pred_check
    _
  $region35: #{tpu_custom_call.1} parent=0 // pred_check_branch
    %31 = sbr.rel (0) target = $region37
  $region36: #{tpu_custom_call.1} parent=0 // pred_region
    _
  $region37: #{tpu_custom_call.1} parent=0 // pred_fallthru
    _
  %v33 = vld [vmem:[%s0] sm:$0xff]
  %v34 = vld [vmem:[%s0 + $0x8] sm:$0xff]
  %v35 = vld [vmem:[%s0 + $0x10] sm:$0xff]
  %v36 = vld [vmem:[%s0 + $0x18] sm:$0xff]
  %v37 = vld [vmem:[%s0 + $0x20] sm:$0xff]
  %v38 = vld [vmem:[%s0 + $0x28] sm:$0xff]
  %v39 = vld [vmem:[%s0 + $0x30] sm:$0xff]
  %v40 = vld [vmem:[%s0 + $0x38] sm:$0xff]
  %v41 = vld [vmem:[%s0 + $0x40] sm:$0xff]
  %v42 = vld [vmem:[%s0 + $0x48] sm:$0xff]
  %v43 = vld [vmem:[%s0 + $0x50] sm:$0xff]
  %v44 = vld [vmem:[%s0 + $0x58] sm:$0xff]
  %v45 = vld [vmem:[%s0 + $0x60] sm:$0xff]
  %v46 = vld [vmem:[%s0 + $0x68] sm:$0xff]
  %v47 = vld [vmem:[%s0 + $0x70] sm:$0xff]
  %v48 = vld [vmem:[%s0 + $0x78] sm:$0xff]
  %v49 = vld [vmem:[%s0 + $0x80] sm:$0xff]
  %v50 = vld [vmem:[%s0 + $0x88] sm:$0xff]
  %v51 = vld [vmem:[%s0 + $0x90] sm:$0xff]
  %v52 = vld [vmem:[%s0 + $0x98] sm:$0xff]
  %v53 = vld [vmem:[%s0 + $0xa0] sm:$0xff]
  %v54 = vld [vmem:[%s0 + $0xa8] sm:$0xff]
  %v55 = vld [vmem:[%s0 + $0xb0] sm:$0xff]
  %v56 = vld [vmem:[%s0 + $0xb8] sm:$0xff]
  %v57 = vld [vmem:[%s0 + $0xc0] sm:$0xff]
  %v58 = vld [vmem:[%s0 + $0xc8] sm:$0xff]
  %v59 = vld [vmem:[%s0 + $0xd0] sm:$0xff]
  %v60 = vld [vmem:[%s0 + $0xd8] sm:$0xff]
  %v61 = vld [vmem:[%s0 + $0xe0] sm:$0xff]
  %v62 = vld [vmem:[%s0 + $0xe8] sm:$0xff]
  %v63 = vld [vmem:[%s0 + $0xf0] sm:$0xff]
  %v64 = vld [vmem:[%s0 + $0xf8] sm:$0xff]
  %v65 = vld [vmem:[%s1] sm:$0xff]
  %v66 = vld [vmem:[%s1 + $0x8] sm:$0xff]
  %v67 = vld [vmem:[%s1 + $0x10] sm:$0xff]
  %v68 = vld [vmem:[%s1 + $0x18] sm:$0xff]
  %v69 = vld [vmem:[%s1 + $0x20] sm:$0xff]
  %v70 = vld [vmem:[%s1 + $0x28] sm:$0xff]
  %v71 = vld [vmem:[%s1 + $0x30] sm:$0xff]
  %v72 = vld [vmem:[%s1 + $0x38] sm:$0xff]
  %v73 = vld [vmem:[%s2] sm:$0x1]
  %v74 = vld [vmem:[%s3] sm:$0xff]
  %v75 = vld [vmem:[%s3 + $0x8] sm:$0xff]
  %v76 = vld [vmem:[%s3 + $0x10] sm:$0xff]
  %v77 = vld [vmem:[%s3 + $0x18] sm:$0xff]
  %v78 = vld [vmem:[%s3 + $0x20] sm:$0xff]
  %v79 = vld [vmem:[%s3 + $0x28] sm:$0xff]
  %v80 = vld [vmem:[%s3 + $0x30] sm:$0xff]
  %v81 = vld [vmem:[%s3 + $0x38] sm:$0xff]
  %v82 = vld [vmem:[%s3 + $0x40] sm:$0xff]
  %v83 = vld [vmem:[%s3 + $0x48] sm:$0xff]
  %v84 = vld [vmem:[%s3 + $0x50] sm:$0xff]
  %v85 = vld [vmem:[%s3 + $0x58] sm:$0xff]
  %v86 = vld [vmem:[%s3 + $0x60] sm:$0xff]
  %v87 = vld [vmem:[%s3 + $0x68] sm:$0xff]
  %v88 = vld [vmem:[%s3 + $0x70] sm:$0xff]
  %v89 = vld [vmem:[%s3 + $0x78] sm:$0xff]
  %v90 = vld [vmem:[%s4] sm:$0x3]
  %v91 = vld [vmem:[%s5] sm:$0x3]
  %v92 = vld [vmem:[%s6] sm:$0x3]
  %v94 = vlaneseq
  %v95 = vshrl.u32 %v94, 7
  %v96 = vsub.s32 0, %v95
  %v97 = vrot.slane %v73, %v96
  %vm99 = vcmask 523264
  %v101 = vsel %vm99, %v33, 0
  %v104 = vsel %vm99, %v34, 0
  %v107 = vsel %vm99, %v35, 0
  %v110 = vsel %vm99, %v36, 0
  %v113 = vsel %vm99, %v37, 0
  %v116 = vsel %vm99, %v38, 0
  %v119 = vsel %vm99, %v39, 0
  %v122 = vsel %vm99, %v40, 0
  %v125 = vsel %vm99, %v41, 0
  %v128 = vsel %vm99, %v42, 0
  %v131 = vsel %vm99, %v43, 0
  %v134 = vsel %vm99, %v44, 0
  %v137 = vsel %vm99, %v45, 0
  %v140 = vsel %vm99, %v46, 0
  %v143 = vsel %vm99, %v47, 0
  %v146 = vsel %vm99, %v48, 0
  %v149 = vsel %vm99, %v49, 0
  %v152 = vsel %vm99, %v50, 0
  %v155 = vsel %vm99, %v51, 0
  %v158 = vsel %vm99, %v52, 0
  %v161 = vsel %vm99, %v53, 0
  %v164 = vsel %vm99, %v54, 0
  %v167 = vsel %vm99, %v55, 0
  %v170 = vsel %vm99, %v56, 0
  %v173 = vsel %vm99, %v57, 0
  %v176 = vsel %vm99, %v58, 0
  %v179 = vsel %vm99, %v59, 0
  %v182 = vsel %vm99, %v60, 0
  %v185 = vsel %vm99, %v61, 0
  %v188 = vsel %vm99, %v62, 0
  %v191 = vsel %vm99, %v63, 0
  %v194 = vsel %vm99, %v64, 0
  %196 = vmatprep.subr.mxu0 0.0
  %197 = vmatpush1.msra.mxu0 0.0
  %198 = vmatprep.subr.mxu0 0.0
  %199 = vmatpush1.msra.mxu0 0.0
  %200 = vmatprep.subr.mxu0 0.0
  %201 = vmatpush1.msra.mxu0 0.0
  %202 = vmatprep.subr.mxu0 0.0
  %203 = vmatpush1.msra.mxu0 0.0
  %204 = vmatprep.subr.mxu0 0.0
  %205 = vmatpush1.msra.mxu0 0.0
  %206 = vmatprep.subr.mxu0 0.0
  %207 = vmatpush1.msra.mxu0 0.0
  %208 = vmatprep.subr.mxu0 0.0
  %209 = vmatpush1.msra.mxu0 0.0
  %210 = vmatprep.subr.mxu0 0.0
  %211 = vmatpush1.msra.mxu0 0.0
  %212 = vmatprep.subr.mxu0 0.0
  %213 = vmatpush1.msra.mxu0 %v72
  %214 = vmatprep.subr.mxu0 0.0
  %215 = vmatpush1.msra.mxu0 %v71
  %216 = vmatprep.subr.mxu0 0.0
  %217 = vmatpush1.msra.mxu0 %v70
  %218 = vmatprep.subr.mxu0 0.0
  %219 = vmatpush1.msra.mxu0 %v69
  %220 = vmatprep.subr.mxu0 0.0
  %221 = vmatpush1.msra.mxu0 %v68
  %222 = vmatprep.subr.mxu0 0.0
  %223 = vmatpush1.msra.mxu0 %v67
  %224 = vmatprep.subr.mxu0 0.0
  %225 = vmatpush1.msra.mxu0 %v66
  %226 = vmatprep.subr.mxu0 0.0
  %227 = vmatpush1.msra.mxu0 %v65
  %228 = vmatprep.subr.mxu0 0.0
  %229 = vmatpush2.msra.mxu0 0.0
  %230 = vmatprep.subr.mxu0 0.0
  %231 = vmatpush2.msra.mxu0 0.0
  %232 = vmatprep.subr.mxu0 0.0
  %233 = vmatpush2.msra.mxu0 0.0
  %234 = vmatprep.subr.mxu0 0.0
  %235 = vmatpush2.msra.mxu0 0.0
  %236 = vmatprep.subr.mxu0 0.0
  %237 = vmatpush2.msra.mxu0 0.0
  %238 = vmatprep.subr.mxu0 0.0
  %239 = vmatpush2.msra.mxu0 0.0
  %240 = vmatprep.subr.mxu0 0.0
  %241 = vmatpush2.msra.mxu0 0.0
  %242 = vmatprep.subr.mxu0 0.0
  %243 = vmatpush2.msra.mxu0 0.0
  %244 = vmatprep.subr.mxu0 0.0
  %245 = vmatpush2.msra.mxu0 0.0
  %246 = vmatprep.subr.mxu0 0.0
  %247 = vmatpush2.msra.mxu0 0.0
  %248 = vmatprep.subr.mxu0 0.0
  %249 = vmatpush2.msra.mxu0 0.0
  %250 = vmatprep.subr.mxu0 0.0
  %251 = vmatpush2.msra.mxu0 0.0
  %252 = vmatprep.subr.mxu0 0.0
  %253 = vmatpush2.msra.mxu0 0.0
  %254 = vmatprep.subr.mxu0 0.0
  %255 = vmatpush2.msra.mxu0 0.0
  %256 = vmatprep.subr.mxu0 0.0
  %257 = vmatpush2.msra.mxu0 0.0
  %258 = vmatprep.subr.mxu0 0.0
  %259 = vmatpush2.msra.mxu0 0.0
  %260 = vmatprep.mubr.f32.mxu0 0.0
  %261 = vmatmul.mubr.f32.gmra.mxu0 %v101
  %v262 = vpop.f32.mrf.mxu0
  %v263 = vadd.f32 %v97, %v262
  %v264 = vpop.f32.mrf.mxu0
  %265 = vmatprep.mubr.f32.mxu0 0.0
  %266 = vmatmul.mubr.f32.gmra.mxu0 %v104
  %v267 = vpop.f32.mrf.mxu0
  %v268 = vadd.f32 %v97, %v267
  %v269 = vpop.f32.mrf.mxu0
  %270 = vmatprep.mubr.f32.mxu0 0.0
  %271 = vmatmul.mubr.f32.gmra.mxu0 %v107
  %v272 = vpop.f32.mrf.mxu0
  %v273 = vadd.f32 %v97, %v272
  %v274 = vpop.f32.mrf.mxu0
  %275 = vmatprep.mubr.f32.mxu0 0.0
  %276 = vmatmul.mubr.f32.gmra.mxu0 %v110
  %v277 = vpop.f32.mrf.mxu0
  %v278 = vadd.f32 %v97, %v277
  %v279 = vpop.f32.mrf.mxu0
  %280 = vmatprep.mubr.f32.mxu0 0.0
  %281 = vmatmul.mubr.f32.gmra.mxu0 %v113
  %v282 = vpop.f32.mrf.mxu0
  %v283 = vadd.f32 %v97, %v282
  %v284 = vpop.f32.mrf.mxu0
  %285 = vmatprep.mubr.f32.mxu0 0.0
  %286 = vmatmul.mubr.f32.gmra.mxu0 %v116
  %v287 = vpop.f32.mrf.mxu0
  %v288 = vadd.f32 %v97, %v287
  %v289 = vpop.f32.mrf.mxu0
  %290 = vmatprep.mubr.f32.mxu0 0.0
  %291 = vmatmul.mubr.f32.gmra.mxu0 %v119
  %v292 = vpop.f32.mrf.mxu0
  %v293 = vadd.f32 %v97, %v292
  %v294 = vpop.f32.mrf.mxu0
  %295 = vmatprep.mubr.f32.mxu0 0.0
  %296 = vmatmul.mubr.f32.gmra.mxu0 %v122
  %v297 = vpop.f32.mrf.mxu0
  %v298 = vadd.f32 %v97, %v297
  %v299 = vpop.f32.mrf.mxu0
  %300 = vmatprep.mubr.f32.mxu0 0.0
  %301 = vmatmul.mubr.f32.gmra.mxu0 %v125
  %v302 = vpop.f32.mrf.mxu0
  %v303 = vadd.f32 %v97, %v302
  %v304 = vpop.f32.mrf.mxu0
  %305 = vmatprep.mubr.f32.mxu0 0.0
  %306 = vmatmul.mubr.f32.gmra.mxu0 %v128
  %v307 = vpop.f32.mrf.mxu0
  %v308 = vadd.f32 %v97, %v307
  %v309 = vpop.f32.mrf.mxu0
  %310 = vmatprep.mubr.f32.mxu0 0.0
  %311 = vmatmul.mubr.f32.gmra.mxu0 %v131
  %v312 = vpop.f32.mrf.mxu0
  %v313 = vadd.f32 %v97, %v312
  %v314 = vpop.f32.mrf.mxu0
  %315 = vmatprep.mubr.f32.mxu0 0.0
  %316 = vmatmul.mubr.f32.gmra.mxu0 %v134
  %v317 = vpop.f32.mrf.mxu0
  %v318 = vadd.f32 %v97, %v317
  %v319 = vpop.f32.mrf.mxu0
  %320 = vmatprep.mubr.f32.mxu0 0.0
  %321 = vmatmul.mubr.f32.gmra.mxu0 %v137
  %v322 = vpop.f32.mrf.mxu0
  %v323 = vadd.f32 %v97, %v322
  %v324 = vpop.f32.mrf.mxu0
  %325 = vmatprep.mubr.f32.mxu0 0.0
  %326 = vmatmul.mubr.f32.gmra.mxu0 %v140
  %v327 = vpop.f32.mrf.mxu0
  %v328 = vadd.f32 %v97, %v327
  %v329 = vpop.f32.mrf.mxu0
  %330 = vmatprep.mubr.f32.mxu0 0.0
  %331 = vmatmul.mubr.f32.gmra.mxu0 %v143
  %v332 = vpop.f32.mrf.mxu0
  %v333 = vadd.f32 %v97, %v332
  %v334 = vpop.f32.mrf.mxu0
  %335 = vmatprep.mubr.f32.mxu0 0.0
  %336 = vmatmul.mubr.f32.gmra.mxu0 %v146
  %v337 = vpop.f32.mrf.mxu0
  %v338 = vadd.f32 %v97, %v337
  %v339 = vpop.f32.mrf.mxu0
  %340 = vmatprep.mubr.f32.mxu0 0.0
  %341 = vmatmul.mubr.f32.gmra.mxu0 %v149
  %v342 = vpop.f32.mrf.mxu0
  %v343 = vadd.f32 %v97, %v342
  %v344 = vpop.f32.mrf.mxu0
  %345 = vmatprep.mubr.f32.mxu0 0.0
  %346 = vmatmul.mubr.f32.gmra.mxu0 %v152
  %v347 = vpop.f32.mrf.mxu0
  %v348 = vadd.f32 %v97, %v347
  %v349 = vpop.f32.mrf.mxu0
  %350 = vmatprep.mubr.f32.mxu0 0.0
  %351 = vmatmul.mubr.f32.gmra.mxu0 %v155
  %v352 = vpop.f32.mrf.mxu0
  %v353 = vadd.f32 %v97, %v352
  %v354 = vpop.f32.mrf.mxu0
  %355 = vmatprep.mubr.f32.mxu0 0.0
  %356 = vmatmul.mubr.f32.gmra.mxu0 %v158
  %v357 = vpop.f32.mrf.mxu0
  %v358 = vadd.f32 %v97, %v357
  %v359 = vpop.f32.mrf.mxu0
  %360 = vmatprep.mubr.f32.mxu0 0.0
  %361 = vmatmul.mubr.f32.gmra.mxu0 %v161
  %v362 = vpop.f32.mrf.mxu0
  %v363 = vadd.f32 %v97, %v362
  %v364 = vpop.f32.mrf.mxu0
  %365 = vmatprep.mubr.f32.mxu0 0.0
  %366 = vmatmul.mubr.f32.gmra.mxu0 %v164
  %v367 = vpop.f32.mrf.mxu0
  %v368 = vadd.f32 %v97, %v367
  %v369 = vpop.f32.mrf.mxu0
  %370 = vmatprep.mubr.f32.mxu0 0.0
  %371 = vmatmul.mubr.f32.gmra.mxu0 %v167
  %v372 = vpop.f32.mrf.mxu0
  %v373 = vadd.f32 %v97, %v372
  %v374 = vpop.f32.mrf.mxu0
  %375 = vmatprep.mubr.f32.mxu0 0.0
  %376 = vmatmul.mubr.f32.gmra.mxu0 %v170
  %v377 = vpop.f32.mrf.mxu0
  %v378 = vadd.f32 %v97, %v377
  %v379 = vpop.f32.mrf.mxu0
  %380 = vmatprep.mubr.f32.mxu0 0.0
  %381 = vmatmul.mubr.f32.gmra.mxu0 %v173
  %v382 = vpop.f32.mrf.mxu0
  %v383 = vadd.f32 %v97, %v382
  %v384 = vpop.f32.mrf.mxu0
  %385 = vmatprep.mubr.f32.mxu0 0.0
  %386 = vmatmul.mubr.f32.gmra.mxu0 %v176
  %v387 = vpop.f32.mrf.mxu0
  %v388 = vadd.f32 %v97, %v387
  %v389 = vpop.f32.mrf.mxu0
  %390 = vmatprep.mubr.f32.mxu0 0.0
  %391 = vmatmul.mubr.f32.gmra.mxu0 %v179
  %v392 = vpop.f32.mrf.mxu0
  %v393 = vadd.f32 %v97, %v392
  %v394 = vpop.f32.mrf.mxu0
  %395 = vmatprep.mubr.f32.mxu0 0.0
  %396 = vmatmul.mubr.f32.gmra.mxu0 %v182
  %v397 = vpop.f32.mrf.mxu0
  %v398 = vadd.f32 %v97, %v397
  %v399 = vpop.f32.mrf.mxu0
  %400 = vmatprep.mubr.f32.mxu0 0.0
  %401 = vmatmul.mubr.f32.gmra.mxu0 %v185
  %v402 = vpop.f32.mrf.mxu0
  %v403 = vadd.f32 %v97, %v402
  %v404 = vpop.f32.mrf.mxu0
  %405 = vmatprep.mubr.f32.mxu0 0.0
  %406 = vmatmul.mubr.f32.gmra.mxu0 %v188
  %v407 = vpop.f32.mrf.mxu0
  %v408 = vadd.f32 %v97, %v407
  %v409 = vpop.f32.mrf.mxu0
  %410 = vmatprep.mubr.f32.mxu0 0.0
  %411 = vmatmul.mubr.f32.gmra.mxu0 %v191
  %v412 = vpop.f32.mrf.mxu0
  %v413 = vadd.f32 %v97, %v412
  %v414 = vpop.f32.mrf.mxu0
  %415 = vmatprep.mubr.f32.mxu0 0.0
  %416 = vmatmul.mubr.f32.gmra.mxu0 %v194
  %v417 = vpop.f32.mrf.mxu0
  %v418 = vadd.f32 %v97, %v417
  %v419 = vpop.f32.mrf.mxu0
  %420 = vdwg.mxu0
  %v421 = vmul.f32 %v263, 0.2
  %v422 = vmul.f32 %v268, 0.2
  %v423 = vmul.f32 %v273, 0.2
  %v424 = vmul.f32 %v278, 0.2
  %v425 = vmul.f32 %v283, 0.2
  %v426 = vmul.f32 %v288, 0.2
  %v427 = vmul.f32 %v293, 0.2
  %v428 = vmul.f32 %v298, 0.2
  %v429 = vmul.f32 %v303, 0.2
  %v430 = vmul.f32 %v308, 0.2
  %v431 = vmul.f32 %v313, 0.2
  %v432 = vmul.f32 %v318, 0.2
  %v433 = vmul.f32 %v323, 0.2
  %v434 = vmul.f32 %v328, 0.2
  %v435 = vmul.f32 %v333, 0.2
  %v436 = vmul.f32 %v338, 0.2
  %v437 = vmul.f32 %v343, 0.2
  %v438 = vmul.f32 %v348, 0.2
  %v439 = vmul.f32 %v353, 0.2
  %v440 = vmul.f32 %v358, 0.2
  %v441 = vmul.f32 %v363, 0.2
  %v442 = vmul.f32 %v368, 0.2
  %v443 = vmul.f32 %v373, 0.2
  %v444 = vmul.f32 %v378, 0.2
  %v445 = vmul.f32 %v383, 0.2
  %v446 = vmul.f32 %v388, 0.2
  %v447 = vmul.f32 %v393, 0.2
  %v448 = vmul.f32 %v398, 0.2
  %v449 = vmul.f32 %v403, 0.2
  %v450 = vmul.f32 %v408, 0.2
  %v451 = vmul.f32 %v413, 0.2
  %v452 = vmul.f32 %v418, 0.2
  %v453 = vmax.f32 %v263, %v421
  %v454 = vmax.f32 %v268, %v422
  %v455 = vmax.f32 %v273, %v423
  %v456 = vmax.f32 %v278, %v424
  %v457 = vmax.f32 %v283, %v425
  %v458 = vmax.f32 %v288, %v426
  %v459 = vmax.f32 %v293, %v427
  %v460 = vmax.f32 %v298, %v428
  %v461 = vmax.f32 %v303, %v429
  %v462 = vmax.f32 %v308, %v430
  %v463 = vmax.f32 %v313, %v431
  %v464 = vmax.f32 %v318, %v432
  %v465 = vmax.f32 %v323, %v433
  %v466 = vmax.f32 %v328, %v434
  %v467 = vmax.f32 %v333, %v435
  %v468 = vmax.f32 %v338, %v436
  %v469 = vmax.f32 %v343, %v437
  %v470 = vmax.f32 %v348, %v438
  %v471 = vmax.f32 %v353, %v439
  %v472 = vmax.f32 %v358, %v440
  %v473 = vmax.f32 %v363, %v441
  %v474 = vmax.f32 %v368, %v442
  %v475 = vmax.f32 %v373, %v443
  %v476 = vmax.f32 %v378, %v444
  %v477 = vmax.f32 %v383, %v445
  %v478 = vmax.f32 %v388, %v446
  %v479 = vmax.f32 %v393, %v447
  %v480 = vmax.f32 %v398, %v448
  %v481 = vmax.f32 %v403, %v449
  %v482 = vmax.f32 %v408, %v450
  %v483 = vmax.f32 %v413, %v451
  %v484 = vmax.f32 %v418, %v452
  %v485 = vpack.c.bf16 %v454, %v453
  %v486 = vpack.c.bf16 %v456, %v455
  %v487 = vpack.c.bf16 %v458, %v457
  %v488 = vpack.c.bf16 %v460, %v459
  %v489 = vpack.c.bf16 %v462, %v461
  %v490 = vpack.c.bf16 %v464, %v463
  %v491 = vpack.c.bf16 %v466, %v465
  %v492 = vpack.c.bf16 %v468, %v467
  %v493 = vpack.c.bf16 %v470, %v469
  %v494 = vpack.c.bf16 %v472, %v471
  %v495 = vpack.c.bf16 %v474, %v473
  %v496 = vpack.c.bf16 %v476, %v475
  %v497 = vpack.c.bf16 %v478, %v477
  %v498 = vpack.c.bf16 %v480, %v479
  %v499 = vpack.c.bf16 %v482, %v481
  %v500 = vpack.c.bf16 %v484, %v483
  %v502 = vlaneseq
  %v503 = vshrl.u32 %v502, 7
  %v504 = vsub.s32 0, %v503
  %v505 = vrot.slane %v90, %v504
  %v506 = vlaneseq
  %v507 = vshrl.u32 %v506, 7
  %v508 = vsub.s32 1, %v507
  %v509 = vrot.slane %v90, %v508
  %v528 = vunpack.c.l.b16 %v74
  %v529 = vunpack.c.h.b16 %v74
  %v530 = vunpack.c.l.b16 %v75
  %v531 = vunpack.c.h.b16 %v75
  %v532 = vunpack.c.l.b16 %v76
  %v533 = vunpack.c.h.b16 %v76
  %v534 = vunpack.c.l.b16 %v77
  %v535 = vunpack.c.h.b16 %v77
  %v536 = vunpack.c.l.b16 %v78
  %v537 = vunpack.c.h.b16 %v78
  %v538 = vunpack.c.l.b16 %v79
  %v539 = vunpack.c.h.b16 %v79
  %v540 = vunpack.c.l.b16 %v80
  %v541 = vunpack.c.h.b16 %v80
  %v542 = vunpack.c.l.b16 %v81
  %v543 = vunpack.c.h.b16 %v81
  %v544 = vunpack.c.l.b16 %v82
  %v545 = vunpack.c.h.b16 %v82
  %v546 = vunpack.c.l.b16 %v83
  %v547 = vunpack.c.h.b16 %v83
  %v548 = vunpack.c.l.b16 %v84
  %v549 = vunpack.c.h.b16 %v84
  %v550 = vunpack.c.l.b16 %v85
  %v551 = vunpack.c.h.b16 %v85
  %v552 = vunpack.c.l.b16 %v86
  %v553 = vunpack.c.h.b16 %v86
  %v554 = vunpack.c.l.b16 %v87
  %v555 = vunpack.c.h.b16 %v87
  %v556 = vunpack.c.l.b16 %v88
  %v557 = vunpack.c.h.b16 %v88
  %v558 = vunpack.c.l.b16 %v89
  %v559 = vunpack.c.h.b16 %v89
  %v560 = vpack.c.b16 %v530, %v528
  %v561 = vpack.c.b16 %v531, %v529
  %v562 = vpack.c.b16 %v534, %v532
  %v563 = vpack.c.b16 %v535, %v533
  %v564 = vpack.c.b16 %v538, %v536
  %v565 = vpack.c.b16 %v539, %v537
  %v566 = vpack.c.b16 %v542, %v540
  %v567 = vpack.c.b16 %v543, %v541
  %v568 = vpack.c.b16 %v546, %v544
  %v569 = vpack.c.b16 %v547, %v545
  %v570 = vpack.c.b16 %v550, %v548
  %v571 = vpack.c.b16 %v551, %v549
  %v572 = vpack.c.b16 %v554, %v552
  %v573 = vpack.c.b16 %v555, %v553
  %v574 = vpack.c.b16 %v558, %v556
  %v575 = vpack.c.b16 %v559, %v557
  %592 = vmatprep.subr.bf16.mxu0 %v575
  %593 = vmatpush1.bf16.msra.mxu0 %v574
  %594 = vmatprep.subr.bf16.mxu0 %v573
  %595 = vmatpush1.bf16.msra.mxu0 %v572
  %596 = vmatprep.subr.bf16.mxu0 %v571
  %597 = vmatpush1.bf16.msra.mxu0 %v570
  %598 = vmatprep.subr.bf16.mxu0 %v569
  %599 = vmatpush1.bf16.msra.mxu0 %v568
  %600 = vmatprep.subr.bf16.mxu0 %v567
  %601 = vmatpush1.bf16.msra.mxu0 %v566
  %602 = vmatprep.subr.bf16.mxu0 %v565
  %603 = vmatpush1.bf16.msra.mxu0 %v564
  %604 = vmatprep.subr.bf16.mxu0 %v563
  %605 = vmatpush1.bf16.msra.mxu0 %v562
  %606 = vmatprep.subr.bf16.mxu0 %v561
  %607 = vmatpush1.bf16.msra.mxu0 %v560
  %608 = vmatprep.subr.bf16.mxu0 0
  %609 = vmatpush2.bf16.msra.mxu0 0
  %610 = vmatprep.subr.bf16.mxu0 0
  %611 = vmatpush2.bf16.msra.mxu0 0
  %612 = vmatprep.subr.bf16.mxu0 0
  %613 = vmatpush2.bf16.msra.mxu0 0
  %614 = vmatprep.subr.bf16.mxu0 0
  %615 = vmatpush2.bf16.msra.mxu0 0
  %616 = vmatprep.subr.bf16.mxu0 0
  %617 = vmatpush2.bf16.msra.mxu0 0
  %618 = vmatprep.subr.bf16.mxu0 0
  %619 = vmatpush2.bf16.msra.mxu0 0
  %620 = vmatprep.subr.bf16.mxu0 0
  %621 = vmatpush2.bf16.msra.mxu0 0
  %622 = vmatprep.subr.bf16.mxu0 0
  %623 = vmatpush2.bf16.msra.mxu0 0
  %624 = vmatprep.mubr.bf16.mxu0 0
  %625 = vmatmul.mubr.bf16.gmra.mxu0 %v485
  %v626 = vpop.f32.mrf.mxu0
  %v627 = vadd.f32 %v505, %v626
  %v628 = vpop.f32.mrf.mxu0
  %v629 = vadd.f32 %v509, %v628
  %v630 = vpop.f32.mrf.mxu0
  %v631 = vadd.f32 %v505, %v630
  %v632 = vpop.f32.mrf.mxu0
  %v633 = vadd.f32 %v509, %v632
  %634 = vmatprep.mubr.bf16.mxu0 0
  %635 = vmatmul.mubr.bf16.gmra.mxu0 %v486
  %v636 = vpop.f32.mrf.mxu0
  %v637 = vadd.f32 %v505, %v636
  %v638 = vpop.f32.mrf.mxu0
  %v639 = vadd.f32 %v509, %v638
  %v640 = vpop.f32.mrf.mxu0
  %v641 = vadd.f32 %v505, %v640
  %v642 = vpop.f32.mrf.mxu0
  %v643 = vadd.f32 %v509, %v642
  %644 = vmatprep.mubr.bf16.mxu0 0
  %645 = vmatmul.mubr.bf16.gmra.mxu0 %v487
  %v646 = vpop.f32.mrf.mxu0
  %v647 = vadd.f32 %v505, %v646
  %v648 = vpop.f32.mrf.mxu0
  %v649 = vadd.f32 %v509, %v648
  %v650 = vpop.f32.mrf.mxu0
  %v651 = vadd.f32 %v505, %v650
  %v652 = vpop.f32.mrf.mxu0
  %v653 = vadd.f32 %v509, %v652
  %654 = vmatprep.mubr.bf16.mxu0 0
  %655 = vmatmul.mubr.bf16.gmra.mxu0 %v488
  %v656 = vpop.f32.mrf.mxu0
  %v657 = vadd.f32 %v505, %v656
  %v658 = vpop.f32.mrf.mxu0
  %v659 = vadd.f32 %v509, %v658
  %v660 = vpop.f32.mrf.mxu0
  %v661 = vadd.f32 %v505, %v660
  %v662 = vpop.f32.mrf.mxu0
  %v663 = vadd.f32 %v509, %v662
  %664 = vmatprep.mubr.bf16.mxu0 0
  %665 = vmatmul.mubr.bf16.gmra.mxu0 %v489
  %v666 = vpop.f32.mrf.mxu0
  %v667 = vadd.f32 %v505, %v666
  %v668 = vpop.f32.mrf.mxu0
  %v669 = vadd.f32 %v509, %v668
  %v670 = vpop.f32.mrf.mxu0
  %v671 = vadd.f32 %v505, %v670
  %v672 = vpop.f32.mrf.mxu0
  %v673 = vadd.f32 %v509, %v672
  %674 = vmatprep.mubr.bf16.mxu0 0
  %675 = vmatmul.mubr.bf16.gmra.mxu0 %v490
  %v676 = vpop.f32.mrf.mxu0
  %v677 = vadd.f32 %v505, %v676
  %v678 = vpop.f32.mrf.mxu0
  %v679 = vadd.f32 %v509, %v678
  %v680 = vpop.f32.mrf.mxu0
  %v681 = vadd.f32 %v505, %v680
  %v682 = vpop.f32.mrf.mxu0
  %v683 = vadd.f32 %v509, %v682
  %684 = vmatprep.mubr.bf16.mxu0 0
  %685 = vmatmul.mubr.bf16.gmra.mxu0 %v491
  %v686 = vpop.f32.mrf.mxu0
  %v687 = vadd.f32 %v505, %v686
  %v688 = vpop.f32.mrf.mxu0
  %v689 = vadd.f32 %v509, %v688
  %v690 = vpop.f32.mrf.mxu0
  %v691 = vadd.f32 %v505, %v690
  %v692 = vpop.f32.mrf.mxu0
  %v693 = vadd.f32 %v509, %v692
  %694 = vmatprep.mubr.bf16.mxu0 0
  %695 = vmatmul.mubr.bf16.gmra.mxu0 %v492
  %v696 = vpop.f32.mrf.mxu0
  %v697 = vadd.f32 %v505, %v696
  %v698 = vpop.f32.mrf.mxu0
  %v699 = vadd.f32 %v509, %v698
  %v700 = vpop.f32.mrf.mxu0
  %v701 = vadd.f32 %v505, %v700
  %v702 = vpop.f32.mrf.mxu0
  %v703 = vadd.f32 %v509, %v702
  %704 = vmatprep.mubr.bf16.mxu0 0
  %705 = vmatmul.mubr.bf16.gmra.mxu0 %v493
  %v706 = vpop.f32.mrf.mxu0
  %v707 = vadd.f32 %v505, %v706
  %v708 = vpop.f32.mrf.mxu0
  %v709 = vadd.f32 %v509, %v708
  %v710 = vpop.f32.mrf.mxu0
  %v711 = vadd.f32 %v505, %v710
  %v712 = vpop.f32.mrf.mxu0
  %v713 = vadd.f32 %v509, %v712
  %714 = vmatprep.mubr.bf16.mxu0 0
  %715 = vmatmul.mubr.bf16.gmra.mxu0 %v494
  %v716 = vpop.f32.mrf.mxu0
  %v717 = vadd.f32 %v505, %v716
  %v718 = vpop.f32.mrf.mxu0
  %v719 = vadd.f32 %v509, %v718
  %v720 = vpop.f32.mrf.mxu0
  %v721 = vadd.f32 %v505, %v720
  %v722 = vpop.f32.mrf.mxu0
  %v723 = vadd.f32 %v509, %v722
  %724 = vmatprep.mubr.bf16.mxu0 0
  %725 = vmatmul.mubr.bf16.gmra.mxu0 %v495
  %v726 = vpop.f32.mrf.mxu0
  %v727 = vadd.f32 %v505, %v726
  %v728 = vpop.f32.mrf.mxu0
  %v729 = vadd.f32 %v509, %v728
  %v730 = vpop.f32.mrf.mxu0
  %v731 = vadd.f32 %v505, %v730
  %v732 = vpop.f32.mrf.mxu0
  %v733 = vadd.f32 %v509, %v732
  %734 = vmatprep.mubr.bf16.mxu0 0
  %735 = vmatmul.mubr.bf16.gmra.mxu0 %v496
  %v736 = vpop.f32.mrf.mxu0
  %v737 = vadd.f32 %v505, %v736
  %v738 = vpop.f32.mrf.mxu0
  %v739 = vadd.f32 %v509, %v738
  %v740 = vpop.f32.mrf.mxu0
  %v741 = vadd.f32 %v505, %v740
  %v742 = vpop.f32.mrf.mxu0
  %v743 = vadd.f32 %v509, %v742
  %744 = vmatprep.mubr.bf16.mxu0 0
  %745 = vmatmul.mubr.bf16.gmra.mxu0 %v497
  %v746 = vpop.f32.mrf.mxu0
  %v747 = vadd.f32 %v505, %v746
  %v748 = vpop.f32.mrf.mxu0
  %v749 = vadd.f32 %v509, %v748
  %v750 = vpop.f32.mrf.mxu0
  %v751 = vadd.f32 %v505, %v750
  %v752 = vpop.f32.mrf.mxu0
  %v753 = vadd.f32 %v509, %v752
  %754 = vmatprep.mubr.bf16.mxu0 0
  %755 = vmatmul.mubr.bf16.gmra.mxu0 %v498
  %v756 = vpop.f32.mrf.mxu0
  %v757 = vadd.f32 %v505, %v756
  %v758 = vpop.f32.mrf.mxu0
  %v759 = vadd.f32 %v509, %v758
  %v760 = vpop.f32.mrf.mxu0
  %v761 = vadd.f32 %v505, %v760
  %v762 = vpop.f32.mrf.mxu0
  %v763 = vadd.f32 %v509, %v762
  %764 = vmatprep.mubr.bf16.mxu0 0
  %765 = vmatmul.mubr.bf16.gmra.mxu0 %v499
  %v766 = vpop.f32.mrf.mxu0
  %v767 = vadd.f32 %v505, %v766
  %v768 = vpop.f32.mrf.mxu0
  %v769 = vadd.f32 %v509, %v768
  %v770 = vpop.f32.mrf.mxu0
  %v771 = vadd.f32 %v505, %v770
  %v772 = vpop.f32.mrf.mxu0
  %v773 = vadd.f32 %v509, %v772
  %774 = vmatprep.mubr.bf16.mxu0 0
  %775 = vmatmul.mubr.bf16.gmra.mxu0 %v500
  %v776 = vpop.f32.mrf.mxu0
  %v777 = vadd.f32 %v505, %v776
  %v778 = vpop.f32.mrf.mxu0
  %v779 = vadd.f32 %v509, %v778
  %v780 = vpop.f32.mrf.mxu0
  %v781 = vadd.f32 %v505, %v780
  %v782 = vpop.f32.mrf.mxu0
  %v783 = vadd.f32 %v509, %v782
  %784 = vdwg.mxu0
  %v785 = vadd.f32 %v627, %v631
  %v786 = vadd.f32 %v785, %v637
  %v787 = vadd.f32 %v786, %v641
  %v788 = vadd.f32 %v787, %v647
  %v789 = vadd.f32 %v788, %v651
  %v790 = vadd.f32 %v789, %v657
  %v791 = vadd.f32 %v790, %v661
  %v792 = vadd.f32 %v791, %v667
  %v793 = vadd.f32 %v792, %v671
  %v794 = vadd.f32 %v793, %v677
  %v795 = vadd.f32 %v794, %v681
  %v796 = vadd.f32 %v795, %v687
  %v797 = vadd.f32 %v796, %v691
  %v798 = vadd.f32 %v797, %v697
  %v799 = vadd.f32 %v798, %v701
  %v800 = vadd.f32 %v799, %v707
  %v801 = vadd.f32 %v800, %v711
  %v802 = vadd.f32 %v801, %v717
  %v803 = vadd.f32 %v802, %v721
  %v804 = vadd.f32 %v803, %v727
  %v805 = vadd.f32 %v804, %v731
  %v806 = vadd.f32 %v805, %v737
  %v807 = vadd.f32 %v806, %v741
  %v808 = vadd.f32 %v807, %v747
  %v809 = vadd.f32 %v808, %v751
  %v810 = vadd.f32 %v809, %v757
  %v811 = vadd.f32 %v810, %v761
  %v812 = vadd.f32 %v811, %v767
  %v813 = vadd.f32 %v812, %v771
  %v814 = vadd.f32 %v813, %v777
  %v815 = vadd.f32 %v814, %v781
  %v816 = vrot.slane %v815, 4
  %v817 = vadd.f32 %v815, %v816
  %v818 = vrot.slane %v817, 2
  %v819 = vadd.f32 %v817, %v818
  %v820 = vrot.slane %v819, 1
  %v821 = vadd.f32 %v819, %v820
  %v822 = vadd.f32 %v629, %v633
  %v823 = vadd.f32 %v822, %v639
  %v824 = vadd.f32 %v823, %v643
  %v825 = vadd.f32 %v824, %v649
  %v826 = vadd.f32 %v825, %v653
  %v827 = vadd.f32 %v826, %v659
  %v828 = vadd.f32 %v827, %v663
  %v829 = vadd.f32 %v828, %v669
  %v830 = vadd.f32 %v829, %v673
  %v831 = vadd.f32 %v830, %v679
  %v832 = vadd.f32 %v831, %v683
  %v833 = vadd.f32 %v832, %v689
  %v834 = vadd.f32 %v833, %v693
  %v835 = vadd.f32 %v834, %v699
  %v836 = vadd.f32 %v835, %v703
  %v837 = vadd.f32 %v836, %v709
  %v838 = vadd.f32 %v837, %v713
  %v839 = vadd.f32 %v838, %v719
  %v840 = vadd.f32 %v839, %v723
  %v841 = vadd.f32 %v840, %v729
  %v842 = vadd.f32 %v841, %v733
  %v843 = vadd.f32 %v842, %v739
  %v844 = vadd.f32 %v843, %v743
  %v845 = vadd.f32 %v844, %v749
  %v846 = vadd.f32 %v845, %v753
  %v847 = vadd.f32 %v846, %v759
  %v848 = vadd.f32 %v847, %v763
  %v849 = vadd.f32 %v848, %v769
  %v850 = vadd.f32 %v849, %v773
  %v851 = vadd.f32 %v850, %v779
  %v852 = vadd.f32 %v851, %v783
  %v853 = vrot.slane %v852, 4
  %v854 = vadd.f32 %v852, %v853
  %v855 = vrot.slane %v854, 2
  %v856 = vadd.f32 %v854, %v855
  %v857 = vrot.slane %v856, 1
  %v858 = vadd.f32 %v856, %v857
  %v859 = vrcp.pop 256.0
  %v860 = vmul.f32 %v821, %v859
  %v861 = vmul.f32 %v858, %v859
  %v862 = vsub.f32 %v627, %v860
  %v863 = vsub.f32 %v629, %v861
  %v864 = vsub.f32 %v631, %v860
  %v865 = vsub.f32 %v633, %v861
  %v866 = vsub.f32 %v637, %v860
  %v867 = vsub.f32 %v639, %v861
  %v868 = vsub.f32 %v641, %v860
  %v869 = vsub.f32 %v643, %v861
  %v870 = vsub.f32 %v647, %v860
  %v871 = vsub.f32 %v649, %v861
  %v872 = vsub.f32 %v651, %v860
  %v873 = vsub.f32 %v653, %v861
  %v874 = vsub.f32 %v657, %v860
  %v875 = vsub.f32 %v659, %v861
  %v876 = vsub.f32 %v661, %v860
  %v877 = vsub.f32 %v663, %v861
  %v878 = vsub.f32 %v667, %v860
  %v879 = vsub.f32 %v669, %v861
  %v880 = vsub.f32 %v671, %v860
  %v881 = vsub.f32 %v673, %v861
  %v882 = vsub.f32 %v677, %v860
  %v883 = vsub.f32 %v679, %v861
  %v884 = vsub.f32 %v681, %v860
  %v885 = vsub.f32 %v683, %v861
  %v886 = vsub.f32 %v687, %v860
  %v887 = vsub.f32 %v689, %v861
  %v888 = vsub.f32 %v691, %v860
  %v889 = vsub.f32 %v693, %v861
  %v890 = vsub.f32 %v697, %v860
  %v891 = vsub.f32 %v699, %v861
  %v892 = vsub.f32 %v701, %v860
  %v893 = vsub.f32 %v703, %v861
  %v894 = vsub.f32 %v707, %v860
  %v895 = vsub.f32 %v709, %v861
  %v896 = vsub.f32 %v711, %v860
  %v897 = vsub.f32 %v713, %v861
  %v898 = vsub.f32 %v717, %v860
  %v899 = vsub.f32 %v719, %v861
  %v900 = vsub.f32 %v721, %v860
  %v901 = vsub.f32 %v723, %v861
  %v902 = vsub.f32 %v727, %v860
  %v903 = vsub.f32 %v729, %v861
  %v904 = vsub.f32 %v731, %v860
  %v905 = vsub.f32 %v733, %v861
  %v906 = vsub.f32 %v737, %v860
  %v907 = vsub.f32 %v739, %v861
  %v908 = vsub.f32 %v741, %v860
  %v909 = vsub.f32 %v743, %v861
  %v910 = vsub.f32 %v747, %v860
  %v911 = vsub.f32 %v749, %v861
  %v912 = vsub.f32 %v751, %v860
  %v913 = vsub.f32 %v753, %v861
  %v914 = vsub.f32 %v757, %v860
  %v915 = vsub.f32 %v759, %v861
  %v916 = vsub.f32 %v761, %v860
  %v917 = vsub.f32 %v763, %v861
  %v918 = vsub.f32 %v767, %v860
  %v919 = vsub.f32 %v769, %v861
  %v920 = vsub.f32 %v771, %v860
  %v921 = vsub.f32 %v773, %v861
  %v922 = vsub.f32 %v777, %v860
  %v923 = vsub.f32 %v779, %v861
  %v924 = vsub.f32 %v781, %v860
  %v925 = vsub.f32 %v783, %v861
  %v926 = vmul.f32 %v862, %v862
  %v927 = vmul.f32 %v863, %v863
  %v928 = vmul.f32 %v864, %v864
  %v929 = vmul.f32 %v865, %v865
  %v930 = vmul.f32 %v866, %v866
  %v931 = vmul.f32 %v867, %v867
  %v932 = vmul.f32 %v868, %v868
  %v933 = vmul.f32 %v869, %v869
  %v934 = vmul.f32 %v870, %v870
  %v935 = vmul.f32 %v871, %v871
  %v936 = vmul.f32 %v872, %v872
  %v937 = vmul.f32 %v873, %v873
  %v938 = vmul.f32 %v874, %v874
  %v939 = vmul.f32 %v875, %v875
  %v940 = vmul.f32 %v876, %v876
  %v941 = vmul.f32 %v877, %v877
  %v942 = vmul.f32 %v878, %v878
  %v943 = vmul.f32 %v879, %v879
  %v944 = vmul.f32 %v880, %v880
  %v945 = vmul.f32 %v881, %v881
  %v946 = vmul.f32 %v882, %v882
  %v947 = vmul.f32 %v883, %v883
  %v948 = vmul.f32 %v884, %v884
  %v949 = vmul.f32 %v885, %v885
  %v950 = vmul.f32 %v886, %v886
  %v951 = vmul.f32 %v887, %v887
  %v952 = vmul.f32 %v888, %v888
  %v953 = vmul.f32 %v889, %v889
  %v954 = vmul.f32 %v890, %v890
  %v955 = vmul.f32 %v891, %v891
  %v956 = vmul.f32 %v892, %v892
  %v957 = vmul.f32 %v893, %v893
  %v958 = vmul.f32 %v894, %v894
  %v959 = vmul.f32 %v895, %v895
  %v960 = vmul.f32 %v896, %v896
  %v961 = vmul.f32 %v897, %v897
  %v962 = vmul.f32 %v898, %v898
  %v963 = vmul.f32 %v899, %v899
  %v964 = vmul.f32 %v900, %v900
  %v965 = vmul.f32 %v901, %v901
  %v966 = vmul.f32 %v902, %v902
  %v967 = vmul.f32 %v903, %v903
  %v968 = vmul.f32 %v904, %v904
  %v969 = vmul.f32 %v905, %v905
  %v970 = vmul.f32 %v906, %v906
  %v971 = vmul.f32 %v907, %v907
  %v972 = vmul.f32 %v908, %v908
  %v973 = vmul.f32 %v909, %v909
  %v974 = vmul.f32 %v910, %v910
  %v975 = vmul.f32 %v911, %v911
  %v976 = vmul.f32 %v912, %v912
  %v977 = vmul.f32 %v913, %v913
  %v978 = vmul.f32 %v914, %v914
  %v979 = vmul.f32 %v915, %v915
  %v980 = vmul.f32 %v916, %v916
  %v981 = vmul.f32 %v917, %v917
  %v982 = vmul.f32 %v918, %v918
  %v983 = vmul.f32 %v919, %v919
  %v984 = vmul.f32 %v920, %v920
  %v985 = vmul.f32 %v921, %v921
  %v986 = vmul.f32 %v922, %v922
  %v987 = vmul.f32 %v923, %v923
  %v988 = vmul.f32 %v924, %v924
  %v989 = vmul.f32 %v925, %v925
  %v990 = vadd.f32 %v926, %v928
  %v991 = vadd.f32 %v990, %v930
  %v992 = vadd.f32 %v991, %v932
  %v993 = vadd.f32 %v992, %v934
  %v994 = vadd.f32 %v993, %v936
  %v995 = vadd.f32 %v994, %v938
  %v996 = vadd.f32 %v995, %v940
  %v997 = vadd.f32 %v996, %v942
  %v998 = vadd.f32 %v997, %v944
  %v999 = vadd.f32 %v998, %v946
  %v1000 = vadd.f32 %v999, %v948
  %v1001 = vadd.f32 %v1000, %v950
  %v1002 = vadd.f32 %v1001, %v952
  %v1003 = vadd.f32 %v1002, %v954
  %v1004 = vadd.f32 %v1003, %v956
  %v1005 = vadd.f32 %v1004, %v958
  %v1006 = vadd.f32 %v1005, %v960
  %v1007 = vadd.f32 %v1006, %v962
  %v1008 = vadd.f32 %v1007, %v964
  %v1009 = vadd.f32 %v1008, %v966
  %v1010 = vadd.f32 %v1009, %v968
  %v1011 = vadd.f32 %v1010, %v970
  %v1012 = vadd.f32 %v1011, %v972
  %v1013 = vadd.f32 %v1012, %v974
  %v1014 = vadd.f32 %v1013, %v976
  %v1015 = vadd.f32 %v1014, %v978
  %v1016 = vadd.f32 %v1015, %v980
  %v1017 = vadd.f32 %v1016, %v982
  %v1018 = vadd.f32 %v1017, %v984
  %v1019 = vadd.f32 %v1018, %v986
  %v1020 = vadd.f32 %v1019, %v988
  %v1021 = vrot.slane %v1020, 4
  %v1022 = vadd.f32 %v1020, %v1021
  %v1023 = vrot.slane %v1022, 2
  %v1024 = vadd.f32 %v1022, %v1023
  %v1025 = vrot.slane %v1024, 1
  %v1026 = vadd.f32 %v1024, %v1025
  %v1027 = vadd.f32 %v927, %v929
  %v1028 = vadd.f32 %v1027, %v931
  %v1029 = vadd.f32 %v1028, %v933
  %v1030 = vadd.f32 %v1029, %v935
  %v1031 = vadd.f32 %v1030, %v937
  %v1032 = vadd.f32 %v1031, %v939
  %v1033 = vadd.f32 %v1032, %v941
  %v1034 = vadd.f32 %v1033, %v943
  %v1035 = vadd.f32 %v1034, %v945
  %v1036 = vadd.f32 %v1035, %v947
  %v1037 = vadd.f32 %v1036, %v949
  %v1038 = vadd.f32 %v1037, %v951
  %v1039 = vadd.f32 %v1038, %v953
  %v1040 = vadd.f32 %v1039, %v955
  %v1041 = vadd.f32 %v1040, %v957
  %v1042 = vadd.f32 %v1041, %v959
  %v1043 = vadd.f32 %v1042, %v961
  %v1044 = vadd.f32 %v1043, %v963
  %v1045 = vadd.f32 %v1044, %v965
  %v1046 = vadd.f32 %v1045, %v967
  %v1047 = vadd.f32 %v1046, %v969
  %v1048 = vadd.f32 %v1047, %v971
  %v1049 = vadd.f32 %v1048, %v973
  %v1050 = vadd.f32 %v1049, %v975
  %v1051 = vadd.f32 %v1050, %v977
  %v1052 = vadd.f32 %v1051, %v979
  %v1053 = vadd.f32 %v1052, %v981
  %v1054 = vadd.f32 %v1053, %v983
  %v1055 = vadd.f32 %v1054, %v985
  %v1056 = vadd.f32 %v1055, %v987
  %v1057 = vadd.f32 %v1056, %v989
  %v1058 = vrot.slane %v1057, 4
  %v1059 = vadd.f32 %v1057, %v1058
  %v1060 = vrot.slane %v1059, 2
  %v1061 = vadd.f32 %v1059, %v1060
  %v1062 = vrot.slane %v1061, 1
  %v1063 = vadd.f32 %v1061, %v1062
  %v1064 = vmul.f32 %v1026, %v859
  %v1065 = vmul.f32 %v1063, %v859
  %v1066 = vadd.f32 %v1064, 0.8
  %v1067 = vadd.f32 %v1065, 0.8
  %v1068 = vrsqrt.pop %v1066
  %v1069 = vrsqrt.pop %v1067
  %v1070 = vmul.f32 %v862, %v1068
  %v1071 = vmul.f32 %v863, %v1069
  %v1072 = vmul.f32 %v864, %v1068
  %v1073 = vmul.f32 %v865, %v1069
  %v1074 = vmul.f32 %v866, %v1068
  %v1075 = vmul.f32 %v867, %v1069
  %v1076 = vmul.f32 %v868, %v1068
  %v1077 = vmul.f32 %v869, %v1069
  %v1078 = vmul.f32 %v870, %v1068
  %v1079 = vmul.f32 %v871, %v1069
  %v1080 = vmul.f32 %v872, %v1068
  %v1081 = vmul.f32 %v873, %v1069
  %v1082 = vmul.f32 %v874, %v1068
  %v1083 = vmul.f32 %v875, %v1069
  %v1084 = vmul.f32 %v876, %v1068
  %v1085 = vmul.f32 %v877, %v1069
  %v1086 = vmul.f32 %v878, %v1068
  %v1087 = vmul.f32 %v879, %v1069
  %v1088 = vmul.f32 %v880, %v1068
  %v1089 = vmul.f32 %v881, %v1069
  %v1090 = vmul.f32 %v882, %v1068
  %v1091 = vmul.f32 %v883, %v1069
  %v1092 = vmul.f32 %v884, %v1068
  %v1093 = vmul.f32 %v885, %v1069
  %v1094 = vmul.f32 %v886, %v1068
  %v1095 = vmul.f32 %v887, %v1069
  %v1096 = vmul.f32 %v888, %v1068
  %v1097 = vmul.f32 %v889, %v1069
  %v1098 = vmul.f32 %v890, %v1068
  %v1099 = vmul.f32 %v891, %v1069
  %v1100 = vmul.f32 %v892, %v1068
  %v1101 = vmul.f32 %v893, %v1069
  %v1102 = vmul.f32 %v894, %v1068
  %v1103 = vmul.f32 %v895, %v1069
  %v1104 = vmul.f32 %v896, %v1068
  %v1105 = vmul.f32 %v897, %v1069
  %v1106 = vmul.f32 %v898, %v1068
  %v1107 = vmul.f32 %v899, %v1069
  %v1108 = vmul.f32 %v900, %v1068
  %v1109 = vmul.f32 %v901, %v1069
  %v1110 = vmul.f32 %v902, %v1068
  %v1111 = vmul.f32 %v903, %v1069
  %v1112 = vmul.f32 %v904, %v1068
  %v1113 = vmul.f32 %v905, %v1069
  %v1114 = vmul.f32 %v906, %v1068
  %v1115 = vmul.f32 %v907, %v1069
  %v1116 = vmul.f32 %v908, %v1068
  %v1117 = vmul.f32 %v909, %v1069
  %v1118 = vmul.f32 %v910, %v1068
  %v1119 = vmul.f32 %v911, %v1069
  %v1120 = vmul.f32 %v912, %v1068
  %v1121 = vmul.f32 %v913, %v1069
  %v1122 = vmul.f32 %v914, %v1068
  %v1123 = vmul.f32 %v915, %v1069
  %v1124 = vmul.f32 %v916, %v1068
  %v1125 = vmul.f32 %v917, %v1069
  %v1126 = vmul.f32 %v918, %v1068
  %v1127 = vmul.f32 %v919, %v1069
  %v1128 = vmul.f32 %v920, %v1068
  %v1129 = vmul.f32 %v921, %v1069
  %v1130 = vmul.f32 %v922, %v1068
  %v1131 = vmul.f32 %v923, %v1069
  %v1132 = vmul.f32 %v924, %v1068
  %v1133 = vmul.f32 %v925, %v1069
  %v1135 = vlaneseq
  %v1136 = vshrl.u32 %v1135, 7
  %v1137 = vsub.s32 0, %v1136
  %v1138 = vrot.slane %v91, %v1137
  %v1139 = vlaneseq
  %v1140 = vshrl.u32 %v1139, 7
  %v1141 = vsub.s32 1, %v1140
  %v1142 = vrot.slane %v91, %v1141
  %v1145 = vmul.f32 %v1070, %v1138
  %v1146 = vmul.f32 %v1071, %v1142
  %v1147 = vmul.f32 %v1072, %v1138
  %v1148 = vmul.f32 %v1073, %v1142
  %v1149 = vmul.f32 %v1074, %v1138
  %v1150 = vmul.f32 %v1075, %v1142
  %v1151 = vmul.f32 %v1076, %v1138
  %v1152 = vmul.f32 %v1077, %v1142
  %v1153 = vmul.f32 %v1078, %v1138
  %v1154 = vmul.f32 %v1079, %v1142
  %v1155 = vmul.f32 %v1080, %v1138
  %v1156 = vmul.f32 %v1081, %v1142
  %v1157 = vmul.f32 %v1082, %v1138
  %v1158 = vmul.f32 %v1083, %v1142
  %v1159 = vmul.f32 %v1084, %v1138
  %v1160 = vmul.f32 %v1085, %v1142
  %v1161 = vmul.f32 %v1086, %v1138
  %v1162 = vmul.f32 %v1087, %v1142
  %v1163 = vmul.f32 %v1088, %v1138
  %v1164 = vmul.f32 %v1089, %v1142
  %v1165 = vmul.f32 %v1090, %v1138
  %v1166 = vmul.f32 %v1091, %v1142
  %v1167 = vmul.f32 %v1092, %v1138
  %v1168 = vmul.f32 %v1093, %v1142
  %v1169 = vmul.f32 %v1094, %v1138
  %v1170 = vmul.f32 %v1095, %v1142
  %v1171 = vmul.f32 %v1096, %v1138
  %v1172 = vmul.f32 %v1097, %v1142
  %v1173 = vmul.f32 %v1098, %v1138
  %v1174 = vmul.f32 %v1099, %v1142
  %v1175 = vmul.f32 %v1100, %v1138
  %v1176 = vmul.f32 %v1101, %v1142
  %v1177 = vmul.f32 %v1102, %v1138
  %v1178 = vmul.f32 %v1103, %v1142
  %v1179 = vmul.f32 %v1104, %v1138
  %v1180 = vmul.f32 %v1105, %v1142
  %v1181 = vmul.f32 %v1106, %v1138
  %v1182 = vmul.f32 %v1107, %v1142
  %v1183 = vmul.f32 %v1108, %v1138
  %v1184 = vmul.f32 %v1109, %v1142
  %v1185 = vmul.f32 %v1110, %v1138
  %v1186 = vmul.f32 %v1111, %v1142
  %v1187 = vmul.f32 %v1112, %v1138
  %v1188 = vmul.f32 %v1113, %v1142
  %v1189 = vmul.f32 %v1114, %v1138
  %v1190 = vmul.f32 %v1115, %v1142
  %v1191 = vmul.f32 %v1116, %v1138
  %v1192 = vmul.f32 %v1117, %v1142
  %v1193 = vmul.f32 %v1118, %v1138
  %v1194 = vmul.f32 %v1119, %v1142
  %v1195 = vmul.f32 %v1120, %v1138
  %v1196 = vmul.f32 %v1121, %v1142
  %v1197 = vmul.f32 %v1122, %v1138
  %v1198 = vmul.f32 %v1123, %v1142
  %v1199 = vmul.f32 %v1124, %v1138
  %v1200 = vmul.f32 %v1125, %v1142
  %v1201 = vmul.f32 %v1126, %v1138
  %v1202 = vmul.f32 %v1127, %v1142
  %v1203 = vmul.f32 %v1128, %v1138
  %v1204 = vmul.f32 %v1129, %v1142
  %v1205 = vmul.f32 %v1130, %v1138
  %v1206 = vmul.f32 %v1131, %v1142
  %v1207 = vmul.f32 %v1132, %v1138
  %v1208 = vmul.f32 %v1133, %v1142
  %v1210 = vlaneseq
  %v1211 = vshrl.u32 %v1210, 7
  %v1212 = vsub.s32 0, %v1211
  %v1213 = vrot.slane %v92, %v1212
  %v1214 = vlaneseq
  %v1215 = vshrl.u32 %v1214, 7
  %v1216 = vsub.s32 1, %v1215
  %v1217 = vrot.slane %v92, %v1216
  %v1220 = vadd.f32 %v1145, %v1213
  %v1221 = vadd.f32 %v1146, %v1217
  %v1222 = vadd.f32 %v1147, %v1213
  %v1223 = vadd.f32 %v1148, %v1217
  %v1224 = vadd.f32 %v1149, %v1213
  %v1225 = vadd.f32 %v1150, %v1217
  %v1226 = vadd.f32 %v1151, %v1213
  %v1227 = vadd.f32 %v1152, %v1217
  %v1228 = vadd.f32 %v1153, %v1213
  %v1229 = vadd.f32 %v1154, %v1217
  %v1230 = vadd.f32 %v1155, %v1213
  %v1231 = vadd.f32 %v1156, %v1217
  %v1232 = vadd.f32 %v1157, %v1213
  %v1233 = vadd.f32 %v1158, %v1217
  %v1234 = vadd.f32 %v1159, %v1213
  %v1235 = vadd.f32 %v1160, %v1217
  %v1236 = vadd.f32 %v1161, %v1213
  %v1237 = vadd.f32 %v1162, %v1217
  %v1238 = vadd.f32 %v1163, %v1213
  %v1239 = vadd.f32 %v1164, %v1217
  %v1240 = vadd.f32 %v1165, %v1213
  %v1241 = vadd.f32 %v1166, %v1217
  %v1242 = vadd.f32 %v1167, %v1213
  %v1243 = vadd.f32 %v1168, %v1217
  %v1244 = vadd.f32 %v1169, %v1213
  %v1245 = vadd.f32 %v1170, %v1217
  %v1246 = vadd.f32 %v1171, %v1213
  %v1247 = vadd.f32 %v1172, %v1217
  %v1248 = vadd.f32 %v1173, %v1213
  %v1249 = vadd.f32 %v1174, %v1217
  %v1250 = vadd.f32 %v1175, %v1213
  %v1251 = vadd.f32 %v1176, %v1217
  %v1252 = vadd.f32 %v1177, %v1213
  %v1253 = vadd.f32 %v1178, %v1217
  %v1254 = vadd.f32 %v1179, %v1213
  %v1255 = vadd.f32 %v1180, %v1217
  %v1256 = vadd.f32 %v1181, %v1213
  %v1257 = vadd.f32 %v1182, %v1217
  %v1258 = vadd.f32 %v1183, %v1213
  %v1259 = vadd.f32 %v1184, %v1217
  %v1260 = vadd.f32 %v1185, %v1213
  %v1261 = vadd.f32 %v1186, %v1217
  %v1262 = vadd.f32 %v1187, %v1213
  %v1263 = vadd.f32 %v1188, %v1217
  %v1264 = vadd.f32 %v1189, %v1213
  %v1265 = vadd.f32 %v1190, %v1217
  %v1266 = vadd.f32 %v1191, %v1213
  %v1267 = vadd.f32 %v1192, %v1217
  %v1268 = vadd.f32 %v1193, %v1213
  %v1269 = vadd.f32 %v1194, %v1217
  %v1270 = vadd.f32 %v1195, %v1213
  %v1271 = vadd.f32 %v1196, %v1217
  %v1272 = vadd.f32 %v1197, %v1213
  %v1273 = vadd.f32 %v1198, %v1217
  %v1274 = vadd.f32 %v1199, %v1213
  %v1275 = vadd.f32 %v1200, %v1217
  %v1276 = vadd.f32 %v1201, %v1213
  %v1277 = vadd.f32 %v1202, %v1217
  %v1278 = vadd.f32 %v1203, %v1213
  %v1279 = vadd.f32 %v1204, %v1217
  %v1280 = vadd.f32 %v1205, %v1213
  %v1281 = vadd.f32 %v1206, %v1217
  %v1282 = vadd.f32 %v1207, %v1213
  %v1283 = vadd.f32 %v1208, %v1217
  %v1284 = vmul.f32 %v1220, 0.2
  %v1285 = vmul.f32 %v1221, 0.2
  %v1286 = vmul.f32 %v1222, 0.2
  %v1287 = vmul.f32 %v1223, 0.2
  %v1288 = vmul.f32 %v1224, 0.2
  %v1289 = vmul.f32 %v1225, 0.2
  %v1290 = vmul.f32 %v1226, 0.2
  %v1291 = vmul.f32 %v1227, 0.2
  %v1292 = vmul.f32 %v1228, 0.2
  %v1293 = vmul.f32 %v1229, 0.2
  %v1294 = vmul.f32 %v1230, 0.2
  %v1295 = vmul.f32 %v1231, 0.2
  %v1296 = vmul.f32 %v1232, 0.2
  %v1297 = vmul.f32 %v1233, 0.2
  %v1298 = vmul.f32 %v1234, 0.2
  %v1299 = vmul.f32 %v1235, 0.2
  %v1300 = vmul.f32 %v1236, 0.2
  %v1301 = vmul.f32 %v1237, 0.2
  %v1302 = vmul.f32 %v1238, 0.2
  %v1303 = vmul.f32 %v1239, 0.2
  %v1304 = vmul.f32 %v1240, 0.2
  %v1305 = vmul.f32 %v1241, 0.2
  %v1306 = vmul.f32 %v1242, 0.2
  %v1307 = vmul.f32 %v1243, 0.2
  %v1308 = vmul.f32 %v1244, 0.2
  %v1309 = vmul.f32 %v1245, 0.2
  %v1310 = vmul.f32 %v1246, 0.2
  %v1311 = vmul.f32 %v1247, 0.2
  %v1312 = vmul.f32 %v1248, 0.2
  %v1313 = vmul.f32 %v1249, 0.2
  %v1314 = vmul.f32 %v1250, 0.2
  %v1315 = vmul.f32 %v1251, 0.2
  %v1316 = vmul.f32 %v1252, 0.2
  %v1317 = vmul.f32 %v1253, 0.2
  %v1318 = vmul.f32 %v1254, 0.2
  %v1319 = vmul.f32 %v1255, 0.2
  %v1320 = vmul.f32 %v1256, 0.2
  %v1321 = vmul.f32 %v1257, 0.2
  %v1322 = vmul.f32 %v1258, 0.2
  %v1323 = vmul.f32 %v1259, 0.2
  %v1324 = vmul.f32 %v1260, 0.2
  %v1325 = vmul.f32 %v1261, 0.2
  %v1326 = vmul.f32 %v1262, 0.2
  %v1327 = vmul.f32 %v1263, 0.2
  %v1328 = vmul.f32 %v1264, 0.2
  %v1329 = vmul.f32 %v1265, 0.2
  %v1330 = vmul.f32 %v1266, 0.2
  %v1331 = vmul.f32 %v1267, 0.2
  %v1332 = vmul.f32 %v1268, 0.2
  %v1333 = vmul.f32 %v1269, 0.2
  %v1334 = vmul.f32 %v1270, 0.2
  %v1335 = vmul.f32 %v1271, 0.2
  %v1336 = vmul.f32 %v1272, 0.2
  %v1337 = vmul.f32 %v1273, 0.2
  %v1338 = vmul.f32 %v1274, 0.2
  %v1339 = vmul.f32 %v1275, 0.2
  %v1340 = vmul.f32 %v1276, 0.2
  %v1341 = vmul.f32 %v1277, 0.2
  %v1342 = vmul.f32 %v1278, 0.2
  %v1343 = vmul.f32 %v1279, 0.2
  %v1344 = vmul.f32 %v1280, 0.2
  %v1345 = vmul.f32 %v1281, 0.2
  %v1346 = vmul.f32 %v1282, 0.2
  %v1347 = vmul.f32 %v1283, 0.2
  %v1348 = vmax.f32 %v1220, %v1284
  %v1349 = vmax.f32 %v1221, %v1285
  %v1350 = vmax.f32 %v1222, %v1286
  %v1351 = vmax.f32 %v1223, %v1287
  %v1352 = vmax.f32 %v1224, %v1288
  %v1353 = vmax.f32 %v1225, %v1289
  %v1354 = vmax.f32 %v1226, %v1290
  %v1355 = vmax.f32 %v1227, %v1291
  %v1356 = vmax.f32 %v1228, %v1292
  %v1357 = vmax.f32 %v1229, %v1293
  %v1358 = vmax.f32 %v1230, %v1294
  %v1359 = vmax.f32 %v1231, %v1295
  %v1360 = vmax.f32 %v1232, %v1296
  %v1361 = vmax.f32 %v1233, %v1297
  %v1362 = vmax.f32 %v1234, %v1298
  %v1363 = vmax.f32 %v1235, %v1299
  %v1364 = vmax.f32 %v1236, %v1300
  %v1365 = vmax.f32 %v1237, %v1301
  %v1366 = vmax.f32 %v1238, %v1302
  %v1367 = vmax.f32 %v1239, %v1303
  %v1368 = vmax.f32 %v1240, %v1304
  %v1369 = vmax.f32 %v1241, %v1305
  %v1370 = vmax.f32 %v1242, %v1306
  %v1371 = vmax.f32 %v1243, %v1307
  %v1372 = vmax.f32 %v1244, %v1308
  %v1373 = vmax.f32 %v1245, %v1309
  %v1374 = vmax.f32 %v1246, %v1310
  %v1375 = vmax.f32 %v1247, %v1311
  %v1376 = vmax.f32 %v1248, %v1312
  %v1377 = vmax.f32 %v1249, %v1313
  %v1378 = vmax.f32 %v1250, %v1314
  %v1379 = vmax.f32 %v1251, %v1315
  %v1380 = vmax.f32 %v1252, %v1316
  %v1381 = vmax.f32 %v1253, %v1317
  %v1382 = vmax.f32 %v1254, %v1318
  %v1383 = vmax.f32 %v1255, %v1319
  %v1384 = vmax.f32 %v1256, %v1320
  %v1385 = vmax.f32 %v1257, %v1321
  %v1386 = vmax.f32 %v1258, %v1322
  %v1387 = vmax.f32 %v1259, %v1323
  %v1388 = vmax.f32 %v1260, %v1324
  %v1389 = vmax.f32 %v1261, %v1325
  %v1390 = vmax.f32 %v1262, %v1326
  %v1391 = vmax.f32 %v1263, %v1327
  %v1392 = vmax.f32 %v1264, %v1328
  %v1393 = vmax.f32 %v1265, %v1329
  %v1394 = vmax.f32 %v1266, %v1330
  %v1395 = vmax.f32 %v1267, %v1331
  %v1396 = vmax.f32 %v1268, %v1332
  %v1397 = vmax.f32 %v1269, %v1333
  %v1398 = vmax.f32 %v1270, %v1334
  %v1399 = vmax.f32 %v1271, %v1335
  %v1400 = vmax.f32 %v1272, %v1336
  %v1401 = vmax.f32 %v1273, %v1337
  %v1402 = vmax.f32 %v1274, %v1338
  %v1403 = vmax.f32 %v1275, %v1339
  %v1404 = vmax.f32 %v1276, %v1340
  %v1405 = vmax.f32 %v1277, %v1341
  %v1406 = vmax.f32 %v1278, %v1342
  %v1407 = vmax.f32 %v1279, %v1343
  %v1408 = vmax.f32 %v1280, %v1344
  %v1409 = vmax.f32 %v1281, %v1345
  %v1410 = vmax.f32 %v1282, %v1346
  %v1411 = vmax.f32 %v1283, %v1347
  %v1412 = vpack.c.bf16 %v1350, %v1348
  %v1413 = vpack.c.bf16 %v1351, %v1349
  %v1414 = vpack.c.bf16 %v1354, %v1352
  %v1415 = vpack.c.bf16 %v1355, %v1353
  %v1416 = vpack.c.bf16 %v1358, %v1356
  %v1417 = vpack.c.bf16 %v1359, %v1357
  %v1418 = vpack.c.bf16 %v1362, %v1360
  %v1419 = vpack.c.bf16 %v1363, %v1361
  %v1420 = vpack.c.bf16 %v1366, %v1364
  %v1421 = vpack.c.bf16 %v1367, %v1365
  %v1422 = vpack.c.bf16 %v1370, %v1368
  %v1423 = vpack.c.bf16 %v1371, %v1369
  %v1424 = vpack.c.bf16 %v1374, %v1372
  %v1425 = vpack.c.bf16 %v1375, %v1373
  %v1426 = vpack.c.bf16 %v1378, %v1376
  %v1427 = vpack.c.bf16 %v1379, %v1377
  %v1428 = vpack.c.bf16 %v1382, %v1380
  %v1429 = vpack.c.bf16 %v1383, %v1381
  %v1430 = vpack.c.bf16 %v1386, %v1384
  %v1431 = vpack.c.bf16 %v1387, %v1385
  %v1432 = vpack.c.bf16 %v1390, %v1388
  %v1433 = vpack.c.bf16 %v1391, %v1389
  %v1434 = vpack.c.bf16 %v1394, %v1392
  %v1435 = vpack.c.bf16 %v1395, %v1393
  %v1436 = vpack.c.bf16 %v1398, %v1396
  %v1437 = vpack.c.bf16 %v1399, %v1397
  %v1438 = vpack.c.bf16 %v1402, %v1400
  %v1439 = vpack.c.bf16 %v1403, %v1401
  %v1440 = vpack.c.bf16 %v1406, %v1404
  %v1441 = vpack.c.bf16 %v1407, %v1405
  %v1442 = vpack.c.bf16 %v1410, %v1408
  %v1443 = vpack.c.bf16 %v1411, %v1409
  %v1444 = vld [vmem:[%s7] sm:$0xff]
  %v1445 = vld [vmem:[%s7 + $0x8] sm:$0xff]
  %v1446 = vld [vmem:[%s7 + $0x10] sm:$0xff]
  %v1447 = vld [vmem:[%s7 + $0x18] sm:$0xf]
  %v1448 = vld [vmem:[%s7 + $0x1c] sm:$0xff]
  %v1449 = vld [vmem:[%s7 + $0x24] sm:$0xff]
  %v1450 = vld [vmem:[%s7 + $0x2c] sm:$0xff]
  %v1451 = vld [vmem:[%s7 + $0x34] sm:$0xf]
  %v1452 = vld [vmem:[%s7 + $0x38] sm:$0xff]
  %v1453 = vld [vmem:[%s7 + $0x40] sm:$0xff]
  %v1454 = vld [vmem:[%s7 + $0x48] sm:$0xff]
  %v1455 = vld [vmem:[%s7 + $0x50] sm:$0xf]
  %v1456 = vld [vmem:[%s7 + $0x54] sm:$0xff]
  %v1457 = vld [vmem:[%s7 + $0x5c] sm:$0xff]
  %v1458 = vld [vmem:[%s7 + $0x64] sm:$0xff]
  %v1459 = vld [vmem:[%s7 + $0x6c] sm:$0xf]
  %v1460 = vld [vmem:[%s7 + $0x70] sm:$0xff]
  %v1461 = vld [vmem:[%s7 + $0x78] sm:$0xff]
  %v1462 = vld [vmem:[%s7 + $0x80] sm:$0xff]
  %v1463 = vld [vmem:[%s7 + $0x88] sm:$0xf]
  %v1464 = vld [vmem:[%s7 + $0x8c] sm:$0xff]
  %v1465 = vld [vmem:[%s7 + $0x94] sm:$0xff]
  %v1466 = vld [vmem:[%s7 + $0x9c] sm:$0xff]
  %v1467 = vld [vmem:[%s7 + $0xa4] sm:$0xf]
  %v1468 = vld [vmem:[%s7 + $0xa8] sm:$0xff]
  %v1469 = vld [vmem:[%s7 + $0xb0] sm:$0xff]
  %v1470 = vld [vmem:[%s7 + $0xb8] sm:$0xff]
  %v1471 = vld [vmem:[%s7 + $0xc0] sm:$0xf]
  %v1472 = vld [vmem:[%s7 + $0xc4] sm:$0xff]
  %v1473 = vld [vmem:[%s7 + $0xcc] sm:$0xff]
  %v1474 = vld [vmem:[%s7 + $0xd4] sm:$0xff]
  %v1475 = vld [vmem:[%s7 + $0xdc] sm:$0xf]
  %v1476 = vld [vmem:[%s7 + $0xe0] sm:$0xff]
  %v1477 = vld [vmem:[%s7 + $0xe8] sm:$0xff]
  %v1478 = vld [vmem:[%s7 + $0xf0] sm:$0xff]
  %v1479 = vld [vmem:[%s7 + $0xf8] sm:$0xf]
  %v1480 = vld [vmem:[%s7 + $0xfc] sm:$0xff]
  %v1481 = vld [vmem:[%s7 + $0x104] sm:$0xff]
  %v1482 = vld [vmem:[%s7 + $0x10c] sm:$0xff]
  %v1483 = vld [vmem:[%s7 + $0x114] sm:$0xf]
  %v1484 = vld [vmem:[%s7 + $0x118] sm:$0xff]
  %v1485 = vld [vmem:[%s7 + $0x120] sm:$0xff]
  %v1486 = vld [vmem:[%s7 + $0x128] sm:$0xff]
  %v1487 = vld [vmem:[%s7 + $0x130] sm:$0xf]
  %v1488 = vld [vmem:[%s7 + $0x134] sm:$0xff]
  %v1489 = vld [vmem:[%s7 + $0x13c] sm:$0xff]
  %v1490 = vld [vmem:[%s7 + $0x144] sm:$0xff]
  %v1491 = vld [vmem:[%s7 + $0x14c] sm:$0xf]
  %v1492 = vld [vmem:[%s7 + $0x150] sm:$0xff]
  %v1493 = vld [vmem:[%s7 + $0x158] sm:$0xff]
  %v1494 = vld [vmem:[%s7 + $0x160] sm:$0xff]
  %v1495 = vld [vmem:[%s7 + $0x168] sm:$0xf]
  %v1496 = vld [vmem:[%s7 + $0x16c] sm:$0xff]
  %v1497 = vld [vmem:[%s7 + $0x174] sm:$0xff]
  %v1498 = vld [vmem:[%s7 + $0x17c] sm:$0xff]
  %v1499 = vld [vmem:[%s7 + $0x184] sm:$0xf]
  %v1500 = vld [vmem:[%s7 + $0x188] sm:$0xff]
  %v1501 = vld [vmem:[%s7 + $0x190] sm:$0xff]
  %v1502 = vld [vmem:[%s7 + $0x198] sm:$0xff]
  %v1503 = vld [vmem:[%s7 + $0x1a0] sm:$0xf]
  %v1504 = vld [vmem:[%s7 + $0x1a4] sm:$0xff]
  %v1505 = vld [vmem:[%s7 + $0x1ac] sm:$0xff]
  %v1506 = vld [vmem:[%s7 + $0x1b4] sm:$0xff]
  %v1507 = vld [vmem:[%s7 + $0x1bc] sm:$0xf]
  %v1508 = vld [vmem:[%s7 + $0x1c0] sm:$0xff]
  %v1509 = vld [vmem:[%s7 + $0x1c8] sm:$0xff]
  %v1510 = vld [vmem:[%s7 + $0x1d0] sm:$0xff]
  %v1511 = vld [vmem:[%s7 + $0x1d8] sm:$0xf]
  %v1512 = vld [vmem:[%s7 + $0x1dc] sm:$0xff]
  %v1513 = vld [vmem:[%s7 + $0x1e4] sm:$0xff]
  %v1514 = vld [vmem:[%s7 + $0x1ec] sm:$0xff]
  %v1515 = vld [vmem:[%s7 + $0x1f4] sm:$0xf]
  %v1516 = vld [vmem:[%s7 + $0x1f8] sm:$0xff]
  %v1517 = vld [vmem:[%s7 + $0x200] sm:$0xff]
  %v1518 = vld [vmem:[%s7 + $0x208] sm:$0xff]
  %v1519 = vld [vmem:[%s7 + $0x210] sm:$0xf]
  %v1520 = vld [vmem:[%s7 + $0x214] sm:$0xff]
  %v1521 = vld [vmem:[%s7 + $0x21c] sm:$0xff]
  %v1522 = vld [vmem:[%s7 + $0x224] sm:$0xff]
  %v1523 = vld [vmem:[%s7 + $0x22c] sm:$0xf]
  %v1524 = vld [vmem:[%s7 + $0x230] sm:$0xff]
  %v1525 = vld [vmem:[%s7 + $0x238] sm:$0xff]
  %v1526 = vld [vmem:[%s7 + $0x240] sm:$0xff]
  %v1527 = vld [vmem:[%s7 + $0x248] sm:$0xf]
  %v1528 = vld [vmem:[%s7 + $0x24c] sm:$0xff]
  %v1529 = vld [vmem:[%s7 + $0x254] sm:$0xff]
  %v1530 = vld [vmem:[%s7 + $0x25c] sm:$0xff]
  %v1531 = vld [vmem:[%s7 + $0x264] sm:$0xf]
  %v1532 = vld [vmem:[%s7 + $0x268] sm:$0xff]
  %v1533 = vld [vmem:[%s7 + $0x270] sm:$0xff]
  %v1534 = vld [vmem:[%s7 + $0x278] sm:$0xff]
  %v1535 = vld [vmem:[%s7 + $0x280] sm:$0xf]
  %v1536 = vld [vmem:[%s7 + $0x284] sm:$0xff]
  %v1537 = vld [vmem:[%s7 + $0x28c] sm:$0xff]
  %v1538 = vld [vmem:[%s7 + $0x294] sm:$0xff]
  %v1539 = vld [vmem:[%s7 + $0x29c] sm:$0xf]
  %v1540 = vld [vmem:[%s7 + $0x2a0] sm:$0xff]
  %v1541 = vld [vmem:[%s7 + $0x2a8] sm:$0xff]
  %v1542 = vld [vmem:[%s7 + $0x2b0] sm:$0xff]
  %v1543 = vld [vmem:[%s7 + $0x2b8] sm:$0xf]
  %v1544 = vld [vmem:[%s7 + $0x2bc] sm:$0xff]
  %v1545 = vld [vmem:[%s7 + $0x2c4] sm:$0xff]
  %v1546 = vld [vmem:[%s7 + $0x2cc] sm:$0xff]
  %v1547 = vld [vmem:[%s7 + $0x2d4] sm:$0xf]
  %v1548 = vld [vmem:[%s7 + $0x2d8] sm:$0xff]
  %v1549 = vld [vmem:[%s7 + $0x2e0] sm:$0xff]
  %v1550 = vld [vmem:[%s7 + $0x2e8] sm:$0xff]
  %v1551 = vld [vmem:[%s7 + $0x2f0] sm:$0xf]
  %v1552 = vld [vmem:[%s7 + $0x2f4] sm:$0xff]
  %v1553 = vld [vmem:[%s7 + $0x2fc] sm:$0xff]
  %v1554 = vld [vmem:[%s7 + $0x304] sm:$0xff]
  %v1555 = vld [vmem:[%s7 + $0x30c] sm:$0xf]
  %v1556 = vld [vmem:[%s7 + $0x310] sm:$0xff]
  %v1557 = vld [vmem:[%s7 + $0x318] sm:$0xff]
  %v1558 = vld [vmem:[%s7 + $0x320] sm:$0xff]
  %v1559 = vld [vmem:[%s7 + $0x328] sm:$0xf]
  %v1560 = vld [vmem:[%s7 + $0x32c] sm:$0xff]
  %v1561 = vld [vmem:[%s7 + $0x334] sm:$0xff]
  %v1562 = vld [vmem:[%s7 + $0x33c] sm:$0xff]
  %v1563 = vld [vmem:[%s7 + $0x344] sm:$0xf]
  %v1564 = vld [vmem:[%s7 + $0x348] sm:$0xff]
  %v1565 = vld [vmem:[%s7 + $0x350] sm:$0xff]
  %v1566 = vld [vmem:[%s7 + $0x358] sm:$0xff]
  %v1567 = vld [vmem:[%s7 + $0x360] sm:$0xf]
  %v1568 = vld [vmem:[%s7 + $0x364] sm:$0xff]
  %v1569 = vld [vmem:[%s7 + $0x36c] sm:$0xff]
  %v1570 = vld [vmem:[%s7 + $0x374] sm:$0xff]
  %v1571 = vld [vmem:[%s7 + $0x37c] sm:$0xf]
  %v1572 = vld [vmem:[%s8] sm:$0x7f]
  %v1574 = vlaneseq
  %v1575 = vshrl.u32 %v1574, 7
  %v1576 = vsub.s32 0, %v1575
  %v1577 = vrot.slane %v1572, %v1576
  %v1578 = vlaneseq
  %v1579 = vshrl.u32 %v1578, 7
  %v1580 = vsub.s32 1, %v1579
  %v1581 = vrot.slane %v1572, %v1580
  %v1582 = vlaneseq
  %v1583 = vshrl.u32 %v1582, 7
  %v1584 = vsub.s32 2, %v1583
  %v1585 = vrot.slane %v1572, %v1584
  %v1586 = vlaneseq
  %v1587 = vshrl.u32 %v1586, 7
  %v1588 = vsub.s32 3, %v1587
  %v1589 = vrot.slane %v1572, %v1588
  %v1590 = vlaneseq
  %v1591 = vshrl.u32 %v1590, 7
  %v1592 = vsub.s32 4, %v1591
  %v1593 = vrot.slane %v1572, %v1592
  %v1594 = vlaneseq
  %v1595 = vshrl.u32 %v1594, 7
  %v1596 = vsub.s32 5, %v1595
  %v1597 = vrot.slane %v1572, %v1596
  %v1598 = vlaneseq
  %v1599 = vshrl.u32 %v1598, 7
  %v1600 = vsub.s32 6, %v1599
  %v1601 = vrot.slane %v1572, %v1600
  %v1737 = vunpack.c.l.b16 %v1444
  %v1738 = vunpack.c.h.b16 %v1444
  %v1739 = vunpack.c.l.b16 %v1445
  %v1740 = vunpack.c.h.b16 %v1445
  %v1741 = vunpack.c.l.b16 %v1446
  %v1742 = vunpack.c.h.b16 %v1446
  %v1743 = vunpack.c.l.b16 %v1447
  %v1744 = vunpack.c.l.b16 %v1448
  %v1745 = vunpack.c.h.b16 %v1448
  %v1746 = vunpack.c.l.b16 %v1449
  %v1747 = vunpack.c.h.b16 %v1449
  %v1748 = vunpack.c.l.b16 %v1450
  %v1749 = vunpack.c.h.b16 %v1450
  %v1750 = vunpack.c.l.b16 %v1451
  %v1751 = vunpack.c.l.b16 %v1452
  %v1752 = vunpack.c.h.b16 %v1452
  %v1753 = vunpack.c.l.b16 %v1453
  %v1754 = vunpack.c.h.b16 %v1453
  %v1755 = vunpack.c.l.b16 %v1454
  %v1756 = vunpack.c.h.b16 %v1454
  %v1757 = vunpack.c.l.b16 %v1455
  %v1758 = vunpack.c.l.b16 %v1456
  %v1759 = vunpack.c.h.b16 %v1456
  %v1760 = vunpack.c.l.b16 %v1457
  %v1761 = vunpack.c.h.b16 %v1457
  %v1762 = vunpack.c.l.b16 %v1458
  %v1763 = vunpack.c.h.b16 %v1458
  %v1764 = vunpack.c.l.b16 %v1459
  %v1765 = vunpack.c.l.b16 %v1460
  %v1766 = vunpack.c.h.b16 %v1460
  %v1767 = vunpack.c.l.b16 %v1461
  %v1768 = vunpack.c.h.b16 %v1461
  %v1769 = vunpack.c.l.b16 %v1462
  %v1770 = vunpack.c.h.b16 %v1462
  %v1771 = vunpack.c.l.b16 %v1463
  %v1772 = vunpack.c.l.b16 %v1464
  %v1773 = vunpack.c.h.b16 %v1464
  %v1774 = vunpack.c.l.b16 %v1465
  %v1775 = vunpack.c.h.b16 %v1465
  %v1776 = vunpack.c.l.b16 %v1466
  %v1777 = vunpack.c.h.b16 %v1466
  %v1778 = vunpack.c.l.b16 %v1467
  %v1779 = vunpack.c.l.b16 %v1468
  %v1780 = vunpack.c.h.b16 %v1468
  %v1781 = vunpack.c.l.b16 %v1469
  %v1782 = vunpack.c.h.b16 %v1469
  %v1783 = vunpack.c.l.b16 %v1470
  %v1784 = vunpack.c.h.b16 %v1470
  %v1785 = vunpack.c.l.b16 %v1471
  %v1786 = vunpack.c.l.b16 %v1472
  %v1787 = vunpack.c.h.b16 %v1472
  %v1788 = vunpack.c.l.b16 %v1473
  %v1789 = vunpack.c.h.b16 %v1473
  %v1790 = vunpack.c.l.b16 %v1474
  %v1791 = vunpack.c.h.b16 %v1474
  %v1792 = vunpack.c.l.b16 %v1475
  %v1793 = vunpack.c.l.b16 %v1476
  %v1794 = vunpack.c.h.b16 %v1476
  %v1795 = vunpack.c.l.b16 %v1477
  %v1796 = vunpack.c.h.b16 %v1477
  %v1797 = vunpack.c.l.b16 %v1478
  %v1798 = vunpack.c.h.b16 %v1478
  %v1799 = vunpack.c.l.b16 %v1479
  %v1800 = vunpack.c.l.b16 %v1480
  %v1801 = vunpack.c.h.b16 %v1480
  %v1802 = vunpack.c.l.b16 %v1481
  %v1803 = vunpack.c.h.b16 %v1481
  %v1804 = vunpack.c.l.b16 %v1482
  %v1805 = vunpack.c.h.b16 %v1482
  %v1806 = vunpack.c.l.b16 %v1483
  %v1807 = vunpack.c.l.b16 %v1484
  %v1808 = vunpack.c.h.b16 %v1484
  %v1809 = vunpack.c.l.b16 %v1485
  %v1810 = vunpack.c.h.b16 %v1485
  %v1811 = vunpack.c.l.b16 %v1486
  %v1812 = vunpack.c.h.b16 %v1486
  %v1813 = vunpack.c.l.b16 %v1487
  %v1814 = vunpack.c.l.b16 %v1488
  %v1815 = vunpack.c.h.b16 %v1488
  %v1816 = vunpack.c.l.b16 %v1489
  %v1817 = vunpack.c.h.b16 %v1489
  %v1818 = vunpack.c.l.b16 %v1490
  %v1819 = vunpack.c.h.b16 %v1490
  %v1820 = vunpack.c.l.b16 %v1491
  %v1821 = vunpack.c.l.b16 %v1492
  %v1822 = vunpack.c.h.b16 %v1492
  %v1823 = vunpack.c.l.b16 %v1493
  %v1824 = vunpack.c.h.b16 %v1493
  %v1825 = vunpack.c.l.b16 %v1494
  %v1826 = vunpack.c.h.b16 %v1494
  %v1827 = vunpack.c.l.b16 %v1495
  %v1828 = vunpack.c.l.b16 %v1496
  %v1829 = vunpack.c.h.b16 %v1496
  %v1830 = vunpack.c.l.b16 %v1497
  %v1831 = vunpack.c.h.b16 %v1497
  %v1832 = vunpack.c.l.b16 %v1498
  %v1833 = vunpack.c.h.b16 %v1498
  %v1834 = vunpack.c.l.b16 %v1499
  %v1835 = vunpack.c.l.b16 %v1500
  %v1836 = vunpack.c.h.b16 %v1500
  %v1837 = vunpack.c.l.b16 %v1501
  %v1838 = vunpack.c.h.b16 %v1501
  %v1839 = vunpack.c.l.b16 %v1502
  %v1840 = vunpack.c.h.b16 %v1502
  %v1841 = vunpack.c.l.b16 %v1503
  %v1842 = vunpack.c.l.b16 %v1504
  %v1843 = vunpack.c.h.b16 %v1504
  %v1844 = vunpack.c.l.b16 %v1505
  %v1845 = vunpack.c.h.b16 %v1505
  %v1846 = vunpack.c.l.b16 %v1506
  %v1847 = vunpack.c.h.b16 %v1506
  %v1848 = vunpack.c.l.b16 %v1507
  %v1849 = vunpack.c.l.b16 %v1508
  %v1850 = vunpack.c.h.b16 %v1508
  %v1851 = vunpack.c.l.b16 %v1509
  %v1852 = vunpack.c.h.b16 %v1509
  %v1853 = vunpack.c.l.b16 %v1510
  %v1854 = vunpack.c.h.b16 %v1510
  %v1855 = vunpack.c.l.b16 %v1511
  %v1856 = vunpack.c.l.b16 %v1512
  %v1857 = vunpack.c.h.b16 %v1512
  %v1858 = vunpack.c.l.b16 %v1513
  %v1859 = vunpack.c.h.b16 %v1513
  %v1860 = vunpack.c.l.b16 %v1514
  %v1861 = vunpack.c.h.b16 %v1514
  %v1862 = vunpack.c.l.b16 %v1515
  %v1863 = vunpack.c.l.b16 %v1516
  %v1864 = vunpack.c.h.b16 %v1516
  %v1865 = vunpack.c.l.b16 %v1517
  %v1866 = vunpack.c.h.b16 %v1517
  %v1867 = vunpack.c.l.b16 %v1518
  %v1868 = vunpack.c.h.b16 %v1518
  %v1869 = vunpack.c.l.b16 %v1519
  %v1870 = vunpack.c.l.b16 %v1520
  %v1871 = vunpack.c.h.b16 %v1520
  %v1872 = vunpack.c.l.b16 %v1521
  %v1873 = vunpack.c.h.b16 %v1521
  %v1874 = vunpack.c.l.b16 %v1522
  %v1875 = vunpack.c.h.b16 %v1522
  %v1876 = vunpack.c.l.b16 %v1523
  %v1877 = vunpack.c.l.b16 %v1524
  %v1878 = vunpack.c.h.b16 %v1524
  %v1879 = vunpack.c.l.b16 %v1525
  %v1880 = vunpack.c.h.b16 %v1525
  %v1881 = vunpack.c.l.b16 %v1526
  %v1882 = vunpack.c.h.b16 %v1526
  %v1883 = vunpack.c.l.b16 %v1527
  %v1884 = vunpack.c.l.b16 %v1528
  %v1885 = vunpack.c.h.b16 %v1528
  %v1886 = vunpack.c.l.b16 %v1529
  %v1887 = vunpack.c.h.b16 %v1529
  %v1888 = vunpack.c.l.b16 %v1530
  %v1889 = vunpack.c.h.b16 %v1530
  %v1890 = vunpack.c.l.b16 %v1531
  %v1891 = vunpack.c.l.b16 %v1532
  %v1892 = vunpack.c.h.b16 %v1532
  %v1893 = vunpack.c.l.b16 %v1533
  %v1894 = vunpack.c.h.b16 %v1533
  %v1895 = vunpack.c.l.b16 %v1534
  %v1896 = vunpack.c.h.b16 %v1534
  %v1897 = vunpack.c.l.b16 %v1535
  %v1898 = vunpack.c.l.b16 %v1536
  %v1899 = vunpack.c.h.b16 %v1536
  %v1900 = vunpack.c.l.b16 %v1537
  %v1901 = vunpack.c.h.b16 %v1537
  %v1902 = vunpack.c.l.b16 %v1538
  %v1903 = vunpack.c.h.b16 %v1538
  %v1904 = vunpack.c.l.b16 %v1539
  %v1905 = vunpack.c.l.b16 %v1540
  %v1906 = vunpack.c.h.b16 %v1540
  %v1907 = vunpack.c.l.b16 %v1541
  %v1908 = vunpack.c.h.b16 %v1541
  %v1909 = vunpack.c.l.b16 %v1542
  %v1910 = vunpack.c.h.b16 %v1542
  %v1911 = vunpack.c.l.b16 %v1543
  %v1912 = vunpack.c.l.b16 %v1544
  %v1913 = vunpack.c.h.b16 %v1544
  %v1914 = vunpack.c.l.b16 %v1545
  %v1915 = vunpack.c.h.b16 %v1545
  %v1916 = vunpack.c.l.b16 %v1546
  %v1917 = vunpack.c.h.b16 %v1546
  %v1918 = vunpack.c.l.b16 %v1547
  %v1919 = vunpack.c.l.b16 %v1548
  %v1920 = vunpack.c.h.b16 %v1548
  %v1921 = vunpack.c.l.b16 %v1549
  %v1922 = vunpack.c.h.b16 %v1549
  %v1923 = vunpack.c.l.b16 %v1550
  %v1924 = vunpack.c.h.b16 %v1550
  %v1925 = vunpack.c.l.b16 %v1551
  %v1926 = vunpack.c.l.b16 %v1552
  %v1927 = vunpack.c.h.b16 %v1552
  %v1928 = vunpack.c.l.b16 %v1553
  %v1929 = vunpack.c.h.b16 %v1553
  %v1930 = vunpack.c.l.b16 %v1554
  %v1931 = vunpack.c.h.b16 %v1554
  %v1932 = vunpack.c.l.b16 %v1555
  %v1933 = vunpack.c.l.b16 %v1556
  %v1934 = vunpack.c.h.b16 %v1556
  %v1935 = vunpack.c.l.b16 %v1557
  %v1936 = vunpack.c.h.b16 %v1557
  %v1937 = vunpack.c.l.b16 %v1558
  %v1938 = vunpack.c.h.b16 %v1558
  %v1939 = vunpack.c.l.b16 %v1559
  %v1940 = vunpack.c.l.b16 %v1560
  %v1941 = vunpack.c.h.b16 %v1560
  %v1942 = vunpack.c.l.b16 %v1561
  %v1943 = vunpack.c.h.b16 %v1561
  %v1944 = vunpack.c.l.b16 %v1562
  %v1945 = vunpack.c.h.b16 %v1562
  %v1946 = vunpack.c.l.b16 %v1563
  %v1947 = vunpack.c.l.b16 %v1564
  %v1948 = vunpack.c.h.b16 %v1564
  %v1949 = vunpack.c.l.b16 %v1565
  %v1950 = vunpack.c.h.b16 %v1565
  %v1951 = vunpack.c.l.b16 %v1566
  %v1952 = vunpack.c.h.b16 %v1566
  %v1953 = vunpack.c.l.b16 %v1567
  %v1954 = vunpack.c.l.b16 %v1568
  %v1955 = vunpack.c.h.b16 %v1568
  %v1956 = vunpack.c.l.b16 %v1569
  %v1957 = vunpack.c.h.b16 %v1569
  %v1958 = vunpack.c.l.b16 %v1570
  %v1959 = vunpack.c.h.b16 %v1570
  %v1960 = vunpack.c.l.b16 %v1571
  %v1961 = vpack.c.b16 %v1744, %v1737
  %v1962 = vpack.c.b16 %v1745, %v1738
  %v1963 = vpack.c.b16 %v1746, %v1739
  %v1964 = vpack.c.b16 %v1747, %v1740
  %v1965 = vpack.c.b16 %v1748, %v1741
  %v1966 = vpack.c.b16 %v1749, %v1742
  %v1967 = vpack.c.b16 %v1750, %v1743
  %v1968 = vpack.c.b16 %v1758, %v1751
  %v1969 = vpack.c.b16 %v1759, %v1752
  %v1970 = vpack.c.b16 %v1760, %v1753
  %v1971 = vpack.c.b16 %v1761, %v1754
  %v1972 = vpack.c.b16 %v1762, %v1755
  %v1973 = vpack.c.b16 %v1763, %v1756
  %v1974 = vpack.c.b16 %v1764, %v1757
  %v1975 = vpack.c.b16 %v1772, %v1765
  %v1976 = vpack.c.b16 %v1773, %v1766
  %v1977 = vpack.c.b16 %v1774, %v1767
  %v1978 = vpack.c.b16 %v1775, %v1768
  %v1979 = vpack.c.b16 %v1776, %v1769
  %v1980 = vpack.c.b16 %v1777, %v1770
  %v1981 = vpack.c.b16 %v1778, %v1771
  %v1982 = vpack.c.b16 %v1786, %v1779
  %v1983 = vpack.c.b16 %v1787, %v1780
  %v1984 = vpack.c.b16 %v1788, %v1781
  %v1985 = vpack.c.b16 %v1789, %v1782
  %v1986 = vpack.c.b16 %v1790, %v1783
  %v1987 = vpack.c.b16 %v1791, %v1784
  %v1988 = vpack.c.b16 %v1792, %v1785
  %v1989 = vpack.c.b16 %v1800, %v1793
  %v1990 = vpack.c.b16 %v1801, %v1794
  %v1991 = vpack.c.b16 %v1802, %v1795
  %v1992 = vpack.c.b16 %v1803, %v1796
  %v1993 = vpack.c.b16 %v1804, %v1797
  %v1994 = vpack.c.b16 %v1805, %v1798
  %v1995 = vpack.c.b16 %v1806, %v1799
  %v1996 = vpack.c.b16 %v1814, %v1807
  %v1997 = vpack.c.b16 %v1815, %v1808
  %v1998 = vpack.c.b16 %v1816, %v1809
  %v1999 = vpack.c.b16 %v1817, %v1810
  %v2000 = vpack.c.b16 %v1818, %v1811
  %v2001 = vpack.c.b16 %v1819, %v1812
  %v2002 = vpack.c.b16 %v1820, %v1813
  %v2003 = vpack.c.b16 %v1828, %v1821
  %v2004 = vpack.c.b16 %v1829, %v1822
  %v2005 = vpack.c.b16 %v1830, %v1823
  %v2006 = vpack.c.b16 %v1831, %v1824
  %v2007 = vpack.c.b16 %v1832, %v1825
  %v2008 = vpack.c.b16 %v1833, %v1826
  %v2009 = vpack.c.b16 %v1834, %v1827
  %v2010 = vpack.c.b16 %v1842, %v1835
  %v2011 = vpack.c.b16 %v1843, %v1836
  %v2012 = vpack.c.b16 %v1844, %v1837
  %v2013 = vpack.c.b16 %v1845, %v1838
  %v2014 = vpack.c.b16 %v1846, %v1839
  %v2015 = vpack.c.b16 %v1847, %v1840
  %v2016 = vpack.c.b16 %v1848, %v1841
  %v2017 = vpack.c.b16 %v1856, %v1849
  %v2018 = vpack.c.b16 %v1857, %v1850
  %v2019 = vpack.c.b16 %v1858, %v1851
  %v2020 = vpack.c.b16 %v1859, %v1852
  %v2021 = vpack.c.b16 %v1860, %v1853
  %v2022 = vpack.c.b16 %v1861, %v1854
  %v2023 = vpack.c.b16 %v1862, %v1855
  %v2024 = vpack.c.b16 %v1870, %v1863
  %v2025 = vpack.c.b16 %v1871, %v1864
  %v2026 = vpack.c.b16 %v1872, %v1865
  %v2027 = vpack.c.b16 %v1873, %v1866
  %v2028 = vpack.c.b16 %v1874, %v1867
  %v2029 = vpack.c.b16 %v1875, %v1868
  %v2030 = vpack.c.b16 %v1876, %v1869
  %v2031 = vpack.c.b16 %v1884, %v1877
  %v2032 = vpack.c.b16 %v1885, %v1878
  %v2033 = vpack.c.b16 %v1886, %v1879
  %v2034 = vpack.c.b16 %v1887, %v1880
  %v2035 = vpack.c.b16 %v1888, %v1881
  %v2036 = vpack.c.b16 %v1889, %v1882
  %v2037 = vpack.c.b16 %v1890, %v1883
  %v2038 = vpack.c.b16 %v1898, %v1891
  %v2039 = vpack.c.b16 %v1899, %v1892
  %v2040 = vpack.c.b16 %v1900, %v1893
  %v2041 = vpack.c.b16 %v1901, %v1894
  %v2042 = vpack.c.b16 %v1902, %v1895
  %v2043 = vpack.c.b16 %v1903, %v1896
  %v2044 = vpack.c.b16 %v1904, %v1897
  %v2045 = vpack.c.b16 %v1912, %v1905
  %v2046 = vpack.c.b16 %v1913, %v1906
  %v2047 = vpack.c.b16 %v1914, %v1907
  %v2048 = vpack.c.b16 %v1915, %v1908
  %v2049 = vpack.c.b16 %v1916, %v1909
  %v2050 = vpack.c.b16 %v1917, %v1910
  %v2051 = vpack.c.b16 %v1918, %v1911
  %v2052 = vpack.c.b16 %v1926, %v1919
  %v2053 = vpack.c.b16 %v1927, %v1920
  %v2054 = vpack.c.b16 %v1928, %v1921
  %v2055 = vpack.c.b16 %v1929, %v1922
  %v2056 = vpack.c.b16 %v1930, %v1923
  %v2057 = vpack.c.b16 %v1931, %v1924
  %v2058 = vpack.c.b16 %v1932, %v1925
  %v2059 = vpack.c.b16 %v1940, %v1933
  %v2060 = vpack.c.b16 %v1941, %v1934
  %v2061 = vpack.c.b16 %v1942, %v1935
  %v2062 = vpack.c.b16 %v1943, %v1936
  %v2063 = vpack.c.b16 %v1944, %v1937
  %v2064 = vpack.c.b16 %v1945, %v1938
  %v2065 = vpack.c.b16 %v1946, %v1939
  %v2066 = vpack.c.b16 %v1954, %v1947
  %v2067 = vpack.c.b16 %v1955, %v1948
  %v2068 = vpack.c.b16 %v1956, %v1949
  %v2069 = vpack.c.b16 %v1957, %v1950
  %v2070 = vpack.c.b16 %v1958, %v1951
  %v2071 = vpack.c.b16 %v1959, %v1952
  %v2072 = vpack.c.b16 %v1960, %v1953
  %2185 = vmatprep.subr.bf16.mxu0 %v2011
  %2186 = vmatpush1.bf16.msra.mxu0 %v2010
  %2187 = vmatprep.subr.bf16.mxu0 %v2004
  %2188 = vmatpush1.bf16.msra.mxu0 %v2003
  %2189 = vmatprep.subr.bf16.mxu0 %v1997
  %2190 = vmatpush1.bf16.msra.mxu0 %v1996
  %2191 = vmatprep.subr.bf16.mxu0 %v1990
  %2192 = vmatpush1.bf16.msra.mxu0 %v1989
  %2193 = vmatprep.subr.bf16.mxu0 %v1983
  %2194 = vmatpush1.bf16.msra.mxu0 %v1982
  %2195 = vmatprep.subr.bf16.mxu0 %v1976
  %2196 = vmatpush1.bf16.msra.mxu0 %v1975
  %2197 = vmatprep.subr.bf16.mxu0 %v1969
  %2198 = vmatpush1.bf16.msra.mxu0 %v1968
  %2199 = vmatprep.subr.bf16.mxu0 %v1962
  %2200 = vmatpush1.bf16.msra.mxu0 %v1961
  %2201 = vmatprep.subr.bf16.mxu0 %v2067
  %2202 = vmatpush2.bf16.msra.mxu0 %v2066
  %2203 = vmatprep.subr.bf16.mxu0 %v2060
  %2204 = vmatpush2.bf16.msra.mxu0 %v2059
  %2205 = vmatprep.subr.bf16.mxu0 %v2053
  %2206 = vmatpush2.bf16.msra.mxu0 %v2052
  %2207 = vmatprep.subr.bf16.mxu0 %v2046
  %2208 = vmatpush2.bf16.msra.mxu0 %v2045
  %2209 = vmatprep.subr.bf16.mxu0 %v2039
  %2210 = vmatpush2.bf16.msra.mxu0 %v2038
  %2211 = vmatprep.subr.bf16.mxu0 %v2032
  %2212 = vmatpush2.bf16.msra.mxu0 %v2031
  %2213 = vmatprep.subr.bf16.mxu0 %v2025
  %2214 = vmatpush2.bf16.msra.mxu0 %v2024
  %2215 = vmatprep.subr.bf16.mxu0 %v2018
  %2216 = vmatpush2.bf16.msra.mxu0 %v2017
  %2217 = vmatprep.mubr.bf16.mxu0 %v1413
  %2218 = vmatmul.mubr.bf16.gmra.mxu0 %v1412
  %v2219 = vpop.f32.mrf.mxu0
  %v2220 = vadd.f32 %v1577, %v2219
  %v2221 = vpop.f32.mrf.mxu0
  %v2222 = vadd.f32 %v1581, %v2221
  %v2223 = vpop.f32.mrf.mxu0
  %v2224 = vadd.f32 %v1577, %v2223
  %v2225 = vpop.f32.mrf.mxu0
  %v2226 = vadd.f32 %v1581, %v2225
  %2227 = vmatprep.mubr.bf16.mxu0 %v1415
  %2228 = vmatmul.mubr.bf16.gmra.mxu0 %v1414
  %v2229 = vpop.f32.mrf.mxu0
  %v2230 = vadd.f32 %v1577, %v2229
  %v2231 = vpop.f32.mrf.mxu0
  %v2232 = vadd.f32 %v1581, %v2231
  %v2233 = vpop.f32.mrf.mxu0
  %v2234 = vadd.f32 %v1577, %v2233
  %v2235 = vpop.f32.mrf.mxu0
  %v2236 = vadd.f32 %v1581, %v2235
  %2237 = vmatprep.mubr.bf16.mxu0 %v1417
  %2238 = vmatmul.mubr.bf16.gmra.mxu0 %v1416
  %v2239 = vpop.f32.mrf.mxu0
  %v2240 = vadd.f32 %v1577, %v2239
  %v2241 = vpop.f32.mrf.mxu0
  %v2242 = vadd.f32 %v1581, %v2241
  %v2243 = vpop.f32.mrf.mxu0
  %v2244 = vadd.f32 %v1577, %v2243
  %v2245 = vpop.f32.mrf.mxu0
  %v2246 = vadd.f32 %v1581, %v2245
  %2247 = vmatprep.mubr.bf16.mxu0 %v1419
  %2248 = vmatmul.mubr.bf16.gmra.mxu0 %v1418
  %v2249 = vpop.f32.mrf.mxu0
  %v2250 = vadd.f32 %v1577, %v2249
  %v2251 = vpop.f32.mrf.mxu0
  %v2252 = vadd.f32 %v1581, %v2251
  %v2253 = vpop.f32.mrf.mxu0
  %v2254 = vadd.f32 %v1577, %v2253
  %v2255 = vpop.f32.mrf.mxu0
  %v2256 = vadd.f32 %v1581, %v2255
  %2257 = vmatprep.mubr.bf16.mxu0 %v1421
  %2258 = vmatmul.mubr.bf16.gmra.mxu0 %v1420
  %v2259 = vpop.f32.mrf.mxu0
  %v2260 = vadd.f32 %v1577, %v2259
  %v2261 = vpop.f32.mrf.mxu0
  %v2262 = vadd.f32 %v1581, %v2261
  %v2263 = vpop.f32.mrf.mxu0
  %v2264 = vadd.f32 %v1577, %v2263
  %v2265 = vpop.f32.mrf.mxu0
  %v2266 = vadd.f32 %v1581, %v2265
  %2267 = vmatprep.mubr.bf16.mxu0 %v1423
  %2268 = vmatmul.mubr.bf16.gmra.mxu0 %v1422
  %v2269 = vpop.f32.mrf.mxu0
  %v2270 = vadd.f32 %v1577, %v2269
  %v2271 = vpop.f32.mrf.mxu0
  %v2272 = vadd.f32 %v1581, %v2271
  %v2273 = vpop.f32.mrf.mxu0
  %v2274 = vadd.f32 %v1577, %v2273
  %v2275 = vpop.f32.mrf.mxu0
  %v2276 = vadd.f32 %v1581, %v2275
  %2277 = vmatprep.mubr.bf16.mxu0 %v1425
  %2278 = vmatmul.mubr.bf16.gmra.mxu0 %v1424
  %v2279 = vpop.f32.mrf.mxu0
  %v2280 = vadd.f32 %v1577, %v2279
  %v2281 = vpop.f32.mrf.mxu0
  %v2282 = vadd.f32 %v1581, %v2281
  %v2283 = vpop.f32.mrf.mxu0
  %v2284 = vadd.f32 %v1577, %v2283
  %v2285 = vpop.f32.mrf.mxu0
  %v2286 = vadd.f32 %v1581, %v2285
  %2287 = vmatprep.mubr.bf16.mxu0 %v1427
  %2288 = vmatmul.mubr.bf16.gmra.mxu0 %v1426
  %v2289 = vpop.f32.mrf.mxu0
  %v2290 = vadd.f32 %v1577, %v2289
  %v2291 = vpop.f32.mrf.mxu0
  %v2292 = vadd.f32 %v1581, %v2291
  %v2293 = vpop.f32.mrf.mxu0
  %v2294 = vadd.f32 %v1577, %v2293
  %v2295 = vpop.f32.mrf.mxu0
  %v2296 = vadd.f32 %v1581, %v2295
  %2297 = vmatprep.mubr.bf16.mxu0 %v1429
  %2298 = vmatmul.mubr.bf16.gmra.mxu0 %v1428
  %v2299 = vpop.f32.mrf.mxu0
  %v2300 = vadd.f32 %v1577, %v2299
  %v2301 = vpop.f32.mrf.mxu0
  %v2302 = vadd.f32 %v1581, %v2301
  %v2303 = vpop.f32.mrf.mxu0
  %v2304 = vadd.f32 %v1577, %v2303
  %v2305 = vpop.f32.mrf.mxu0
  %v2306 = vadd.f32 %v1581, %v2305
  %2307 = vmatprep.mubr.bf16.mxu0 %v1431
  %2308 = vmatmul.mubr.bf16.gmra.mxu0 %v1430
  %v2309 = vpop.f32.mrf.mxu0
  %v2310 = vadd.f32 %v1577, %v2309
  %v2311 = vpop.f32.mrf.mxu0
  %v2312 = vadd.f32 %v1581, %v2311
  %v2313 = vpop.f32.mrf.mxu0
  %v2314 = vadd.f32 %v1577, %v2313
  %v2315 = vpop.f32.mrf.mxu0
  %v2316 = vadd.f32 %v1581, %v2315
  %2317 = vmatprep.mubr.bf16.mxu0 %v1433
  %2318 = vmatmul.mubr.bf16.gmra.mxu0 %v1432
  %v2319 = vpop.f32.mrf.mxu0
  %v2320 = vadd.f32 %v1577, %v2319
  %v2321 = vpop.f32.mrf.mxu0
  %v2322 = vadd.f32 %v1581, %v2321
  %v2323 = vpop.f32.mrf.mxu0
  %v2324 = vadd.f32 %v1577, %v2323
  %v2325 = vpop.f32.mrf.mxu0
  %v2326 = vadd.f32 %v1581, %v2325
  %2327 = vmatprep.mubr.bf16.mxu0 %v1435
  %2328 = vmatmul.mubr.bf16.gmra.mxu0 %v1434
  %v2329 = vpop.f32.mrf.mxu0
  %v2330 = vadd.f32 %v1577, %v2329
  %v2331 = vpop.f32.mrf.mxu0
  %v2332 = vadd.f32 %v1581, %v2331
  %v2333 = vpop.f32.mrf.mxu0
  %v2334 = vadd.f32 %v1577, %v2333
  %v2335 = vpop.f32.mrf.mxu0
  %v2336 = vadd.f32 %v1581, %v2335
  %2337 = vmatprep.mubr.bf16.mxu0 %v1437
  %2338 = vmatmul.mubr.bf16.gmra.mxu0 %v1436
  %v2339 = vpop.f32.mrf.mxu0
  %v2340 = vadd.f32 %v1577, %v2339
  %v2341 = vpop.f32.mrf.mxu0
  %v2342 = vadd.f32 %v1581, %v2341
  %v2343 = vpop.f32.mrf.mxu0
  %v2344 = vadd.f32 %v1577, %v2343
  %v2345 = vpop.f32.mrf.mxu0
  %v2346 = vadd.f32 %v1581, %v2345
  %2347 = vmatprep.mubr.bf16.mxu0 %v1439
  %2348 = vmatmul.mubr.bf16.gmra.mxu0 %v1438
  %v2349 = vpop.f32.mrf.mxu0
  %v2350 = vadd.f32 %v1577, %v2349
  %v2351 = vpop.f32.mrf.mxu0
  %v2352 = vadd.f32 %v1581, %v2351
  %v2353 = vpop.f32.mrf.mxu0
  %v2354 = vadd.f32 %v1577, %v2353
  %v2355 = vpop.f32.mrf.mxu0
  %v2356 = vadd.f32 %v1581, %v2355
  %2357 = vmatprep.mubr.bf16.mxu0 %v1441
  %2358 = vmatmul.mubr.bf16.gmra.mxu0 %v1440
  %v2359 = vpop.f32.mrf.mxu0
  %v2360 = vadd.f32 %v1577, %v2359
  %v2361 = vpop.f32.mrf.mxu0
  %v2362 = vadd.f32 %v1581, %v2361
  %v2363 = vpop.f32.mrf.mxu0
  %v2364 = vadd.f32 %v1577, %v2363
  %v2365 = vpop.f32.mrf.mxu0
  %v2366 = vadd.f32 %v1581, %v2365
  %2367 = vmatprep.mubr.bf16.mxu0 %v1443
  %2368 = vmatmul.mubr.bf16.gmra.mxu0 %v1442
  %v2369 = vpop.f32.mrf.mxu0
  %v2370 = vadd.f32 %v1577, %v2369
  %v2371 = vpop.f32.mrf.mxu0
  %v2372 = vadd.f32 %v1581, %v2371
  %v2373 = vpop.f32.mrf.mxu0
  %v2374 = vadd.f32 %v1577, %v2373
  %v2375 = vpop.f32.mrf.mxu0
  %v2376 = vadd.f32 %v1581, %v2375
  %2377 = vdwg.mxu0
  %2378 = vmatprep.subr.bf16.mxu0 %v2013
  %2379 = vmatpush1.bf16.msra.mxu0 %v2012
  %2380 = vmatprep.subr.bf16.mxu0 %v2006
  %2381 = vmatpush1.bf16.msra.mxu0 %v2005
  %2382 = vmatprep.subr.bf16.mxu0 %v1999
  %2383 = vmatpush1.bf16.msra.mxu0 %v1998
  %2384 = vmatprep.subr.bf16.mxu0 %v1992
  %2385 = vmatpush1.bf16.msra.mxu0 %v1991
  %2386 = vmatprep.subr.bf16.mxu0 %v1985
  %2387 = vmatpush1.bf16.msra.mxu0 %v1984
  %2388 = vmatprep.subr.bf16.mxu0 %v1978
  %2389 = vmatpush1.bf16.msra.mxu0 %v1977
  %2390 = vmatprep.subr.bf16.mxu0 %v1971
  %2391 = vmatpush1.bf16.msra.mxu0 %v1970
  %2392 = vmatprep.subr.bf16.mxu0 %v1964
  %2393 = vmatpush1.bf16.msra.mxu0 %v1963
  %2394 = vmatprep.subr.bf16.mxu0 %v2069
  %2395 = vmatpush2.bf16.msra.mxu0 %v2068
  %2396 = vmatprep.subr.bf16.mxu0 %v2062
  %2397 = vmatpush2.bf16.msra.mxu0 %v2061
  %2398 = vmatprep.subr.bf16.mxu0 %v2055
  %2399 = vmatpush2.bf16.msra.mxu0 %v2054
  %2400 = vmatprep.subr.bf16.mxu0 %v2048
  %2401 = vmatpush2.bf16.msra.mxu0 %v2047
  %2402 = vmatprep.subr.bf16.mxu0 %v2041
  %2403 = vmatpush2.bf16.msra.mxu0 %v2040
  %2404 = vmatprep.subr.bf16.mxu0 %v2034
  %2405 = vmatpush2.bf16.msra.mxu0 %v2033
  %2406 = vmatprep.subr.bf16.mxu0 %v2027
  %2407 = vmatpush2.bf16.msra.mxu0 %v2026
  %2408 = vmatprep.subr.bf16.mxu0 %v2020
  %2409 = vmatpush2.bf16.msra.mxu0 %v2019
  %2410 = vmatprep.mubr.bf16.mxu0 %v1413
  %2411 = vmatmul.mubr.bf16.gmra.mxu0 %v1412
  %v2412 = vpop.f32.mrf.mxu0
  %v2413 = vadd.f32 %v1585, %v2412
  %v2414 = vpop.f32.mrf.mxu0
  %v2415 = vadd.f32 %v1589, %v2414
  %v2416 = vpop.f32.mrf.mxu0
  %v2417 = vadd.f32 %v1585, %v2416
  %v2418 = vpop.f32.mrf.mxu0
  %v2419 = vadd.f32 %v1589, %v2418
  %2420 = vmatprep.mubr.bf16.mxu0 %v1415
  %2421 = vmatmul.mubr.bf16.gmra.mxu0 %v1414
  %v2422 = vpop.f32.mrf.mxu0
  %v2423 = vadd.f32 %v1585, %v2422
  %v2424 = vpop.f32.mrf.mxu0
  %v2425 = vadd.f32 %v1589, %v2424
  %v2426 = vpop.f32.mrf.mxu0
  %v2427 = vadd.f32 %v1585, %v2426
  %v2428 = vpop.f32.mrf.mxu0
  %v2429 = vadd.f32 %v1589, %v2428
  %2430 = vmatprep.mubr.bf16.mxu0 %v1417
  %2431 = vmatmul.mubr.bf16.gmra.mxu0 %v1416
  %v2432 = vpop.f32.mrf.mxu0
  %v2433 = vadd.f32 %v1585, %v2432
  %v2434 = vpop.f32.mrf.mxu0
  %v2435 = vadd.f32 %v1589, %v2434
  %v2436 = vpop.f32.mrf.mxu0
  %v2437 = vadd.f32 %v1585, %v2436
  %v2438 = vpop.f32.mrf.mxu0
  %v2439 = vadd.f32 %v1589, %v2438
  %2440 = vmatprep.mubr.bf16.mxu0 %v1419
  %2441 = vmatmul.mubr.bf16.gmra.mxu0 %v1418
  %v2442 = vpop.f32.mrf.mxu0
  %v2443 = vadd.f32 %v1585, %v2442
  %v2444 = vpop.f32.mrf.mxu0
  %v2445 = vadd.f32 %v1589, %v2444
  %v2446 = vpop.f32.mrf.mxu0
  %v2447 = vadd.f32 %v1585, %v2446
  %v2448 = vpop.f32.mrf.mxu0
  %v2449 = vadd.f32 %v1589, %v2448
  %2450 = vmatprep.mubr.bf16.mxu0 %v1421
  %2451 = vmatmul.mubr.bf16.gmra.mxu0 %v1420
  %v2452 = vpop.f32.mrf.mxu0
  %v2453 = vadd.f32 %v1585, %v2452
  %v2454 = vpop.f32.mrf.mxu0
  %v2455 = vadd.f32 %v1589, %v2454
  %v2456 = vpop.f32.mrf.mxu0
  %v2457 = vadd.f32 %v1585, %v2456
  %v2458 = vpop.f32.mrf.mxu0
  %v2459 = vadd.f32 %v1589, %v2458
  %2460 = vmatprep.mubr.bf16.mxu0 %v1423
  %2461 = vmatmul.mubr.bf16.gmra.mxu0 %v1422
  %v2462 = vpop.f32.mrf.mxu0
  %v2463 = vadd.f32 %v1585, %v2462
  %v2464 = vpop.f32.mrf.mxu0
  %v2465 = vadd.f32 %v1589, %v2464
  %v2466 = vpop.f32.mrf.mxu0
  %v2467 = vadd.f32 %v1585, %v2466
  %v2468 = vpop.f32.mrf.mxu0
  %v2469 = vadd.f32 %v1589, %v2468
  %2470 = vmatprep.mubr.bf16.mxu0 %v1425
  %2471 = vmatmul.mubr.bf16.gmra.mxu0 %v1424
  %v2472 = vpop.f32.mrf.mxu0
  %v2473 = vadd.f32 %v1585, %v2472
  %v2474 = vpop.f32.mrf.mxu0
  %v2475 = vadd.f32 %v1589, %v2474
  %v2476 = vpop.f32.mrf.mxu0
  %v2477 = vadd.f32 %v1585, %v2476
  %v2478 = vpop.f32.mrf.mxu0
  %v2479 = vadd.f32 %v1589, %v2478
  %2480 = vmatprep.mubr.bf16.mxu0 %v1427
  %2481 = vmatmul.mubr.bf16.gmra.mxu0 %v1426
  %v2482 = vpop.f32.mrf.mxu0
  %v2483 = vadd.f32 %v1585, %v2482
  %v2484 = vpop.f32.mrf.mxu0
  %v2485 = vadd.f32 %v1589, %v2484
  %v2486 = vpop.f32.mrf.mxu0
  %v2487 = vadd.f32 %v1585, %v2486
  %v2488 = vpop.f32.mrf.mxu0
  %v2489 = vadd.f32 %v1589, %v2488
  %2490 = vmatprep.mubr.bf16.mxu0 %v1429
  %2491 = vmatmul.mubr.bf16.gmra.mxu0 %v1428
  %v2492 = vpop.f32.mrf.mxu0
  %v2493 = vadd.f32 %v1585, %v2492
  %v2494 = vpop.f32.mrf.mxu0
  %v2495 = vadd.f32 %v1589, %v2494
  %v2496 = vpop.f32.mrf.mxu0
  %v2497 = vadd.f32 %v1585, %v2496
  %v2498 = vpop.f32.mrf.mxu0
  %v2499 = vadd.f32 %v1589, %v2498
  %2500 = vmatprep.mubr.bf16.mxu0 %v1431
  %2501 = vmatmul.mubr.bf16.gmra.mxu0 %v1430
  %v2502 = vpop.f32.mrf.mxu0
  %v2503 = vadd.f32 %v1585, %v2502
  %v2504 = vpop.f32.mrf.mxu0
  %v2505 = vadd.f32 %v1589, %v2504
  %v2506 = vpop.f32.mrf.mxu0
  %v2507 = vadd.f32 %v1585, %v2506
  %v2508 = vpop.f32.mrf.mxu0
  %v2509 = vadd.f32 %v1589, %v2508
  %2510 = vmatprep.mubr.bf16.mxu0 %v1433
  %2511 = vmatmul.mubr.bf16.gmra.mxu0 %v1432
  %v2512 = vpop.f32.mrf.mxu0
  %v2513 = vadd.f32 %v1585, %v2512
  %v2514 = vpop.f32.mrf.mxu0
  %v2515 = vadd.f32 %v1589, %v2514
  %v2516 = vpop.f32.mrf.mxu0
  %v2517 = vadd.f32 %v1585, %v2516
  %v2518 = vpop.f32.mrf.mxu0
  %v2519 = vadd.f32 %v1589, %v2518
  %2520 = vmatprep.mubr.bf16.mxu0 %v1435
  %2521 = vmatmul.mubr.bf16.gmra.mxu0 %v1434
  %v2522 = vpop.f32.mrf.mxu0
  %v2523 = vadd.f32 %v1585, %v2522
  %v2524 = vpop.f32.mrf.mxu0
  %v2525 = vadd.f32 %v1589, %v2524
  %v2526 = vpop.f32.mrf.mxu0
  %v2527 = vadd.f32 %v1585, %v2526
  %v2528 = vpop.f32.mrf.mxu0
  %v2529 = vadd.f32 %v1589, %v2528
  %2530 = vmatprep.mubr.bf16.mxu0 %v1437
  %2531 = vmatmul.mubr.bf16.gmra.mxu0 %v1436
  %v2532 = vpop.f32.mrf.mxu0
  %v2533 = vadd.f32 %v1585, %v2532
  %v2534 = vpop.f32.mrf.mxu0
  %v2535 = vadd.f32 %v1589, %v2534
  %v2536 = vpop.f32.mrf.mxu0
  %v2537 = vadd.f32 %v1585, %v2536
  %v2538 = vpop.f32.mrf.mxu0
  %v2539 = vadd.f32 %v1589, %v2538
  %2540 = vmatprep.mubr.bf16.mxu0 %v1439
  %2541 = vmatmul.mubr.bf16.gmra.mxu0 %v1438
  %v2542 = vpop.f32.mrf.mxu0
  %v2543 = vadd.f32 %v1585, %v2542
  %v2544 = vpop.f32.mrf.mxu0
  %v2545 = vadd.f32 %v1589, %v2544
  %v2546 = vpop.f32.mrf.mxu0
  %v2547 = vadd.f32 %v1585, %v2546
  %v2548 = vpop.f32.mrf.mxu0
  %v2549 = vadd.f32 %v1589, %v2548
  %2550 = vmatprep.mubr.bf16.mxu0 %v1441
  %2551 = vmatmul.mubr.bf16.gmra.mxu0 %v1440
  %v2552 = vpop.f32.mrf.mxu0
  %v2553 = vadd.f32 %v1585, %v2552
  %v2554 = vpop.f32.mrf.mxu0
  %v2555 = vadd.f32 %v1589, %v2554
  %v2556 = vpop.f32.mrf.mxu0
  %v2557 = vadd.f32 %v1585, %v2556
  %v2558 = vpop.f32.mrf.mxu0
  %v2559 = vadd.f32 %v1589, %v2558
  %2560 = vmatprep.mubr.bf16.mxu0 %v1443
  %2561 = vmatmul.mubr.bf16.gmra.mxu0 %v1442
  %v2562 = vpop.f32.mrf.mxu0
  %v2563 = vadd.f32 %v1585, %v2562
  %v2564 = vpop.f32.mrf.mxu0
  %v2565 = vadd.f32 %v1589, %v2564
  %v2566 = vpop.f32.mrf.mxu0
  %v2567 = vadd.f32 %v1585, %v2566
  %v2568 = vpop.f32.mrf.mxu0
  %v2569 = vadd.f32 %v1589, %v2568
  %2570 = vdwg.mxu0
  %2571 = vmatprep.subr.bf16.mxu0 %v2015
  %2572 = vmatpush1.bf16.msra.mxu0 %v2014
  %2573 = vmatprep.subr.bf16.mxu0 %v2008
  %2574 = vmatpush1.bf16.msra.mxu0 %v2007
  %2575 = vmatprep.subr.bf16.mxu0 %v2001
  %2576 = vmatpush1.bf16.msra.mxu0 %v2000
  %2577 = vmatprep.subr.bf16.mxu0 %v1994
  %2578 = vmatpush1.bf16.msra.mxu0 %v1993
  %2579 = vmatprep.subr.bf16.mxu0 %v1987
  %2580 = vmatpush1.bf16.msra.mxu0 %v1986
  %2581 = vmatprep.subr.bf16.mxu0 %v1980
  %2582 = vmatpush1.bf16.msra.mxu0 %v1979
  %2583 = vmatprep.subr.bf16.mxu0 %v1973
  %2584 = vmatpush1.bf16.msra.mxu0 %v1972
  %2585 = vmatprep.subr.bf16.mxu0 %v1966
  %2586 = vmatpush1.bf16.msra.mxu0 %v1965
  %2587 = vmatprep.subr.bf16.mxu0 %v2071
  %2588 = vmatpush2.bf16.msra.mxu0 %v2070
  %2589 = vmatprep.subr.bf16.mxu0 %v2064
  %2590 = vmatpush2.bf16.msra.mxu0 %v2063
  %2591 = vmatprep.subr.bf16.mxu0 %v2057
  %2592 = vmatpush2.bf16.msra.mxu0 %v2056
  %2593 = vmatprep.subr.bf16.mxu0 %v2050
  %2594 = vmatpush2.bf16.msra.mxu0 %v2049
  %2595 = vmatprep.subr.bf16.mxu0 %v2043
  %2596 = vmatpush2.bf16.msra.mxu0 %v2042
  %2597 = vmatprep.subr.bf16.mxu0 %v2036
  %2598 = vmatpush2.bf16.msra.mxu0 %v2035
  %2599 = vmatprep.subr.bf16.mxu0 %v2029
  %2600 = vmatpush2.bf16.msra.mxu0 %v2028
  %2601 = vmatprep.subr.bf16.mxu0 %v2022
  %2602 = vmatpush2.bf16.msra.mxu0 %v2021
  %2603 = vmatprep.mubr.bf16.mxu0 %v1413
  %2604 = vmatmul.mubr.bf16.gmra.mxu0 %v1412
  %v2605 = vpop.f32.mrf.mxu0
  %v2606 = vadd.f32 %v1593, %v2605
  %v2607 = vpop.f32.mrf.mxu0
  %v2608 = vadd.f32 %v1597, %v2607
  %v2609 = vpop.f32.mrf.mxu0
  %v2610 = vadd.f32 %v1593, %v2609
  %v2611 = vpop.f32.mrf.mxu0
  %v2612 = vadd.f32 %v1597, %v2611
  %2613 = vmatprep.mubr.bf16.mxu0 %v1415
  %2614 = vmatmul.mubr.bf16.gmra.mxu0 %v1414
  %v2615 = vpop.f32.mrf.mxu0
  %v2616 = vadd.f32 %v1593, %v2615
  %v2617 = vpop.f32.mrf.mxu0
  %v2618 = vadd.f32 %v1597, %v2617
  %v2619 = vpop.f32.mrf.mxu0
  %v2620 = vadd.f32 %v1593, %v2619
  %v2621 = vpop.f32.mrf.mxu0
  %v2622 = vadd.f32 %v1597, %v2621
  %2623 = vmatprep.mubr.bf16.mxu0 %v1417
  %2624 = vmatmul.mubr.bf16.gmra.mxu0 %v1416
  %v2625 = vpop.f32.mrf.mxu0
  %v2626 = vadd.f32 %v1593, %v2625
  %v2627 = vpop.f32.mrf.mxu0
  %v2628 = vadd.f32 %v1597, %v2627
  %v2629 = vpop.f32.mrf.mxu0
  %v2630 = vadd.f32 %v1593, %v2629
  %v2631 = vpop.f32.mrf.mxu0
  %v2632 = vadd.f32 %v1597, %v2631
  %2633 = vmatprep.mubr.bf16.mxu0 %v1419
  %2634 = vmatmul.mubr.bf16.gmra.mxu0 %v1418
  %v2635 = vpop.f32.mrf.mxu0
  %v2636 = vadd.f32 %v1593, %v2635
  %v2637 = vpop.f32.mrf.mxu0
  %v2638 = vadd.f32 %v1597, %v2637
  %v2639 = vpop.f32.mrf.mxu0
  %v2640 = vadd.f32 %v1593, %v2639
  %v2641 = vpop.f32.mrf.mxu0
  %v2642 = vadd.f32 %v1597, %v2641
  %2643 = vmatprep.mubr.bf16.mxu0 %v1421
  %2644 = vmatmul.mubr.bf16.gmra.mxu0 %v1420
  %v2645 = vpop.f32.mrf.mxu0
  %v2646 = vadd.f32 %v1593, %v2645
  %v2647 = vpop.f32.mrf.mxu0
  %v2648 = vadd.f32 %v1597, %v2647
  %v2649 = vpop.f32.mrf.mxu0
  %v2650 = vadd.f32 %v1593, %v2649
  %v2651 = vpop.f32.mrf.mxu0
  %v2652 = vadd.f32 %v1597, %v2651
  %2653 = vmatprep.mubr.bf16.mxu0 %v1423
  %2654 = vmatmul.mubr.bf16.gmra.mxu0 %v1422
  %v2655 = vpop.f32.mrf.mxu0
  %v2656 = vadd.f32 %v1593, %v2655
  %v2657 = vpop.f32.mrf.mxu0
  %v2658 = vadd.f32 %v1597, %v2657
  %v2659 = vpop.f32.mrf.mxu0
  %v2660 = vadd.f32 %v1593, %v2659
  %v2661 = vpop.f32.mrf.mxu0
  %v2662 = vadd.f32 %v1597, %v2661
  %2663 = vmatprep.mubr.bf16.mxu0 %v1425
  %2664 = vmatmul.mubr.bf16.gmra.mxu0 %v1424
  %v2665 = vpop.f32.mrf.mxu0
  %v2666 = vadd.f32 %v1593, %v2665
  %v2667 = vpop.f32.mrf.mxu0
  %v2668 = vadd.f32 %v1597, %v2667
  %v2669 = vpop.f32.mrf.mxu0
  %v2670 = vadd.f32 %v1593, %v2669
  %v2671 = vpop.f32.mrf.mxu0
  %v2672 = vadd.f32 %v1597, %v2671
  %2673 = vmatprep.mubr.bf16.mxu0 %v1427
  %2674 = vmatmul.mubr.bf16.gmra.mxu0 %v1426
  %v2675 = vpop.f32.mrf.mxu0
  %v2676 = vadd.f32 %v1593, %v2675
  %v2677 = vpop.f32.mrf.mxu0
  %v2678 = vadd.f32 %v1597, %v2677
  %v2679 = vpop.f32.mrf.mxu0
  %v2680 = vadd.f32 %v1593, %v2679
  %v2681 = vpop.f32.mrf.mxu0
  %v2682 = vadd.f32 %v1597, %v2681
  %2683 = vmatprep.mubr.bf16.mxu0 %v1429
  %2684 = vmatmul.mubr.bf16.gmra.mxu0 %v1428
  %v2685 = vpop.f32.mrf.mxu0
  %v2686 = vadd.f32 %v1593, %v2685
  %v2687 = vpop.f32.mrf.mxu0
  %v2688 = vadd.f32 %v1597, %v2687
  %v2689 = vpop.f32.mrf.mxu0
  %v2690 = vadd.f32 %v1593, %v2689
  %v2691 = vpop.f32.mrf.mxu0
  %v2692 = vadd.f32 %v1597, %v2691
  %2693 = vmatprep.mubr.bf16.mxu0 %v1431
  %2694 = vmatmul.mubr.bf16.gmra.mxu0 %v1430
  %v2695 = vpop.f32.mrf.mxu0
  %v2696 = vadd.f32 %v1593, %v2695
  %v2697 = vpop.f32.mrf.mxu0
  %v2698 = vadd.f32 %v1597, %v2697
  %v2699 = vpop.f32.mrf.mxu0
  %v2700 = vadd.f32 %v1593, %v2699
  %v2701 = vpop.f32.mrf.mxu0
  %v2702 = vadd.f32 %v1597, %v2701
  %2703 = vmatprep.mubr.bf16.mxu0 %v1433
  %2704 = vmatmul.mubr.bf16.gmra.mxu0 %v1432
  %v2705 = vpop.f32.mrf.mxu0
  %v2706 = vadd.f32 %v1593, %v2705
  %v2707 = vpop.f32.mrf.mxu0
  %v2708 = vadd.f32 %v1597, %v2707
  %v2709 = vpop.f32.mrf.mxu0
  %v2710 = vadd.f32 %v1593, %v2709
  %v2711 = vpop.f32.mrf.mxu0
  %v2712 = vadd.f32 %v1597, %v2711
  %2713 = vmatprep.mubr.bf16.mxu0 %v1435
  %2714 = vmatmul.mubr.bf16.gmra.mxu0 %v1434
  %v2715 = vpop.f32.mrf.mxu0
  %v2716 = vadd.f32 %v1593, %v2715
  %v2717 = vpop.f32.mrf.mxu0
  %v2718 = vadd.f32 %v1597, %v2717
  %v2719 = vpop.f32.mrf.mxu0
  %v2720 = vadd.f32 %v1593, %v2719
  %v2721 = vpop.f32.mrf.mxu0
  %v2722 = vadd.f32 %v1597, %v2721
  %2723 = vmatprep.mubr.bf16.mxu0 %v1437
  %2724 = vmatmul.mubr.bf16.gmra.mxu0 %v1436
  %v2725 = vpop.f32.mrf.mxu0
  %v2726 = vadd.f32 %v1593, %v2725
  %v2727 = vpop.f32.mrf.mxu0
  %v2728 = vadd.f32 %v1597, %v2727
  %v2729 = vpop.f32.mrf.mxu0
  %v2730 = vadd.f32 %v1593, %v2729
  %v2731 = vpop.f32.mrf.mxu0
  %v2732 = vadd.f32 %v1597, %v2731
  %2733 = vmatprep.mubr.bf16.mxu0 %v1439
  %2734 = vmatmul.mubr.bf16.gmra.mxu0 %v1438
  %v2735 = vpop.f32.mrf.mxu0
  %v2736 = vadd.f32 %v1593, %v2735
  %v2737 = vpop.f32.mrf.mxu0
  %v2738 = vadd.f32 %v1597, %v2737
  %v2739 = vpop.f32.mrf.mxu0
  %v2740 = vadd.f32 %v1593, %v2739
  %v2741 = vpop.f32.mrf.mxu0
  %v2742 = vadd.f32 %v1597, %v2741
  %2743 = vmatprep.mubr.bf16.mxu0 %v1441
  %2744 = vmatmul.mubr.bf16.gmra.mxu0 %v1440
  %v2745 = vpop.f32.mrf.mxu0
  %v2746 = vadd.f32 %v1593, %v2745
  %v2747 = vpop.f32.mrf.mxu0
  %v2748 = vadd.f32 %v1597, %v2747
  %v2749 = vpop.f32.mrf.mxu0
  %v2750 = vadd.f32 %v1593, %v2749
  %v2751 = vpop.f32.mrf.mxu0
  %v2752 = vadd.f32 %v1597, %v2751
  %2753 = vmatprep.mubr.bf16.mxu0 %v1443
  %2754 = vmatmul.mubr.bf16.gmra.mxu0 %v1442
  %v2755 = vpop.f32.mrf.mxu0
  %v2756 = vadd.f32 %v1593, %v2755
  %v2757 = vpop.f32.mrf.mxu0
  %v2758 = vadd.f32 %v1597, %v2757
  %v2759 = vpop.f32.mrf.mxu0
  %v2760 = vadd.f32 %v1593, %v2759
  %v2761 = vpop.f32.mrf.mxu0
  %v2762 = vadd.f32 %v1597, %v2761
  %2763 = vdwg.mxu0
  %2764 = vmatprep.subr.bf16.mxu0 0
  %2765 = vmatpush1.bf16.msra.mxu0 %v2016
  %2766 = vmatprep.subr.bf16.mxu0 0
  %2767 = vmatpush1.bf16.msra.mxu0 %v2009
  %2768 = vmatprep.subr.bf16.mxu0 0
  %2769 = vmatpush1.bf16.msra.mxu0 %v2002
  %2770 = vmatprep.subr.bf16.mxu0 0
  %2771 = vmatpush1.bf16.msra.mxu0 %v1995
  %2772 = vmatprep.subr.bf16.mxu0 0
  %2773 = vmatpush1.bf16.msra.mxu0 %v1988
  %2774 = vmatprep.subr.bf16.mxu0 0
  %2775 = vmatpush1.bf16.msra.mxu0 %v1981
  %2776 = vmatprep.subr.bf16.mxu0 0
  %2777 = vmatpush1.bf16.msra.mxu0 %v1974
  %2778 = vmatprep.subr.bf16.mxu0 0
  %2779 = vmatpush1.bf16.msra.mxu0 %v1967
  %2780 = vmatprep.subr.bf16.mxu0 0
  %2781 = vmatpush2.bf16.msra.mxu0 %v2072
  %2782 = vmatprep.subr.bf16.mxu0 0
  %2783 = vmatpush2.bf16.msra.mxu0 %v2065
  %2784 = vmatprep.subr.bf16.mxu0 0
  %2785 = vmatpush2.bf16.msra.mxu0 %v2058
  %2786 = vmatprep.subr.bf16.mxu0 0
  %2787 = vmatpush2.bf16.msra.mxu0 %v2051
  %2788 = vmatprep.subr.bf16.mxu0 0
  %2789 = vmatpush2.bf16.msra.mxu0 %v2044
  %2790 = vmatprep.subr.bf16.mxu0 0
  %2791 = vmatpush2.bf16.msra.mxu0 %v2037
  %2792 = vmatprep.subr.bf16.mxu0 0
  %2793 = vmatpush2.bf16.msra.mxu0 %v2030
  %2794 = vmatprep.subr.bf16.mxu0 0
  %2795 = vmatpush2.bf16.msra.mxu0 %v2023
  %2796 = vmatprep.mubr.bf16.mxu0 %v1413
  %2797 = vmatmul.mubr.bf16.gmra.mxu0 %v1412
  %v2798 = vpop.f32.mrf.mxu0
  %v2799 = vadd.f32 %v1601, %v2798
  %v2800 = vpop.f32.mrf.mxu0
  %v2801 = vpop.f32.mrf.mxu0
  %v2802 = vadd.f32 %v1601, %v2801
  %v2803 = vpop.f32.mrf.mxu0
  %2804 = vmatprep.mubr.bf16.mxu0 %v1415
  %2805 = vmatmul.mubr.bf16.gmra.mxu0 %v1414
  %v2806 = vpop.f32.mrf.mxu0
  %v2807 = vadd.f32 %v1601, %v2806
  %v2808 = vpop.f32.mrf.mxu0
  %v2809 = vpop.f32.mrf.mxu0
  %v2810 = vadd.f32 %v1601, %v2809
  %v2811 = vpop.f32.mrf.mxu0
  %2812 = vmatprep.mubr.bf16.mxu0 %v1417
  %2813 = vmatmul.mubr.bf16.gmra.mxu0 %v1416
  %v2814 = vpop.f32.mrf.mxu0
  %v2815 = vadd.f32 %v1601, %v2814
  %v2816 = vpop.f32.mrf.mxu0
  %v2817 = vpop.f32.mrf.mxu0
  %v2818 = vadd.f32 %v1601, %v2817
  %v2819 = vpop.f32.mrf.mxu0
  %2820 = vmatprep.mubr.bf16.mxu0 %v1419
  %2821 = vmatmul.mubr.bf16.gmra.mxu0 %v1418
  %v2822 = vpop.f32.mrf.mxu0
  %v2823 = vadd.f32 %v1601, %v2822
  %v2824 = vpop.f32.mrf.mxu0
  %v2825 = vpop.f32.mrf.mxu0
  %v2826 = vadd.f32 %v1601, %v2825
  %v2827 = vpop.f32.mrf.mxu0
  %2828 = vmatprep.mubr.bf16.mxu0 %v1421
  %2829 = vmatmul.mubr.bf16.gmra.mxu0 %v1420
  %v2830 = vpop.f32.mrf.mxu0
  %v2831 = vadd.f32 %v1601, %v2830
  %v2832 = vpop.f32.mrf.mxu0
  %v2833 = vpop.f32.mrf.mxu0
  %v2834 = vadd.f32 %v1601, %v2833
  %v2835 = vpop.f32.mrf.mxu0
  %2836 = vmatprep.mubr.bf16.mxu0 %v1423
  %2837 = vmatmul.mubr.bf16.gmra.mxu0 %v1422
  %v2838 = vpop.f32.mrf.mxu0
  %v2839 = vadd.f32 %v1601, %v2838
  %v2840 = vpop.f32.mrf.mxu0
  %v2841 = vpop.f32.mrf.mxu0
  %v2842 = vadd.f32 %v1601, %v2841
  %v2843 = vpop.f32.mrf.mxu0
  %2844 = vmatprep.mubr.bf16.mxu0 %v1425
  %2845 = vmatmul.mubr.bf16.gmra.mxu0 %v1424
  %v2846 = vpop.f32.mrf.mxu0
  %v2847 = vadd.f32 %v1601, %v2846
  %v2848 = vpop.f32.mrf.mxu0
  %v2849 = vpop.f32.mrf.mxu0
  %v2850 = vadd.f32 %v1601, %v2849
  %v2851 = vpop.f32.mrf.mxu0
  %2852 = vmatprep.mubr.bf16.mxu0 %v1427
  %2853 = vmatmul.mubr.bf16.gmra.mxu0 %v1426
  %v2854 = vpop.f32.mrf.mxu0
  %v2855 = vadd.f32 %v1601, %v2854
  %v2856 = vpop.f32.mrf.mxu0
  %v2857 = vpop.f32.mrf.mxu0
  %v2858 = vadd.f32 %v1601, %v2857
  %v2859 = vpop.f32.mrf.mxu0
  %2860 = vmatprep.mubr.bf16.mxu0 %v1429
  %2861 = vmatmul.mubr.bf16.gmra.mxu0 %v1428
  %v2862 = vpop.f32.mrf.mxu0
  %v2863 = vadd.f32 %v1601, %v2862
  %v2864 = vpop.f32.mrf.mxu0
  %v2865 = vpop.f32.mrf.mxu0
  %v2866 = vadd.f32 %v1601, %v2865
  %v2867 = vpop.f32.mrf.mxu0
  %2868 = vmatprep.mubr.bf16.mxu0 %v1431
  %2869 = vmatmul.mubr.bf16.gmra.mxu0 %v1430
  %v2870 = vpop.f32.mrf.mxu0
  %v2871 = vadd.f32 %v1601, %v2870
  %v2872 = vpop.f32.mrf.mxu0
  %v2873 = vpop.f32.mrf.mxu0
  %v2874 = vadd.f32 %v1601, %v2873
  %v2875 = vpop.f32.mrf.mxu0
  %2876 = vmatprep.mubr.bf16.mxu0 %v1433
  %2877 = vmatmul.mubr.bf16.gmra.mxu0 %v1432
  %v2878 = vpop.f32.mrf.mxu0
  %v2879 = vadd.f32 %v1601, %v2878
  %v2880 = vpop.f32.mrf.mxu0
  %v2881 = vpop.f32.mrf.mxu0
  %v2882 = vadd.f32 %v1601, %v2881
  %v2883 = vpop.f32.mrf.mxu0
  %2884 = vmatprep.mubr.bf16.mxu0 %v1435
  %2885 = vmatmul.mubr.bf16.gmra.mxu0 %v1434
  %v2886 = vpop.f32.mrf.mxu0
  %v2887 = vadd.f32 %v1601, %v2886
  %v2888 = vpop.f32.mrf.mxu0
  %v2889 = vpop.f32.mrf.mxu0
  %v2890 = vadd.f32 %v1601, %v2889
  %v2891 = vpop.f32.mrf.mxu0
  %2892 = vmatprep.mubr.bf16.mxu0 %v1437
  %2893 = vmatmul.mubr.bf16.gmra.mxu0 %v1436
  %v2894 = vpop.f32.mrf.mxu0
  %v2895 = vadd.f32 %v1601, %v2894
  %v2896 = vpop.f32.mrf.mxu0
  %v2897 = vpop.f32.mrf.mxu0
  %v2898 = vadd.f32 %v1601, %v2897
  %v2899 = vpop.f32.mrf.mxu0
  %2900 = vmatprep.mubr.bf16.mxu0 %v1439
  %2901 = vmatmul.mubr.bf16.gmra.mxu0 %v1438
  %v2902 = vpop.f32.mrf.mxu0
  %v2903 = vadd.f32 %v1601, %v2902
  %v2904 = vpop.f32.mrf.mxu0
  %v2905 = vpop.f32.mrf.mxu0
  %v2906 = vadd.f32 %v1601, %v2905
  %v2907 = vpop.f32.mrf.mxu0
  %2908 = vmatprep.mubr.bf16.mxu0 %v1441
  %2909 = vmatmul.mubr.bf16.gmra.mxu0 %v1440
  %v2910 = vpop.f32.mrf.mxu0
  %v2911 = vadd.f32 %v1601, %v2910
  %v2912 = vpop.f32.mrf.mxu0
  %v2913 = vpop.f32.mrf.mxu0
  %v2914 = vadd.f32 %v1601, %v2913
  %v2915 = vpop.f32.mrf.mxu0
  %2916 = vmatprep.mubr.bf16.mxu0 %v1443
  %2917 = vmatmul.mubr.bf16.gmra.mxu0 %v1442
  %v2918 = vpop.f32.mrf.mxu0
  %v2919 = vadd.f32 %v1601, %v2918
  %v2920 = vpop.f32.mrf.mxu0
  %v2921 = vpop.f32.mrf.mxu0
  %v2922 = vadd.f32 %v1601, %v2921
  %v2923 = vpop.f32.mrf.mxu0
  %2924 = vdwg.mxu0
  %v2925 = vxor.u32 %v2220, 2147483648
  %v2926 = vxor.u32 %v2222, 2147483648
  %v2927 = vxor.u32 %v2413, 2147483648
  %v2928 = vxor.u32 %v2415, 2147483648
  %v2929 = vxor.u32 %v2606, 2147483648
  %v2930 = vxor.u32 %v2608, 2147483648
  %v2931 = vxor.u32 %v2799, 2147483648
  %v2932 = vxor.u32 %v2224, 2147483648
  %v2933 = vxor.u32 %v2226, 2147483648
  %v2934 = vxor.u32 %v2417, 2147483648
  %v2935 = vxor.u32 %v2419, 2147483648
  %v2936 = vxor.u32 %v2610, 2147483648
  %v2937 = vxor.u32 %v2612, 2147483648
  %v2938 = vxor.u32 %v2802, 2147483648
  %v2939 = vxor.u32 %v2230, 2147483648
  %v2940 = vxor.u32 %v2232, 2147483648
  %v2941 = vxor.u32 %v2423, 2147483648
  %v2942 = vxor.u32 %v2425, 2147483648
  %v2943 = vxor.u32 %v2616, 2147483648
  %v2944 = vxor.u32 %v2618, 2147483648
  %v2945 = vxor.u32 %v2807, 2147483648
  %v2946 = vxor.u32 %v2234, 2147483648
  %v2947 = vxor.u32 %v2236, 2147483648
  %v2948 = vxor.u32 %v2427, 2147483648
  %v2949 = vxor.u32 %v2429, 2147483648
  %v2950 = vxor.u32 %v2620, 2147483648
  %v2951 = vxor.u32 %v2622, 2147483648
  %v2952 = vxor.u32 %v2810, 2147483648
  %v2953 = vxor.u32 %v2240, 2147483648
  %v2954 = vxor.u32 %v2242, 2147483648
  %v2955 = vxor.u32 %v2433, 2147483648
  %v2956 = vxor.u32 %v2435, 2147483648
  %v2957 = vxor.u32 %v2626, 2147483648
  %v2958 = vxor.u32 %v2628, 2147483648
  %v2959 = vxor.u32 %v2815, 2147483648
  %v2960 = vxor.u32 %v2244, 2147483648
  %v2961 = vxor.u32 %v2246, 2147483648
  %v2962 = vxor.u32 %v2437, 2147483648
  %v2963 = vxor.u32 %v2439, 2147483648
  %v2964 = vxor.u32 %v2630, 2147483648
  %v2965 = vxor.u32 %v2632, 2147483648
  %v2966 = vxor.u32 %v2818, 2147483648
  %v2967 = vxor.u32 %v2250, 2147483648
  %v2968 = vxor.u32 %v2252, 2147483648
  %v2969 = vxor.u32 %v2443, 2147483648
  %v2970 = vxor.u32 %v2445, 2147483648
  %v2971 = vxor.u32 %v2636, 2147483648
  %v2972 = vxor.u32 %v2638, 2147483648
  %v2973 = vxor.u32 %v2823, 2147483648
  %v2974 = vxor.u32 %v2254, 2147483648
  %v2975 = vxor.u32 %v2256, 2147483648
  %v2976 = vxor.u32 %v2447, 2147483648
  %v2977 = vxor.u32 %v2449, 2147483648
  %v2978 = vxor.u32 %v2640, 2147483648
  %v2979 = vxor.u32 %v2642, 2147483648
  %v2980 = vxor.u32 %v2826, 2147483648
  %v2981 = vxor.u32 %v2260, 2147483648
  %v2982 = vxor.u32 %v2262, 2147483648
  %v2983 = vxor.u32 %v2453, 2147483648
  %v2984 = vxor.u32 %v2455, 2147483648
  %v2985 = vxor.u32 %v2646, 2147483648
  %v2986 = vxor.u32 %v2648, 2147483648
  %v2987 = vxor.u32 %v2831, 2147483648
  %v2988 = vxor.u32 %v2264, 2147483648
  %v2989 = vxor.u32 %v2266, 2147483648
  %v2990 = vxor.u32 %v2457, 2147483648
  %v2991 = vxor.u32 %v2459, 2147483648
  %v2992 = vxor.u32 %v2650, 2147483648
  %v2993 = vxor.u32 %v2652, 2147483648
  %v2994 = vxor.u32 %v2834, 2147483648
  %v2995 = vxor.u32 %v2270, 2147483648
  %v2996 = vxor.u32 %v2272, 2147483648
  %v2997 = vxor.u32 %v2463, 2147483648
  %v2998 = vxor.u32 %v2465, 2147483648
  %v2999 = vxor.u32 %v2656, 2147483648
  %v3000 = vxor.u32 %v2658, 2147483648
  %v3001 = vxor.u32 %v2839, 2147483648
  %v3002 = vxor.u32 %v2274, 2147483648
  %v3003 = vxor.u32 %v2276, 2147483648
  %v3004 = vxor.u32 %v2467, 2147483648
  %v3005 = vxor.u32 %v2469, 2147483648
  %v3006 = vxor.u32 %v2660, 2147483648
  %v3007 = vxor.u32 %v2662, 2147483648
  %v3008 = vxor.u32 %v2842, 2147483648
  %v3009 = vxor.u32 %v2280, 2147483648
  %v3010 = vxor.u32 %v2282, 2147483648
  %v3011 = vxor.u32 %v2473, 2147483648
  %v3012 = vxor.u32 %v2475, 2147483648
  %v3013 = vxor.u32 %v2666, 2147483648
  %v3014 = vxor.u32 %v2668, 2147483648
  %v3015 = vxor.u32 %v2847, 2147483648
  %v3016 = vxor.u32 %v2284, 2147483648
  %v3017 = vxor.u32 %v2286, 2147483648
  %v3018 = vxor.u32 %v2477, 2147483648
  %v3019 = vxor.u32 %v2479, 2147483648
  %v3020 = vxor.u32 %v2670, 2147483648
  %v3021 = vxor.u32 %v2672, 2147483648
  %v3022 = vxor.u32 %v2850, 2147483648
  %v3023 = vxor.u32 %v2290, 2147483648
  %v3024 = vxor.u32 %v2292, 2147483648
  %v3025 = vxor.u32 %v2483, 2147483648
  %v3026 = vxor.u32 %v2485, 2147483648
  %v3027 = vxor.u32 %v2676, 2147483648
  %v3028 = vxor.u32 %v2678, 2147483648
  %v3029 = vxor.u32 %v2855, 2147483648
  %v3030 = vxor.u32 %v2294, 2147483648
  %v3031 = vxor.u32 %v2296, 2147483648
  %v3032 = vxor.u32 %v2487, 2147483648
  %v3033 = vxor.u32 %v2489, 2147483648
  %v3034 = vxor.u32 %v2680, 2147483648
  %v3035 = vxor.u32 %v2682, 2147483648
  %v3036 = vxor.u32 %v2858, 2147483648
  %v3037 = vxor.u32 %v2300, 2147483648
  %v3038 = vxor.u32 %v2302, 2147483648
  %v3039 = vxor.u32 %v2493, 2147483648
  %v3040 = vxor.u32 %v2495, 2147483648
  %v3041 = vxor.u32 %v2686, 2147483648
  %v3042 = vxor.u32 %v2688, 2147483648
  %v3043 = vxor.u32 %v2863, 2147483648
  %v3044 = vxor.u32 %v2304, 2147483648
  %v3045 = vxor.u32 %v2306, 2147483648
  %v3046 = vxor.u32 %v2497, 2147483648
  %v3047 = vxor.u32 %v2499, 2147483648
  %v3048 = vxor.u32 %v2690, 2147483648
  %v3049 = vxor.u32 %v2692, 2147483648
  %v3050 = vxor.u32 %v2866, 2147483648
  %v3051 = vxor.u32 %v2310, 2147483648
  %v3052 = vxor.u32 %v2312, 2147483648
  %v3053 = vxor.u32 %v2503, 2147483648
  %v3054 = vxor.u32 %v2505, 2147483648
  %v3055 = vxor.u32 %v2696, 2147483648
  %v3056 = vxor.u32 %v2698, 2147483648
  %v3057 = vxor.u32 %v2871, 2147483648
  %v3058 = vxor.u32 %v2314, 2147483648
  %v3059 = vxor.u32 %v2316, 2147483648
  %v3060 = vxor.u32 %v2507, 2147483648
  %v3061 = vxor.u32 %v2509, 2147483648
  %v3062 = vxor.u32 %v2700, 2147483648
  %v3063 = vxor.u32 %v2702, 2147483648
  %v3064 = vxor.u32 %v2874, 2147483648
  %v3065 = vxor.u32 %v2320, 2147483648
  %v3066 = vxor.u32 %v2322, 2147483648
  %v3067 = vxor.u32 %v2513, 2147483648
  %v3068 = vxor.u32 %v2515, 2147483648
  %v3069 = vxor.u32 %v2706, 2147483648
  %v3070 = vxor.u32 %v2708, 2147483648
  %v3071 = vxor.u32 %v2879, 2147483648
  %v3072 = vxor.u32 %v2324, 2147483648
  %v3073 = vxor.u32 %v2326, 2147483648
  %v3074 = vxor.u32 %v2517, 2147483648
  %v3075 = vxor.u32 %v2519, 2147483648
  %v3076 = vxor.u32 %v2710, 2147483648
  %v3077 = vxor.u32 %v2712, 2147483648
  %v3078 = vxor.u32 %v2882, 2147483648
  %v3079 = vxor.u32 %v2330, 2147483648
  %v3080 = vxor.u32 %v2332, 2147483648
  %v3081 = vxor.u32 %v2523, 2147483648
  %v3082 = vxor.u32 %v2525, 2147483648
  %v3083 = vxor.u32 %v2716, 2147483648
  %v3084 = vxor.u32 %v2718, 2147483648
  %v3085 = vxor.u32 %v2887, 2147483648
  %v3086 = vxor.u32 %v2334, 2147483648
  %v3087 = vxor.u32 %v2336, 2147483648
  %v3088 = vxor.u32 %v2527, 2147483648
  %v3089 = vxor.u32 %v2529, 2147483648
  %v3090 = vxor.u32 %v2720, 2147483648
  %v3091 = vxor.u32 %v2722, 2147483648
  %v3092 = vxor.u32 %v2890, 2147483648
  %v3093 = vxor.u32 %v2340, 2147483648
  %v3094 = vxor.u32 %v2342, 2147483648
  %v3095 = vxor.u32 %v2533, 2147483648
  %v3096 = vxor.u32 %v2535, 2147483648
  %v3097 = vxor.u32 %v2726, 2147483648
  %v3098 = vxor.u32 %v2728, 2147483648
  %v3099 = vxor.u32 %v2895, 2147483648
  %v3100 = vxor.u32 %v2344, 2147483648
  %v3101 = vxor.u32 %v2346, 2147483648
  %v3102 = vxor.u32 %v2537, 2147483648
  %v3103 = vxor.u32 %v2539, 2147483648
  %v3104 = vxor.u32 %v2730, 2147483648
  %v3105 = vxor.u32 %v2732, 2147483648
  %v3106 = vxor.u32 %v2898, 2147483648
  %v3107 = vxor.u32 %v2350, 2147483648
  %v3108 = vxor.u32 %v2352, 2147483648
  %v3109 = vxor.u32 %v2543, 2147483648
  %v3110 = vxor.u32 %v2545, 2147483648
  %v3111 = vxor.u32 %v2736, 2147483648
  %v3112 = vxor.u32 %v2738, 2147483648
  %v3113 = vxor.u32 %v2903, 2147483648
  %v3114 = vxor.u32 %v2354, 2147483648
  %v3115 = vxor.u32 %v2356, 2147483648
  %v3116 = vxor.u32 %v2547, 2147483648
  %v3117 = vxor.u32 %v2549, 2147483648
  %v3118 = vxor.u32 %v2740, 2147483648
  %v3119 = vxor.u32 %v2742, 2147483648
  %v3120 = vxor.u32 %v2906, 2147483648
  %v3121 = vxor.u32 %v2360, 2147483648
  %v3122 = vxor.u32 %v2362, 2147483648
  %v3123 = vxor.u32 %v2553, 2147483648
  %v3124 = vxor.u32 %v2555, 2147483648
  %v3125 = vxor.u32 %v2746, 2147483648
  %v3126 = vxor.u32 %v2748, 2147483648
  %v3127 = vxor.u32 %v2911, 2147483648
  %v3128 = vxor.u32 %v2364, 2147483648
  %v3129 = vxor.u32 %v2366, 2147483648
  %v3130 = vxor.u32 %v2557, 2147483648
  %v3131 = vxor.u32 %v2559, 2147483648
  %v3132 = vxor.u32 %v2750, 2147483648
  %v3133 = vxor.u32 %v2752, 2147483648
  %v3134 = vxor.u32 %v2914, 2147483648
  %v3135 = vxor.u32 %v2370, 2147483648
  %v3136 = vxor.u32 %v2372, 2147483648
  %v3137 = vxor.u32 %v2563, 2147483648
  %v3138 = vxor.u32 %v2565, 2147483648
  %v3139 = vxor.u32 %v2756, 2147483648
  %v3140 = vxor.u32 %v2758, 2147483648
  %v3141 = vxor.u32 %v2919, 2147483648
  %v3142 = vxor.u32 %v2374, 2147483648
  %v3143 = vxor.u32 %v2376, 2147483648
  %v3144 = vxor.u32 %v2567, 2147483648
  %v3145 = vxor.u32 %v2569, 2147483648
  %v3146 = vxor.u32 %v2760, 2147483648
  %v3147 = vxor.u32 %v2762, 2147483648
  %v3148 = vxor.u32 %v2922, 2147483648
  %v3149 = vmul.f32 %v2925, 1.442695
  %v3150 = vpow.pop %v3149
  %v3151 = vmul.f32 %v2926, 1.442695
  %v3152 = vpow.pop %v3151
  %v3153 = vmul.f32 %v2927, 1.442695
  %v3154 = vpow.pop %v3153
  %v3155 = vmul.f32 %v2928, 1.442695
  %v3156 = vpow.pop %v3155
  %v3157 = vmul.f32 %v2929, 1.442695
  %v3158 = vpow.pop %v3157
  %v3159 = vmul.f32 %v2930, 1.442695
  %v3160 = vpow.pop %v3159
  %v3161 = vmul.f32 %v2931, 1.442695
  %v3162 = vpow.pop %v3161
  %v3163 = vmul.f32 %v2932, 1.442695
  %v3164 = vpow.pop %v3163
  %v3165 = vmul.f32 %v2933, 1.442695
  %v3166 = vpow.pop %v3165
  %v3167 = vmul.f32 %v2934, 1.442695
  %v3168 = vpow.pop %v3167
  %v3169 = vmul.f32 %v2935, 1.442695
  %v3170 = vpow.pop %v3169
  %v3171 = vmul.f32 %v2936, 1.442695
  %v3172 = vpow.pop %v3171
  %v3173 = vmul.f32 %v2937, 1.442695
  %v3174 = vpow.pop %v3173
  %v3175 = vmul.f32 %v2938, 1.442695
  %v3176 = vpow.pop %v3175
  %v3177 = vmul.f32 %v2939, 1.442695
  %v3178 = vpow.pop %v3177
  %v3179 = vmul.f32 %v2940, 1.442695
  %v3180 = vpow.pop %v3179
  %v3181 = vmul.f32 %v2941, 1.442695
  %v3182 = vpow.pop %v3181
  %v3183 = vmul.f32 %v2942, 1.442695
  %v3184 = vpow.pop %v3183
  %v3185 = vmul.f32 %v2943, 1.442695
  %v3186 = vpow.pop %v3185
  %v3187 = vmul.f32 %v2944, 1.442695
  %v3188 = vpow.pop %v3187
  %v3189 = vmul.f32 %v2945, 1.442695
  %v3190 = vpow.pop %v3189
  %v3191 = vmul.f32 %v2946, 1.442695
  %v3192 = vpow.pop %v3191
  %v3193 = vmul.f32 %v2947, 1.442695
  %v3194 = vpow.pop %v3193
  %v3195 = vmul.f32 %v2948, 1.442695
  %v3196 = vpow.pop %v3195
  %v3197 = vmul.f32 %v2949, 1.442695
  %v3198 = vpow.pop %v3197
  %v3199 = vmul.f32 %v2950, 1.442695
  %v3200 = vpow.pop %v3199
  %v3201 = vmul.f32 %v2951, 1.442695
  %v3202 = vpow.pop %v3201
  %v3203 = vmul.f32 %v2952, 1.442695
  %v3204 = vpow.pop %v3203
  %v3205 = vmul.f32 %v2953, 1.442695
  %v3206 = vpow.pop %v3205
  %v3207 = vmul.f32 %v2954, 1.442695
  %v3208 = vpow.pop %v3207
  %v3209 = vmul.f32 %v2955, 1.442695
  %v3210 = vpow.pop %v3209
  %v3211 = vmul.f32 %v2956, 1.442695
  %v3212 = vpow.pop %v3211
  %v3213 = vmul.f32 %v2957, 1.442695
  %v3214 = vpow.pop %v3213
  %v3215 = vmul.f32 %v2958, 1.442695
  %v3216 = vpow.pop %v3215
  %v3217 = vmul.f32 %v2959, 1.442695
  %v3218 = vpow.pop %v3217
  %v3219 = vmul.f32 %v2960, 1.442695
  %v3220 = vpow.pop %v3219
  %v3221 = vmul.f32 %v2961, 1.442695
  %v3222 = vpow.pop %v3221
  %v3223 = vmul.f32 %v2962, 1.442695
  %v3224 = vpow.pop %v3223
  %v3225 = vmul.f32 %v2963, 1.442695
  %v3226 = vpow.pop %v3225
  %v3227 = vmul.f32 %v2964, 1.442695
  %v3228 = vpow.pop %v3227
  %v3229 = vmul.f32 %v2965, 1.442695
  %v3230 = vpow.pop %v3229
  %v3231 = vmul.f32 %v2966, 1.442695
  %v3232 = vpow.pop %v3231
  %v3233 = vmul.f32 %v2967, 1.442695
  %v3234 = vpow.pop %v3233
  %v3235 = vmul.f32 %v2968, 1.442695
  %v3236 = vpow.pop %v3235
  %v3237 = vmul.f32 %v2969, 1.442695
  %v3238 = vpow.pop %v3237
  %v3239 = vmul.f32 %v2970, 1.442695
  %v3240 = vpow.pop %v3239
  %v3241 = vmul.f32 %v2971, 1.442695
  %v3242 = vpow.pop %v3241
  %v3243 = vmul.f32 %v2972, 1.442695
  %v3244 = vpow.pop %v3243
  %v3245 = vmul.f32 %v2973, 1.442695
  %v3246 = vpow.pop %v3245
  %v3247 = vmul.f32 %v2974, 1.442695
  %v3248 = vpow.pop %v3247
  %v3249 = vmul.f32 %v2975, 1.442695
  %v3250 = vpow.pop %v3249
  %v3251 = vmul.f32 %v2976, 1.442695
  %v3252 = vpow.pop %v3251
  %v3253 = vmul.f32 %v2977, 1.442695
  %v3254 = vpow.pop %v3253
  %v3255 = vmul.f32 %v2978, 1.442695
  %v3256 = vpow.pop %v3255
  %v3257 = vmul.f32 %v2979, 1.442695
  %v3258 = vpow.pop %v3257
  %v3259 = vmul.f32 %v2980, 1.442695
  %v3260 = vpow.pop %v3259
  %v3261 = vmul.f32 %v2981, 1.442695
  %v3262 = vpow.pop %v3261
  %v3263 = vmul.f32 %v2982, 1.442695
  %v3264 = vpow.pop %v3263
  %v3265 = vmul.f32 %v2983, 1.442695
  %v3266 = vpow.pop %v3265
  %v3267 = vmul.f32 %v2984, 1.442695
  %v3268 = vpow.pop %v3267
  %v3269 = vmul.f32 %v2985, 1.442695
  %v3270 = vpow.pop %v3269
  %v3271 = vmul.f32 %v2986, 1.442695
  %v3272 = vpow.pop %v3271
  %v3273 = vmul.f32 %v2987, 1.442695
  %v3274 = vpow.pop %v3273
  %v3275 = vmul.f32 %v2988, 1.442695
  %v3276 = vpow.pop %v3275
  %v3277 = vmul.f32 %v2989, 1.442695
  %v3278 = vpow.pop %v3277
  %v3279 = vmul.f32 %v2990, 1.442695
  %v3280 = vpow.pop %v3279
  %v3281 = vmul.f32 %v2991, 1.442695
  %v3282 = vpow.pop %v3281
  %v3283 = vmul.f32 %v2992, 1.442695
  %v3284 = vpow.pop %v3283
  %v3285 = vmul.f32 %v2993, 1.442695
  %v3286 = vpow.pop %v3285
  %v3287 = vmul.f32 %v2994, 1.442695
  %v3288 = vpow.pop %v3287
  %v3289 = vmul.f32 %v2995, 1.442695
  %v3290 = vpow.pop %v3289
  %v3291 = vmul.f32 %v2996, 1.442695
  %v3292 = vpow.pop %v3291
  %v3293 = vmul.f32 %v2997, 1.442695
  %v3294 = vpow.pop %v3293
  %v3295 = vmul.f32 %v2998, 1.442695
  %v3296 = vpow.pop %v3295
  %v3297 = vmul.f32 %v2999, 1.442695
  %v3298 = vpow.pop %v3297
  %v3299 = vmul.f32 %v3000, 1.442695
  %v3300 = vpow.pop %v3299
  %v3301 = vmul.f32 %v3001, 1.442695
  %v3302 = vpow.pop %v3301
  %v3303 = vmul.f32 %v3002, 1.442695
  %v3304 = vpow.pop %v3303
  %v3305 = vmul.f32 %v3003, 1.442695
  %v3306 = vpow.pop %v3305
  %v3307 = vmul.f32 %v3004, 1.442695
  %v3308 = vpow.pop %v3307
  %v3309 = vmul.f32 %v3005, 1.442695
  %v3310 = vpow.pop %v3309
  %v3311 = vmul.f32 %v3006, 1.442695
  %v3312 = vpow.pop %v3311
  %v3313 = vmul.f32 %v3007, 1.442695
  %v3314 = vpow.pop %v3313
  %v3315 = vmul.f32 %v3008, 1.442695
  %v3316 = vpow.pop %v3315
  %v3317 = vmul.f32 %v3009, 1.442695
  %v3318 = vpow.pop %v3317
  %v3319 = vmul.f32 %v3010, 1.442695
  %v3320 = vpow.pop %v3319
  %v3321 = vmul.f32 %v3011, 1.442695
  %v3322 = vpow.pop %v3321
  %v3323 = vmul.f32 %v3012, 1.442695
  %v3324 = vpow.pop %v3323
  %v3325 = vmul.f32 %v3013, 1.442695
  %v3326 = vpow.pop %v3325
  %v3327 = vmul.f32 %v3014, 1.442695
  %v3328 = vpow.pop %v3327
  %v3329 = vmul.f32 %v3015, 1.442695
  %v3330 = vpow.pop %v3329
  %v3331 = vmul.f32 %v3016, 1.442695
  %v3332 = vpow.pop %v3331
  %v3333 = vmul.f32 %v3017, 1.442695
  %v3334 = vpow.pop %v3333
  %v3335 = vmul.f32 %v3018, 1.442695
  %v3336 = vpow.pop %v3335
  %v3337 = vmul.f32 %v3019, 1.442695
  %v3338 = vpow.pop %v3337
  %v3339 = vmul.f32 %v3020, 1.442695
  %v3340 = vpow.pop %v3339
  %v3341 = vmul.f32 %v3021, 1.442695
  %v3342 = vpow.pop %v3341
  %v3343 = vmul.f32 %v3022, 1.442695
  %v3344 = vpow.pop %v3343
  %v3345 = vmul.f32 %v3023, 1.442695
  %v3346 = vpow.pop %v3345
  %v3347 = vmul.f32 %v3024, 1.442695
  %v3348 = vpow.pop %v3347
  %v3349 = vmul.f32 %v3025, 1.442695
  %v3350 = vpow.pop %v3349
  %v3351 = vmul.f32 %v3026, 1.442695
  %v3352 = vpow.pop %v3351
  %v3353 = vmul.f32 %v3027, 1.442695
  %v3354 = vpow.pop %v3353
  %v3355 = vmul.f32 %v3028, 1.442695
  %v3356 = vpow.pop %v3355
  %v3357 = vmul.f32 %v3029, 1.442695
  %v3358 = vpow.pop %v3357
  %v3359 = vmul.f32 %v3030, 1.442695
  %v3360 = vpow.pop %v3359
  %v3361 = vmul.f32 %v3031, 1.442695
  %v3362 = vpow.pop %v3361
  %v3363 = vmul.f32 %v3032, 1.442695
  %v3364 = vpow.pop %v3363
  %v3365 = vmul.f32 %v3033, 1.442695
  %v3366 = vpow.pop %v3365
  %v3367 = vmul.f32 %v3034, 1.442695
  %v3368 = vpow.pop %v3367
  %v3369 = vmul.f32 %v3035, 1.442695
  %v3370 = vpow.pop %v3369
  %v3371 = vmul.f32 %v3036, 1.442695
  %v3372 = vpow.pop %v3371
  %v3373 = vmul.f32 %v3037, 1.442695
  %v3374 = vpow.pop %v3373
  %v3375 = vmul.f32 %v3038, 1.442695
  %v3376 = vpow.pop %v3375
  %v3377 = vmul.f32 %v3039, 1.442695
  %v3378 = vpow.pop %v3377
  %v3379 = vmul.f32 %v3040, 1.442695
  %v3380 = vpow.pop %v3379
  %v3381 = vmul.f32 %v3041, 1.442695
  %v3382 = vpow.pop %v3381
  %v3383 = vmul.f32 %v3042, 1.442695
  %v3384 = vpow.pop %v3383
  %v3385 = vmul.f32 %v3043, 1.442695
  %v3386 = vpow.pop %v3385
  %v3387 = vmul.f32 %v3044, 1.442695
  %v3388 = vpow.pop %v3387
  %v3389 = vmul.f32 %v3045, 1.442695
  %v3390 = vpow.pop %v3389
  %v3391 = vmul.f32 %v3046, 1.442695
  %v3392 = vpow.pop %v3391
  %v3393 = vmul.f32 %v3047, 1.442695
  %v3394 = vpow.pop %v3393
  %v3395 = vmul.f32 %v3048, 1.442695
  %v3396 = vpow.pop %v3395
  %v3397 = vmul.f32 %v3049, 1.442695
  %v3398 = vpow.pop %v3397
  %v3399 = vmul.f32 %v3050, 1.442695
  %v3400 = vpow.pop %v3399
  %v3401 = vmul.f32 %v3051, 1.442695
  %v3402 = vpow.pop %v3401
  %v3403 = vmul.f32 %v3052, 1.442695
  %v3404 = vpow.pop %v3403
  %v3405 = vmul.f32 %v3053, 1.442695
  %v3406 = vpow.pop %v3405
  %v3407 = vmul.f32 %v3054, 1.442695
  %v3408 = vpow.pop %v3407
  %v3409 = vmul.f32 %v3055, 1.442695
  %v3410 = vpow.pop %v3409
  %v3411 = vmul.f32 %v3056, 1.442695
  %v3412 = vpow.pop %v3411
  %v3413 = vmul.f32 %v3057, 1.442695
  %v3414 = vpow.pop %v3413
  %v3415 = vmul.f32 %v3058, 1.442695
  %v3416 = vpow.pop %v3415
  %v3417 = vmul.f32 %v3059, 1.442695
  %v3418 = vpow.pop %v3417
  %v3419 = vmul.f32 %v3060, 1.442695
  %v3420 = vpow.pop %v3419
  %v3421 = vmul.f32 %v3061, 1.442695
  %v3422 = vpow.pop %v3421
  %v3423 = vmul.f32 %v3062, 1.442695
  %v3424 = vpow.pop %v3423
  %v3425 = vmul.f32 %v3063, 1.442695
  %v3426 = vpow.pop %v3425
  %v3427 = vmul.f32 %v3064, 1.442695
  %v3428 = vpow.pop %v3427
  %v3429 = vmul.f32 %v3065, 1.442695
  %v3430 = vpow.pop %v3429
  %v3431 = vmul.f32 %v3066, 1.442695
  %v3432 = vpow.pop %v3431
  %v3433 = vmul.f32 %v3067, 1.442695
  %v3434 = vpow.pop %v3433
  %v3435 = vmul.f32 %v3068, 1.442695
  %v3436 = vpow.pop %v3435
  %v3437 = vmul.f32 %v3069, 1.442695
  %v3438 = vpow.pop %v3437
  %v3439 = vmul.f32 %v3070, 1.442695
  %v3440 = vpow.pop %v3439
  %v3441 = vmul.f32 %v3071, 1.442695
  %v3442 = vpow.pop %v3441
  %v3443 = vmul.f32 %v3072, 1.442695
  %v3444 = vpow.pop %v3443
  %v3445 = vmul.f32 %v3073, 1.442695
  %v3446 = vpow.pop %v3445
  %v3447 = vmul.f32 %v3074, 1.442695
  %v3448 = vpow.pop %v3447
  %v3449 = vmul.f32 %v3075, 1.442695
  %v3450 = vpow.pop %v3449
  %v3451 = vmul.f32 %v3076, 1.442695
  %v3452 = vpow.pop %v3451
  %v3453 = vmul.f32 %v3077, 1.442695
  %v3454 = vpow.pop %v3453
  %v3455 = vmul.f32 %v3078, 1.442695
  %v3456 = vpow.pop %v3455
  %v3457 = vmul.f32 %v3079, 1.442695
  %v3458 = vpow.pop %v3457
  %v3459 = vmul.f32 %v3080, 1.442695
  %v3460 = vpow.pop %v3459
  %v3461 = vmul.f32 %v3081, 1.442695
  %v3462 = vpow.pop %v3461
  %v3463 = vmul.f32 %v3082, 1.442695
  %v3464 = vpow.pop %v3463
  %v3465 = vmul.f32 %v3083, 1.442695
  %v3466 = vpow.pop %v3465
  %v3467 = vmul.f32 %v3084, 1.442695
  %v3468 = vpow.pop %v3467
  %v3469 = vmul.f32 %v3085, 1.442695
  %v3470 = vpow.pop %v3469
  %v3471 = vmul.f32 %v3086, 1.442695
  %v3472 = vpow.pop %v3471
  %v3473 = vmul.f32 %v3087, 1.442695
  %v3474 = vpow.pop %v3473
  %v3475 = vmul.f32 %v3088, 1.442695
  %v3476 = vpow.pop %v3475
  %v3477 = vmul.f32 %v3089, 1.442695
  %v3478 = vpow.pop %v3477
  %v3479 = vmul.f32 %v3090, 1.442695
  %v3480 = vpow.pop %v3479
  %v3481 = vmul.f32 %v3091, 1.442695
  %v3482 = vpow.pop %v3481
  %v3483 = vmul.f32 %v3092, 1.442695
  %v3484 = vpow.pop %v3483
  %v3485 = vmul.f32 %v3093, 1.442695
  %v3486 = vpow.pop %v3485
  %v3487 = vmul.f32 %v3094, 1.442695
  %v3488 = vpow.pop %v3487
  %v3489 = vmul.f32 %v3095, 1.442695
  %v3490 = vpow.pop %v3489
  %v3491 = vmul.f32 %v3096, 1.442695
  %v3492 = vpow.pop %v3491
  %v3493 = vmul.f32 %v3097, 1.442695
  %v3494 = vpow.pop %v3493
  %v3495 = vmul.f32 %v3098, 1.442695
  %v3496 = vpow.pop %v3495
  %v3497 = vmul.f32 %v3099, 1.442695
  %v3498 = vpow.pop %v3497
  %v3499 = vmul.f32 %v3100, 1.442695
  %v3500 = vpow.pop %v3499
  %v3501 = vmul.f32 %v3101, 1.442695
  %v3502 = vpow.pop %v3501
  %v3503 = vmul.f32 %v3102, 1.442695
  %v3504 = vpow.pop %v3503
  %v3505 = vmul.f32 %v3103, 1.442695
  %v3506 = vpow.pop %v3505
  %v3507 = vmul.f32 %v3104, 1.442695
  %v3508 = vpow.pop %v3507
  %v3509 = vmul.f32 %v3105, 1.442695
  %v3510 = vpow.pop %v3509
  %v3511 = vmul.f32 %v3106, 1.442695
  %v3512 = vpow.pop %v3511
  %v3513 = vmul.f32 %v3107, 1.442695
  %v3514 = vpow.pop %v3513
  %v3515 = vmul.f32 %v3108, 1.442695
  %v3516 = vpow.pop %v3515
  %v3517 = vmul.f32 %v3109, 1.442695
  %v3518 = vpow.pop %v3517
  %v3519 = vmul.f32 %v3110, 1.442695
  %v3520 = vpow.pop %v3519
  %v3521 = vmul.f32 %v3111, 1.442695
  %v3522 = vpow.pop %v3521
  %v3523 = vmul.f32 %v3112, 1.442695
  %v3524 = vpow.pop %v3523
  %v3525 = vmul.f32 %v3113, 1.442695
  %v3526 = vpow.pop %v3525
  %v3527 = vmul.f32 %v3114, 1.442695
  %v3528 = vpow.pop %v3527
  %v3529 = vmul.f32 %v3115, 1.442695
  %v3530 = vpow.pop %v3529
  %v3531 = vmul.f32 %v3116, 1.442695
  %v3532 = vpow.pop %v3531
  %v3533 = vmul.f32 %v3117, 1.442695
  %v3534 = vpow.pop %v3533
  %v3535 = vmul.f32 %v3118, 1.442695
  %v3536 = vpow.pop %v3535
  %v3537 = vmul.f32 %v3119, 1.442695
  %v3538 = vpow.pop %v3537
  %v3539 = vmul.f32 %v3120, 1.442695
  %v3540 = vpow.pop %v3539
  %v3541 = vmul.f32 %v3121, 1.442695
  %v3542 = vpow.pop %v3541
  %v3543 = vmul.f32 %v3122, 1.442695
  %v3544 = vpow.pop %v3543
  %v3545 = vmul.f32 %v3123, 1.442695
  %v3546 = vpow.pop %v3545
  %v3547 = vmul.f32 %v3124, 1.442695
  %v3548 = vpow.pop %v3547
  %v3549 = vmul.f32 %v3125, 1.442695
  %v3550 = vpow.pop %v3549
  %v3551 = vmul.f32 %v3126, 1.442695
  %v3552 = vpow.pop %v3551
  %v3553 = vmul.f32 %v3127, 1.442695
  %v3554 = vpow.pop %v3553
  %v3555 = vmul.f32 %v3128, 1.442695
  %v3556 = vpow.pop %v3555
  %v3557 = vmul.f32 %v3129, 1.442695
  %v3558 = vpow.pop %v3557
  %v3559 = vmul.f32 %v3130, 1.442695
  %v3560 = vpow.pop %v3559
  %v3561 = vmul.f32 %v3131, 1.442695
  %v3562 = vpow.pop %v3561
  %v3563 = vmul.f32 %v3132, 1.442695
  %v3564 = vpow.pop %v3563
  %v3565 = vmul.f32 %v3133, 1.442695
  %v3566 = vpow.pop %v3565
  %v3567 = vmul.f32 %v3134, 1.442695
  %v3568 = vpow.pop %v3567
  %v3569 = vmul.f32 %v3135, 1.442695
  %v3570 = vpow.pop %v3569
  %v3571 = vmul.f32 %v3136, 1.442695
  %v3572 = vpow.pop %v3571
  %v3573 = vmul.f32 %v3137, 1.442695
  %v3574 = vpow.pop %v3573
  %v3575 = vmul.f32 %v3138, 1.442695
  %v3576 = vpow.pop %v3575
  %v3577 = vmul.f32 %v3139, 1.442695
  %v3578 = vpow.pop %v3577
  %v3579 = vmul.f32 %v3140, 1.442695
  %v3580 = vpow.pop %v3579
  %v3581 = vmul.f32 %v3141, 1.442695
  %v3582 = vpow.pop %v3581
  %v3583 = vmul.f32 %v3142, 1.442695
  %v3584 = vpow.pop %v3583
  %v3585 = vmul.f32 %v3143, 1.442695
  %v3586 = vpow.pop %v3585
  %v3587 = vmul.f32 %v3144, 1.442695
  %v3588 = vpow.pop %v3587
  %v3589 = vmul.f32 %v3145, 1.442695
  %v3590 = vpow.pop %v3589
  %v3591 = vmul.f32 %v3146, 1.442695
  %v3592 = vpow.pop %v3591
  %v3593 = vmul.f32 %v3147, 1.442695
  %v3594 = vpow.pop %v3593
  %v3595 = vmul.f32 %v3148, 1.442695
  %v3596 = vpow.pop %v3595
  %v3597 = vadd.f32 %v3150, 1.0
  %v3598 = vadd.f32 %v3152, 1.0
  %v3599 = vadd.f32 %v3154, 1.0
  %v3600 = vadd.f32 %v3156, 1.0
  %v3601 = vadd.f32 %v3158, 1.0
  %v3602 = vadd.f32 %v3160, 1.0
  %v3603 = vadd.f32 %v3162, 1.0
  %v3604 = vadd.f32 %v3164, 1.0
  %v3605 = vadd.f32 %v3166, 1.0
  %v3606 = vadd.f32 %v3168, 1.0
  %v3607 = vadd.f32 %v3170, 1.0
  %v3608 = vadd.f32 %v3172, 1.0
  %v3609 = vadd.f32 %v3174, 1.0
  %v3610 = vadd.f32 %v3176, 1.0
  %v3611 = vadd.f32 %v3178, 1.0
  %v3612 = vadd.f32 %v3180, 1.0
  %v3613 = vadd.f32 %v3182, 1.0
  %v3614 = vadd.f32 %v3184, 1.0
  %v3615 = vadd.f32 %v3186, 1.0
  %v3616 = vadd.f32 %v3188, 1.0
  %v3617 = vadd.f32 %v3190, 1.0
  %v3618 = vadd.f32 %v3192, 1.0
  %v3619 = vadd.f32 %v3194, 1.0
  %v3620 = vadd.f32 %v3196, 1.0
  %v3621 = vadd.f32 %v3198, 1.0
  %v3622 = vadd.f32 %v3200, 1.0
  %v3623 = vadd.f32 %v3202, 1.0
  %v3624 = vadd.f32 %v3204, 1.0
  %v3625 = vadd.f32 %v3206, 1.0
  %v3626 = vadd.f32 %v3208, 1.0
  %v3627 = vadd.f32 %v3210, 1.0
  %v3628 = vadd.f32 %v3212, 1.0
  %v3629 = vadd.f32 %v3214, 1.0
  %v3630 = vadd.f32 %v3216, 1.0
  %v3631 = vadd.f32 %v3218, 1.0
  %v3632 = vadd.f32 %v3220, 1.0
  %v3633 = vadd.f32 %v3222, 1.0
  %v3634 = vadd.f32 %v3224, 1.0
  %v3635 = vadd.f32 %v3226, 1.0
  %v3636 = vadd.f32 %v3228, 1.0
  %v3637 = vadd.f32 %v3230, 1.0
  %v3638 = vadd.f32 %v3232, 1.0
  %v3639 = vadd.f32 %v3234, 1.0
  %v3640 = vadd.f32 %v3236, 1.0
  %v3641 = vadd.f32 %v3238, 1.0
  %v3642 = vadd.f32 %v3240, 1.0
  %v3643 = vadd.f32 %v3242, 1.0
  %v3644 = vadd.f32 %v3244, 1.0
  %v3645 = vadd.f32 %v3246, 1.0
  %v3646 = vadd.f32 %v3248, 1.0
  %v3647 = vadd.f32 %v3250, 1.0
  %v3648 = vadd.f32 %v3252, 1.0
  %v3649 = vadd.f32 %v3254, 1.0
  %v3650 = vadd.f32 %v3256, 1.0
  %v3651 = vadd.f32 %v3258, 1.0
  %v3652 = vadd.f32 %v3260, 1.0
  %v3653 = vadd.f32 %v3262, 1.0
  %v3654 = vadd.f32 %v3264, 1.0
  %v3655 = vadd.f32 %v3266, 1.0
  %v3656 = vadd.f32 %v3268, 1.0
  %v3657 = vadd.f32 %v3270, 1.0
  %v3658 = vadd.f32 %v3272, 1.0
  %v3659 = vadd.f32 %v3274, 1.0
  %v3660 = vadd.f32 %v3276, 1.0
  %v3661 = vadd.f32 %v3278, 1.0
  %v3662 = vadd.f32 %v3280, 1.0
  %v3663 = vadd.f32 %v3282, 1.0
  %v3664 = vadd.f32 %v3284, 1.0
  %v3665 = vadd.f32 %v3286, 1.0
  %v3666 = vadd.f32 %v3288, 1.0
  %v3667 = vadd.f32 %v3290, 1.0
  %v3668 = vadd.f32 %v3292, 1.0
  %v3669 = vadd.f32 %v3294, 1.0
  %v3670 = vadd.f32 %v3296, 1.0
  %v3671 = vadd.f32 %v3298, 1.0
  %v3672 = vadd.f32 %v3300, 1.0
  %v3673 = vadd.f32 %v3302, 1.0
  %v3674 = vadd.f32 %v3304, 1.0
  %v3675 = vadd.f32 %v3306, 1.0
  %v3676 = vadd.f32 %v3308, 1.0
  %v3677 = vadd.f32 %v3310, 1.0
  %v3678 = vadd.f32 %v3312, 1.0
  %v3679 = vadd.f32 %v3314, 1.0
  %v3680 = vadd.f32 %v3316, 1.0
  %v3681 = vadd.f32 %v3318, 1.0
  %v3682 = vadd.f32 %v3320, 1.0
  %v3683 = vadd.f32 %v3322, 1.0
  %v3684 = vadd.f32 %v3324, 1.0
  %v3685 = vadd.f32 %v3326, 1.0
  %v3686 = vadd.f32 %v3328, 1.0
  %v3687 = vadd.f32 %v3330, 1.0
  %v3688 = vadd.f32 %v3332, 1.0
  %v3689 = vadd.f32 %v3334, 1.0
  %v3690 = vadd.f32 %v3336, 1.0
  %v3691 = vadd.f32 %v3338, 1.0
  %v3692 = vadd.f32 %v3340, 1.0
  %v3693 = vadd.f32 %v3342, 1.0
  %v3694 = vadd.f32 %v3344, 1.0
  %v3695 = vadd.f32 %v3346, 1.0
  %v3696 = vadd.f32 %v3348, 1.0
  %v3697 = vadd.f32 %v3350, 1.0
  %v3698 = vadd.f32 %v3352, 1.0
  %v3699 = vadd.f32 %v3354, 1.0
  %v3700 = vadd.f32 %v3356, 1.0
  %v3701 = vadd.f32 %v3358, 1.0
  %v3702 = vadd.f32 %v3360, 1.0
  %v3703 = vadd.f32 %v3362, 1.0
  %v3704 = vadd.f32 %v3364, 1.0
  %v3705 = vadd.f32 %v3366, 1.0
  %v3706 = vadd.f32 %v3368, 1.0
  %v3707 = vadd.f32 %v3370, 1.0
  %v3708 = vadd.f32 %v3372, 1.0
  %v3709 = vadd.f32 %v3374, 1.0
  %v3710 = vadd.f32 %v3376, 1.0
  %v3711 = vadd.f32 %v3378, 1.0
  %v3712 = vadd.f32 %v3380, 1.0
  %v3713 = vadd.f32 %v3382, 1.0
  %v3714 = vadd.f32 %v3384, 1.0
  %v3715 = vadd.f32 %v3386, 1.0
  %v3716 = vadd.f32 %v3388, 1.0
  %v3717 = vadd.f32 %v3390, 1.0
  %v3718 = vadd.f32 %v3392, 1.0
  %v3719 = vadd.f32 %v3394, 1.0
  %v3720 = vadd.f32 %v3396, 1.0
  %v3721 = vadd.f32 %v3398, 1.0
  %v3722 = vadd.f32 %v3400, 1.0
  %v3723 = vadd.f32 %v3402, 1.0
  %v3724 = vadd.f32 %v3404, 1.0
  %v3725 = vadd.f32 %v3406, 1.0
  %v3726 = vadd.f32 %v3408, 1.0
  %v3727 = vadd.f32 %v3410, 1.0
  %v3728 = vadd.f32 %v3412, 1.0
  %v3729 = vadd.f32 %v3414, 1.0
  %v3730 = vadd.f32 %v3416, 1.0
  %v3731 = vadd.f32 %v3418, 1.0
  %v3732 = vadd.f32 %v3420, 1.0
  %v3733 = vadd.f32 %v3422, 1.0
  %v3734 = vadd.f32 %v3424, 1.0
  %v3735 = vadd.f32 %v3426, 1.0
  %v3736 = vadd.f32 %v3428, 1.0
  %v3737 = vadd.f32 %v3430, 1.0
  %v3738 = vadd.f32 %v3432, 1.0
  %v3739 = vadd.f32 %v3434, 1.0
  %v3740 = vadd.f32 %v3436, 1.0
  %v3741 = vadd.f32 %v3438, 1.0
  %v3742 = vadd.f32 %v3440, 1.0
  %v3743 = vadd.f32 %v3442, 1.0
  %v3744 = vadd.f32 %v3444, 1.0
  %v3745 = vadd.f32 %v3446, 1.0
  %v3746 = vadd.f32 %v3448, 1.0
  %v3747 = vadd.f32 %v3450, 1.0
  %v3748 = vadd.f32 %v3452, 1.0
  %v3749 = vadd.f32 %v3454, 1.0
  %v3750 = vadd.f32 %v3456, 1.0
  %v3751 = vadd.f32 %v3458, 1.0
  %v3752 = vadd.f32 %v3460, 1.0
  %v3753 = vadd.f32 %v3462, 1.0
  %v3754 = vadd.f32 %v3464, 1.0
  %v3755 = vadd.f32 %v3466, 1.0
  %v3756 = vadd.f32 %v3468, 1.0
  %v3757 = vadd.f32 %v3470, 1.0
  %v3758 = vadd.f32 %v3472, 1.0
  %v3759 = vadd.f32 %v3474, 1.0
  %v3760 = vadd.f32 %v3476, 1.0
  %v3761 = vadd.f32 %v3478, 1.0
  %v3762 = vadd.f32 %v3480, 1.0
  %v3763 = vadd.f32 %v3482, 1.0
  %v3764 = vadd.f32 %v3484, 1.0
  %v3765 = vadd.f32 %v3486, 1.0
  %v3766 = vadd.f32 %v3488, 1.0
  %v3767 = vadd.f32 %v3490, 1.0
  %v3768 = vadd.f32 %v3492, 1.0
  %v3769 = vadd.f32 %v3494, 1.0
  %v3770 = vadd.f32 %v3496, 1.0
  %v3771 = vadd.f32 %v3498, 1.0
  %v3772 = vadd.f32 %v3500, 1.0
  %v3773 = vadd.f32 %v3502, 1.0
  %v3774 = vadd.f32 %v3504, 1.0
  %v3775 = vadd.f32 %v3506, 1.0
  %v3776 = vadd.f32 %v3508, 1.0
  %v3777 = vadd.f32 %v3510, 1.0
  %v3778 = vadd.f32 %v3512, 1.0
  %v3779 = vadd.f32 %v3514, 1.0
  %v3780 = vadd.f32 %v3516, 1.0
  %v3781 = vadd.f32 %v3518, 1.0
  %v3782 = vadd.f32 %v3520, 1.0
  %v3783 = vadd.f32 %v3522, 1.0
  %v3784 = vadd.f32 %v3524, 1.0
  %v3785 = vadd.f32 %v3526, 1.0
  %v3786 = vadd.f32 %v3528, 1.0
  %v3787 = vadd.f32 %v3530, 1.0
  %v3788 = vadd.f32 %v3532, 1.0
  %v3789 = vadd.f32 %v3534, 1.0
  %v3790 = vadd.f32 %v3536, 1.0
  %v3791 = vadd.f32 %v3538, 1.0
  %v3792 = vadd.f32 %v3540, 1.0
  %v3793 = vadd.f32 %v3542, 1.0
  %v3794 = vadd.f32 %v3544, 1.0
  %v3795 = vadd.f32 %v3546, 1.0
  %v3796 = vadd.f32 %v3548, 1.0
  %v3797 = vadd.f32 %v3550, 1.0
  %v3798 = vadd.f32 %v3552, 1.0
  %v3799 = vadd.f32 %v3554, 1.0
  %v3800 = vadd.f32 %v3556, 1.0
  %v3801 = vadd.f32 %v3558, 1.0
  %v3802 = vadd.f32 %v3560, 1.0
  %v3803 = vadd.f32 %v3562, 1.0
  %v3804 = vadd.f32 %v3564, 1.0
  %v3805 = vadd.f32 %v3566, 1.0
  %v3806 = vadd.f32 %v3568, 1.0
  %v3807 = vadd.f32 %v3570, 1.0
  %v3808 = vadd.f32 %v3572, 1.0
  %v3809 = vadd.f32 %v3574, 1.0
  %v3810 = vadd.f32 %v3576, 1.0
  %v3811 = vadd.f32 %v3578, 1.0
  %v3812 = vadd.f32 %v3580, 1.0
  %v3813 = vadd.f32 %v3582, 1.0
  %v3814 = vadd.f32 %v3584, 1.0
  %v3815 = vadd.f32 %v3586, 1.0
  %v3816 = vadd.f32 %v3588, 1.0
  %v3817 = vadd.f32 %v3590, 1.0
  %v3818 = vadd.f32 %v3592, 1.0
  %v3819 = vadd.f32 %v3594, 1.0
  %v3820 = vadd.f32 %v3596, 1.0
  %v3821 = vrcp.pop %v3597
  %v3822 = vmul.f32 1.0, %v3821
  %v3823 = vrcp.pop %v3598
  %v3824 = vmul.f32 1.0, %v3823
  %v3825 = vrcp.pop %v3599
  %v3826 = vmul.f32 1.0, %v3825
  %v3827 = vrcp.pop %v3600
  %v3828 = vmul.f32 1.0, %v3827
  %v3829 = vrcp.pop %v3601
  %v3830 = vmul.f32 1.0, %v3829
  %v3831 = vrcp.pop %v3602
  %v3832 = vmul.f32 1.0, %v3831
  %v3833 = vrcp.pop %v3603
  %v3834 = vmul.f32 1.0, %v3833
  %v3835 = vrcp.pop %v3604
  %v3836 = vmul.f32 1.0, %v3835
  %v3837 = vrcp.pop %v3605
  %v3838 = vmul.f32 1.0, %v3837
  %v3839 = vrcp.pop %v3606
  %v3840 = vmul.f32 1.0, %v3839
  %v3841 = vrcp.pop %v3607
  %v3842 = vmul.f32 1.0, %v3841
  %v3843 = vrcp.pop %v3608
  %v3844 = vmul.f32 1.0, %v3843
  %v3845 = vrcp.pop %v3609
  %v3846 = vmul.f32 1.0, %v3845
  %v3847 = vrcp.pop %v3610
  %v3848 = vmul.f32 1.0, %v3847
  %v3849 = vrcp.pop %v3611
  %v3850 = vmul.f32 1.0, %v3849
  %v3851 = vrcp.pop %v3612
  %v3852 = vmul.f32 1.0, %v3851
  %v3853 = vrcp.pop %v3613
  %v3854 = vmul.f32 1.0, %v3853
  %v3855 = vrcp.pop %v3614
  %v3856 = vmul.f32 1.0, %v3855
  %v3857 = vrcp.pop %v3615
  %v3858 = vmul.f32 1.0, %v3857
  %v3859 = vrcp.pop %v3616
  %v3860 = vmul.f32 1.0, %v3859
  %v3861 = vrcp.pop %v3617
  %v3862 = vmul.f32 1.0, %v3861
  %v3863 = vrcp.pop %v3618
  %v3864 = vmul.f32 1.0, %v3863
  %v3865 = vrcp.pop %v3619
  %v3866 = vmul.f32 1.0, %v3865
  %v3867 = vrcp.pop %v3620
  %v3868 = vmul.f32 1.0, %v3867
  %v3869 = vrcp.pop %v3621
  %v3870 = vmul.f32 1.0, %v3869
  %v3871 = vrcp.pop %v3622
  %v3872 = vmul.f32 1.0, %v3871
  %v3873 = vrcp.pop %v3623
  %v3874 = vmul.f32 1.0, %v3873
  %v3875 = vrcp.pop %v3624
  %v3876 = vmul.f32 1.0, %v3875
  %v3877 = vrcp.pop %v3625
  %v3878 = vmul.f32 1.0, %v3877
  %v3879 = vrcp.pop %v3626
  %v3880 = vmul.f32 1.0, %v3879
  %v3881 = vrcp.pop %v3627
  %v3882 = vmul.f32 1.0, %v3881
  %v3883 = vrcp.pop %v3628
  %v3884 = vmul.f32 1.0, %v3883
  %v3885 = vrcp.pop %v3629
  %v3886 = vmul.f32 1.0, %v3885
  %v3887 = vrcp.pop %v3630
  %v3888 = vmul.f32 1.0, %v3887
  %v3889 = vrcp.pop %v3631
  %v3890 = vmul.f32 1.0, %v3889
  %v3891 = vrcp.pop %v3632
  %v3892 = vmul.f32 1.0, %v3891
  %v3893 = vrcp.pop %v3633
  %v3894 = vmul.f32 1.0, %v3893
  %v3895 = vrcp.pop %v3634
  %v3896 = vmul.f32 1.0, %v3895
  %v3897 = vrcp.pop %v3635
  %v3898 = vmul.f32 1.0, %v3897
  %v3899 = vrcp.pop %v3636
  %v3900 = vmul.f32 1.0, %v3899
  %v3901 = vrcp.pop %v3637
  %v3902 = vmul.f32 1.0, %v3901
  %v3903 = vrcp.pop %v3638
  %v3904 = vmul.f32 1.0, %v3903
  %v3905 = vrcp.pop %v3639
  %v3906 = vmul.f32 1.0, %v3905
  %v3907 = vrcp.pop %v3640
  %v3908 = vmul.f32 1.0, %v3907
  %v3909 = vrcp.pop %v3641
  %v3910 = vmul.f32 1.0, %v3909
  %v3911 = vrcp.pop %v3642
  %v3912 = vmul.f32 1.0, %v3911
  %v3913 = vrcp.pop %v3643
  %v3914 = vmul.f32 1.0, %v3913
  %v3915 = vrcp.pop %v3644
  %v3916 = vmul.f32 1.0, %v3915
  %v3917 = vrcp.pop %v3645
  %v3918 = vmul.f32 1.0, %v3917
  %v3919 = vrcp.pop %v3646
  %v3920 = vmul.f32 1.0, %v3919
  %v3921 = vrcp.pop %v3647
  %v3922 = vmul.f32 1.0, %v3921
  %v3923 = vrcp.pop %v3648
  %v3924 = vmul.f32 1.0, %v3923
  %v3925 = vrcp.pop %v3649
  %v3926 = vmul.f32 1.0, %v3925
  %v3927 = vrcp.pop %v3650
  %v3928 = vmul.f32 1.0, %v3927
  %v3929 = vrcp.pop %v3651
  %v3930 = vmul.f32 1.0, %v3929
  %v3931 = vrcp.pop %v3652
  %v3932 = vmul.f32 1.0, %v3931
  %v3933 = vrcp.pop %v3653
  %v3934 = vmul.f32 1.0, %v3933
  %v3935 = vrcp.pop %v3654
  %v3936 = vmul.f32 1.0, %v3935
  %v3937 = vrcp.pop %v3655
  %v3938 = vmul.f32 1.0, %v3937
  %v3939 = vrcp.pop %v3656
  %v3940 = vmul.f32 1.0, %v3939
  %v3941 = vrcp.pop %v3657
  %v3942 = vmul.f32 1.0, %v3941
  %v3943 = vrcp.pop %v3658
  %v3944 = vmul.f32 1.0, %v3943
  %v3945 = vrcp.pop %v3659
  %v3946 = vmul.f32 1.0, %v3945
  %v3947 = vrcp.pop %v3660
  %v3948 = vmul.f32 1.0, %v3947
  %v3949 = vrcp.pop %v3661
  %v3950 = vmul.f32 1.0, %v3949
  %v3951 = vrcp.pop %v3662
  %v3952 = vmul.f32 1.0, %v3951
  %v3953 = vrcp.pop %v3663
  %v3954 = vmul.f32 1.0, %v3953
  %v3955 = vrcp.pop %v3664
  %v3956 = vmul.f32 1.0, %v3955
  %v3957 = vrcp.pop %v3665
  %v3958 = vmul.f32 1.0, %v3957
  %v3959 = vrcp.pop %v3666
  %v3960 = vmul.f32 1.0, %v3959
  %v3961 = vrcp.pop %v3667
  %v3962 = vmul.f32 1.0, %v3961
  %v3963 = vrcp.pop %v3668
  %v3964 = vmul.f32 1.0, %v3963
  %v3965 = vrcp.pop %v3669
  %v3966 = vmul.f32 1.0, %v3965
  %v3967 = vrcp.pop %v3670
  %v3968 = vmul.f32 1.0, %v3967
  %v3969 = vrcp.pop %v3671
  %v3970 = vmul.f32 1.0, %v3969
  %v3971 = vrcp.pop %v3672
  %v3972 = vmul.f32 1.0, %v3971
  %v3973 = vrcp.pop %v3673
  %v3974 = vmul.f32 1.0, %v3973
  %v3975 = vrcp.pop %v3674
  %v3976 = vmul.f32 1.0, %v3975
  %v3977 = vrcp.pop %v3675
  %v3978 = vmul.f32 1.0, %v3977
  %v3979 = vrcp.pop %v3676
  %v3980 = vmul.f32 1.0, %v3979
  %v3981 = vrcp.pop %v3677
  %v3982 = vmul.f32 1.0, %v3981
  %v3983 = vrcp.pop %v3678
  %v3984 = vmul.f32 1.0, %v3983
  %v3985 = vrcp.pop %v3679
  %v3986 = vmul.f32 1.0, %v3985
  %v3987 = vrcp.pop %v3680
  %v3988 = vmul.f32 1.0, %v3987
  %v3989 = vrcp.pop %v3681
  %v3990 = vmul.f32 1.0, %v3989
  %v3991 = vrcp.pop %v3682
  %v3992 = vmul.f32 1.0, %v3991
  %v3993 = vrcp.pop %v3683
  %v3994 = vmul.f32 1.0, %v3993
  %v3995 = vrcp.pop %v3684
  %v3996 = vmul.f32 1.0, %v3995
  %v3997 = vrcp.pop %v3685
  %v3998 = vmul.f32 1.0, %v3997
  %v3999 = vrcp.pop %v3686
  %v4000 = vmul.f32 1.0, %v3999
  %v4001 = vrcp.pop %v3687
  %v4002 = vmul.f32 1.0, %v4001
  %v4003 = vrcp.pop %v3688
  %v4004 = vmul.f32 1.0, %v4003
  %v4005 = vrcp.pop %v3689
  %v4006 = vmul.f32 1.0, %v4005
  %v4007 = vrcp.pop %v3690
  %v4008 = vmul.f32 1.0, %v4007
  %v4009 = vrcp.pop %v3691
  %v4010 = vmul.f32 1.0, %v4009
  %v4011 = vrcp.pop %v3692
  %v4012 = vmul.f32 1.0, %v4011
  %v4013 = vrcp.pop %v3693
  %v4014 = vmul.f32 1.0, %v4013
  %v4015 = vrcp.pop %v3694
  %v4016 = vmul.f32 1.0, %v4015
  %v4017 = vrcp.pop %v3695
  %v4018 = vmul.f32 1.0, %v4017
  %v4019 = vrcp.pop %v3696
  %v4020 = vmul.f32 1.0, %v4019
  %v4021 = vrcp.pop %v3697
  %v4022 = vmul.f32 1.0, %v4021
  %v4023 = vrcp.pop %v3698
  %v4024 = vmul.f32 1.0, %v4023
  %v4025 = vrcp.pop %v3699
  %v4026 = vmul.f32 1.0, %v4025
  %v4027 = vrcp.pop %v3700
  %v4028 = vmul.f32 1.0, %v4027
  %v4029 = vrcp.pop %v3701
  %v4030 = vmul.f32 1.0, %v4029
  %v4031 = vrcp.pop %v3702
  %v4032 = vmul.f32 1.0, %v4031
  %v4033 = vrcp.pop %v3703
  %v4034 = vmul.f32 1.0, %v4033
  %v4035 = vrcp.pop %v3704
  %v4036 = vmul.f32 1.0, %v4035
  %v4037 = vrcp.pop %v3705
  %v4038 = vmul.f32 1.0, %v4037
  %v4039 = vrcp.pop %v3706
  %v4040 = vmul.f32 1.0, %v4039
  %v4041 = vrcp.pop %v3707
  %v4042 = vmul.f32 1.0, %v4041
  %v4043 = vrcp.pop %v3708
  %v4044 = vmul.f32 1.0, %v4043
  %v4045 = vrcp.pop %v3709
  %v4046 = vmul.f32 1.0, %v4045
  %v4047 = vrcp.pop %v3710
  %v4048 = vmul.f32 1.0, %v4047
  %v4049 = vrcp.pop %v3711
  %v4050 = vmul.f32 1.0, %v4049
  %v4051 = vrcp.pop %v3712
  %v4052 = vmul.f32 1.0, %v4051
  %v4053 = vrcp.pop %v3713
  %v4054 = vmul.f32 1.0, %v4053
  %v4055 = vrcp.pop %v3714
  %v4056 = vmul.f32 1.0, %v4055
  %v4057 = vrcp.pop %v3715
  %v4058 = vmul.f32 1.0, %v4057
  %v4059 = vrcp.pop %v3716
  %v4060 = vmul.f32 1.0, %v4059
  %v4061 = vrcp.pop %v3717
  %v4062 = vmul.f32 1.0, %v4061
  %v4063 = vrcp.pop %v3718
  %v4064 = vmul.f32 1.0, %v4063
  %v4065 = vrcp.pop %v3719
  %v4066 = vmul.f32 1.0, %v4065
  %v4067 = vrcp.pop %v3720
  %v4068 = vmul.f32 1.0, %v4067
  %v4069 = vrcp.pop %v3721
  %v4070 = vmul.f32 1.0, %v4069
  %v4071 = vrcp.pop %v3722
  %v4072 = vmul.f32 1.0, %v4071
  %v4073 = vrcp.pop %v3723
  %v4074 = vmul.f32 1.0, %v4073
  %v4075 = vrcp.pop %v3724
  %v4076 = vmul.f32 1.0, %v4075
  %v4077 = vrcp.pop %v3725
  %v4078 = vmul.f32 1.0, %v4077
  %v4079 = vrcp.pop %v3726
  %v4080 = vmul.f32 1.0, %v4079
  %v4081 = vrcp.pop %v3727
  %v4082 = vmul.f32 1.0, %v4081
  %v4083 = vrcp.pop %v3728
  %v4084 = vmul.f32 1.0, %v4083
  %v4085 = vrcp.pop %v3729
  %v4086 = vmul.f32 1.0, %v4085
  %v4087 = vrcp.pop %v3730
  %v4088 = vmul.f32 1.0, %v4087
  %v4089 = vrcp.pop %v3731
  %v4090 = vmul.f32 1.0, %v4089
  %v4091 = vrcp.pop %v3732
  %v4092 = vmul.f32 1.0, %v4091
  %v4093 = vrcp.pop %v3733
  %v4094 = vmul.f32 1.0, %v4093
  %v4095 = vrcp.pop %v3734
  %v4096 = vmul.f32 1.0, %v4095
  %v4097 = vrcp.pop %v3735
  %v4098 = vmul.f32 1.0, %v4097
  %v4099 = vrcp.pop %v3736
  %v4100 = vmul.f32 1.0, %v4099
  %v4101 = vrcp.pop %v3737
  %v4102 = vmul.f32 1.0, %v4101
  %v4103 = vrcp.pop %v3738
  %v4104 = vmul.f32 1.0, %v4103
  %v4105 = vrcp.pop %v3739
  %v4106 = vmul.f32 1.0, %v4105
  %v4107 = vrcp.pop %v3740
  %v4108 = vmul.f32 1.0, %v4107
  %v4109 = vrcp.pop %v3741
  %v4110 = vmul.f32 1.0, %v4109
  %v4111 = vrcp.pop %v3742
  %v4112 = vmul.f32 1.0, %v4111
  %v4113 = vrcp.pop %v3743
  %v4114 = vmul.f32 1.0, %v4113
  %v4115 = vrcp.pop %v3744
  %v4116 = vmul.f32 1.0, %v4115
  %v4117 = vrcp.pop %v3745
  %v4118 = vmul.f32 1.0, %v4117
  %v4119 = vrcp.pop %v3746
  %v4120 = vmul.f32 1.0, %v4119
  %v4121 = vrcp.pop %v3747
  %v4122 = vmul.f32 1.0, %v4121
  %v4123 = vrcp.pop %v3748
  %v4124 = vmul.f32 1.0, %v4123
  %v4125 = vrcp.pop %v3749
  %v4126 = vmul.f32 1.0, %v4125
  %v4127 = vrcp.pop %v3750
  %v4128 = vmul.f32 1.0, %v4127
  %v4129 = vrcp.pop %v3751
  %v4130 = vmul.f32 1.0, %v4129
  %v4131 = vrcp.pop %v3752
  %v4132 = vmul.f32 1.0, %v4131
  %v4133 = vrcp.pop %v3753
  %v4134 = vmul.f32 1.0, %v4133
  %v4135 = vrcp.pop %v3754
  %v4136 = vmul.f32 1.0, %v4135
  %v4137 = vrcp.pop %v3755
  %v4138 = vmul.f32 1.0, %v4137
  %v4139 = vrcp.pop %v3756
  %v4140 = vmul.f32 1.0, %v4139
  %v4141 = vrcp.pop %v3757
  %v4142 = vmul.f32 1.0, %v4141
  %v4143 = vrcp.pop %v3758
  %v4144 = vmul.f32 1.0, %v4143
  %v4145 = vrcp.pop %v3759
  %v4146 = vmul.f32 1.0, %v4145
  %v4147 = vrcp.pop %v3760
  %v4148 = vmul.f32 1.0, %v4147
  %v4149 = vrcp.pop %v3761
  %v4150 = vmul.f32 1.0, %v4149
  %v4151 = vrcp.pop %v3762
  %v4152 = vmul.f32 1.0, %v4151
  %v4153 = vrcp.pop %v3763
  %v4154 = vmul.f32 1.0, %v4153
  %v4155 = vrcp.pop %v3764
  %v4156 = vmul.f32 1.0, %v4155
  %v4157 = vrcp.pop %v3765
  %v4158 = vmul.f32 1.0, %v4157
  %v4159 = vrcp.pop %v3766
  %v4160 = vmul.f32 1.0, %v4159
  %v4161 = vrcp.pop %v3767
  %v4162 = vmul.f32 1.0, %v4161
  %v4163 = vrcp.pop %v3768
  %v4164 = vmul.f32 1.0, %v4163
  %v4165 = vrcp.pop %v3769
  %v4166 = vmul.f32 1.0, %v4165
  %v4167 = vrcp.pop %v3770
  %v4168 = vmul.f32 1.0, %v4167
  %v4169 = vrcp.pop %v3771
  %v4170 = vmul.f32 1.0, %v4169
  %v4171 = vrcp.pop %v3772
  %v4172 = vmul.f32 1.0, %v4171
  %v4173 = vrcp.pop %v3773
  %v4174 = vmul.f32 1.0, %v4173
  %v4175 = vrcp.pop %v3774
  %v4176 = vmul.f32 1.0, %v4175
  %v4177 = vrcp.pop %v3775
  %v4178 = vmul.f32 1.0, %v4177
  %v4179 = vrcp.pop %v3776
  %v4180 = vmul.f32 1.0, %v4179
  %v4181 = vrcp.pop %v3777
  %v4182 = vmul.f32 1.0, %v4181
  %v4183 = vrcp.pop %v3778
  %v4184 = vmul.f32 1.0, %v4183
  %v4185 = vrcp.pop %v3779
  %v4186 = vmul.f32 1.0, %v4185
  %v4187 = vrcp.pop %v3780
  %v4188 = vmul.f32 1.0, %v4187
  %v4189 = vrcp.pop %v3781
  %v4190 = vmul.f32 1.0, %v4189
  %v4191 = vrcp.pop %v3782
  %v4192 = vmul.f32 1.0, %v4191
  %v4193 = vrcp.pop %v3783
  %v4194 = vmul.f32 1.0, %v4193
  %v4195 = vrcp.pop %v3784
  %v4196 = vmul.f32 1.0, %v4195
  %v4197 = vrcp.pop %v3785
  %v4198 = vmul.f32 1.0, %v4197
  %v4199 = vrcp.pop %v3786
  %v4200 = vmul.f32 1.0, %v4199
  %v4201 = vrcp.pop %v3787
  %v4202 = vmul.f32 1.0, %v4201
  %v4203 = vrcp.pop %v3788
  %v4204 = vmul.f32 1.0, %v4203
  %v4205 = vrcp.pop %v3789
  %v4206 = vmul.f32 1.0, %v4205
  %v4207 = vrcp.pop %v3790
  %v4208 = vmul.f32 1.0, %v4207
  %v4209 = vrcp.pop %v3791
  %v4210 = vmul.f32 1.0, %v4209
  %v4211 = vrcp.pop %v3792
  %v4212 = vmul.f32 1.0, %v4211
  %v4213 = vrcp.pop %v3793
  %v4214 = vmul.f32 1.0, %v4213
  %v4215 = vrcp.pop %v3794
  %v4216 = vmul.f32 1.0, %v4215
  %v4217 = vrcp.pop %v3795
  %v4218 = vmul.f32 1.0, %v4217
  %v4219 = vrcp.pop %v3796
  %v4220 = vmul.f32 1.0, %v4219
  %v4221 = vrcp.pop %v3797
  %v4222 = vmul.f32 1.0, %v4221
  %v4223 = vrcp.pop %v3798
  %v4224 = vmul.f32 1.0, %v4223
  %v4225 = vrcp.pop %v3799
  %v4226 = vmul.f32 1.0, %v4225
  %v4227 = vrcp.pop %v3800
  %v4228 = vmul.f32 1.0, %v4227
  %v4229 = vrcp.pop %v3801
  %v4230 = vmul.f32 1.0, %v4229
  %v4231 = vrcp.pop %v3802
  %v4232 = vmul.f32 1.0, %v4231
  %v4233 = vrcp.pop %v3803
  %v4234 = vmul.f32 1.0, %v4233
  %v4235 = vrcp.pop %v3804
  %v4236 = vmul.f32 1.0, %v4235
  %v4237 = vrcp.pop %v3805
  %v4238 = vmul.f32 1.0, %v4237
  %v4239 = vrcp.pop %v3806
  %v4240 = vmul.f32 1.0, %v4239
  %v4241 = vrcp.pop %v3807
  %v4242 = vmul.f32 1.0, %v4241
  %v4243 = vrcp.pop %v3808
  %v4244 = vmul.f32 1.0, %v4243
  %v4245 = vrcp.pop %v3809
  %v4246 = vmul.f32 1.0, %v4245
  %v4247 = vrcp.pop %v3810
  %v4248 = vmul.f32 1.0, %v4247
  %v4249 = vrcp.pop %v3811
  %v4250 = vmul.f32 1.0, %v4249
  %v4251 = vrcp.pop %v3812
  %v4252 = vmul.f32 1.0, %v4251
  %v4253 = vrcp.pop %v3813
  %v4254 = vmul.f32 1.0, %v4253
  %v4255 = vrcp.pop %v3814
  %v4256 = vmul.f32 1.0, %v4255
  %v4257 = vrcp.pop %v3815
  %v4258 = vmul.f32 1.0, %v4257
  %v4259 = vrcp.pop %v3816
  %v4260 = vmul.f32 1.0, %v4259
  %v4261 = vrcp.pop %v3817
  %v4262 = vmul.f32 1.0, %v4261
  %v4263 = vrcp.pop %v3818
  %v4264 = vmul.f32 1.0, %v4263
  %v4265 = vrcp.pop %v3819
  %v4266 = vmul.f32 1.0, %v4265
  %v4267 = vrcp.pop %v3820
  %v4268 = vmul.f32 1.0, %v4267
  %4269 = vst [vmem:[%s9] sm:$0xff] %v3822
  %4270 = vst [vmem:[%s9 + $0x8] sm:$0xff] %v3824
  %4271 = vst [vmem:[%s9 + $0x10] sm:$0xff] %v3826
  %4272 = vst [vmem:[%s9 + $0x18] sm:$0xff] %v3828
  %4273 = vst [vmem:[%s9 + $0x20] sm:$0xff] %v3830
  %4274 = vst [vmem:[%s9 + $0x28] sm:$0xff] %v3832
  %vm4275 = vcmask 130048
  %4276 = vst.msk [vmem:[%s9 + $0x30] sm:$0xff] %vm4275, %v3834
  %4277 = vst [vmem:[%s9 + $0x38] sm:$0xff] %v3836
  %4278 = vst [vmem:[%s9 + $0x40] sm:$0xff] %v3838
  %4279 = vst [vmem:[%s9 + $0x48] sm:$0xff] %v3840
  %4280 = vst [vmem:[%s9 + $0x50] sm:$0xff] %v3842
  %4281 = vst [vmem:[%s9 + $0x58] sm:$0xff] %v3844
  %4282 = vst [vmem:[%s9 + $0x60] sm:$0xff] %v3846
  %4283 = vst.msk [vmem:[%s9 + $0x68] sm:$0xff] %vm4275, %v3848
  %4284 = vst [vmem:[%s9 + $0x70] sm:$0xff] %v3850
  %4285 = vst [vmem:[%s9 + $0x78] sm:$0xff] %v3852
  %4286 = vst [vmem:[%s9 + $0x80] sm:$0xff] %v3854
  %4287 = vst [vmem:[%s9 + $0x88] sm:$0xff] %v3856
  %4288 = vst [vmem:[%s9 + $0x90] sm:$0xff] %v3858
  %4289 = vst [vmem:[%s9 + $0x98] sm:$0xff] %v3860
  %4290 = vst.msk [vmem:[%s9 + $0xa0] sm:$0xff] %vm4275, %v3862
  %4291 = vst [vmem:[%s9 + $0xa8] sm:$0xff] %v3864
  %4292 = vst [vmem:[%s9 + $0xb0] sm:$0xff] %v3866
  %4293 = vst [vmem:[%s9 + $0xb8] sm:$0xff] %v3868
  %4294 = vst [vmem:[%s9 + $0xc0] sm:$0xff] %v3870
  %4295 = vst [vmem:[%s9 + $0xc8] sm:$0xff] %v3872
  %4296 = vst [vmem:[%s9 + $0xd0] sm:$0xff] %v3874
  %4297 = vst.msk [vmem:[%s9 + $0xd8] sm:$0xff] %vm4275, %v3876
  %4298 = vst [vmem:[%s9 + $0xe0] sm:$0xff] %v3878
  %4299 = vst [vmem:[%s9 + $0xe8] sm:$0xff] %v3880
  %4300 = vst [vmem:[%s9 + $0xf0] sm:$0xff] %v3882
  %4301 = vst [vmem:[%s9 + $0xf8] sm:$0xff] %v3884
  %4302 = vst [vmem:[%s9 + $0x100] sm:$0xff] %v3886
  %4303 = vst [vmem:[%s9 + $0x108] sm:$0xff] %v3888
  %4304 = vst.msk [vmem:[%s9 + $0x110] sm:$0xff] %vm4275, %v3890
  %4305 = vst [vmem:[%s9 + $0x118] sm:$0xff] %v3892
  %4306 = vst [vmem:[%s9 + $0x120] sm:$0xff] %v3894
  %4307 = vst [vmem:[%s9 + $0x128] sm:$0xff] %v3896
  %4308 = vst [vmem:[%s9 + $0x130] sm:$0xff] %v3898
  %4309 = vst [vmem:[%s9 + $0x138] sm:$0xff] %v3900
  %4310 = vst [vmem:[%s9 + $0x140] sm:$0xff] %v3902
  %4311 = vst.msk [vmem:[%s9 + $0x148] sm:$0xff] %vm4275, %v3904
  %4312 = vst [vmem:[%s9 + $0x150] sm:$0xff] %v3906
  %4313 = vst [vmem:[%s9 + $0x158] sm:$0xff] %v3908
  %4314 = vst [vmem:[%s9 + $0x160] sm:$0xff] %v3910
  %4315 = vst [vmem:[%s9 + $0x168] sm:$0xff] %v3912
  %4316 = vst [vmem:[%s9 + $0x170] sm:$0xff] %v3914
  %4317 = vst [vmem:[%s9 + $0x178] sm:$0xff] %v3916
  %4318 = vst.msk [vmem:[%s9 + $0x180] sm:$0xff] %vm4275, %v3918
  %4319 = vst [vmem:[%s9 + $0x188] sm:$0xff] %v3920
  %4320 = vst [vmem:[%s9 + $0x190] sm:$0xff] %v3922
  %4321 = vst [vmem:[%s9 + $0x198] sm:$0xff] %v3924
  %4322 = vst [vmem:[%s9 + $0x1a0] sm:$0xff] %v3926
  %4323 = vst [vmem:[%s9 + $0x1a8] sm:$0xff] %v3928
  %4324 = vst [vmem:[%s9 + $0x1b0] sm:$0xff] %v3930
  %4325 = vst.msk [vmem:[%s9 + $0x1b8] sm:$0xff] %vm4275, %v3932
  %4326 = vst [vmem:[%s9 + $0x1c0] sm:$0xff] %v3934
  %4327 = vst [vmem:[%s9 + $0x1c8] sm:$0xff] %v3936
  %4328 = vst [vmem:[%s9 + $0x1d0] sm:$0xff] %v3938
  %4329 = vst [vmem:[%s9 + $0x1d8] sm:$0xff] %v3940
  %4330 = vst [vmem:[%s9 + $0x1e0] sm:$0xff] %v3942
  %4331 = vst [vmem:[%s9 + $0x1e8] sm:$0xff] %v3944
  %4332 = vst.msk [vmem:[%s9 + $0x1f0] sm:$0xff] %vm4275, %v3946
  %4333 = vst [vmem:[%s9 + $0x1f8] sm:$0xff] %v3948
  %4334 = vst [vmem:[%s9 + $0x200] sm:$0xff] %v3950
  %4335 = vst [vmem:[%s9 + $0x208] sm:$0xff] %v3952
  %4336 = vst [vmem:[%s9 + $0x210] sm:$0xff] %v3954
  %4337 = vst [vmem:[%s9 + $0x218] sm:$0xff] %v3956
  %4338 = vst [vmem:[%s9 + $0x220] sm:$0xff] %v3958
  %4339 = vst.msk [vmem:[%s9 + $0x228] sm:$0xff] %vm4275, %v3960
  %4340 = vst [vmem:[%s9 + $0x230] sm:$0xff] %v3962
  %4341 = vst [vmem:[%s9 + $0x238] sm:$0xff] %v3964
  %4342 = vst [vmem:[%s9 + $0x240] sm:$0xff] %v3966
  %4343 = vst [vmem:[%s9 + $0x248] sm:$0xff] %v3968
  %4344 = vst [vmem:[%s9 + $0x250] sm:$0xff] %v3970
  %4345 = vst [vmem:[%s9 + $0x258] sm:$0xff] %v3972
  %4346 = vst.msk [vmem:[%s9 + $0x260] sm:$0xff] %vm4275, %v3974
  %4347 = vst [vmem:[%s9 + $0x268] sm:$0xff] %v3976
  %4348 = vst [vmem:[%s9 + $0x270] sm:$0xff] %v3978
  %4349 = vst [vmem:[%s9 + $0x278] sm:$0xff] %v3980
  %4350 = vst [vmem:[%s9 + $0x280] sm:$0xff] %v3982
  %4351 = vst [vmem:[%s9 + $0x288] sm:$0xff] %v3984
  %4352 = vst [vmem:[%s9 + $0x290] sm:$0xff] %v3986
  %4353 = vst.msk [vmem:[%s9 + $0x298] sm:$0xff] %vm4275, %v3988
  %4354 = vst [vmem:[%s9 + $0x2a0] sm:$0xff] %v3990
  %4355 = vst [vmem:[%s9 + $0x2a8] sm:$0xff] %v3992
  %4356 = vst [vmem:[%s9 + $0x2b0] sm:$0xff] %v3994
  %4357 = vst [vmem:[%s9 + $0x2b8] sm:$0xff] %v3996
  %4358 = vst [vmem:[%s9 + $0x2c0] sm:$0xff] %v3998
  %4359 = vst [vmem:[%s9 + $0x2c8] sm:$0xff] %v4000
  %4360 = vst.msk [vmem:[%s9 + $0x2d0] sm:$0xff] %vm4275, %v4002
  %4361 = vst [vmem:[%s9 + $0x2d8] sm:$0xff] %v4004
  %4362 = vst [vmem:[%s9 + $0x2e0] sm:$0xff] %v4006
  %4363 = vst [vmem:[%s9 + $0x2e8] sm:$0xff] %v4008
  %4364 = vst [vmem:[%s9 + $0x2f0] sm:$0xff] %v4010
  %4365 = vst [vmem:[%s9 + $0x2f8] sm:$0xff] %v4012
  %4366 = vst [vmem:[%s9 + $0x300] sm:$0xff] %v4014
  %4367 = vst.msk [vmem:[%s9 + $0x308] sm:$0xff] %vm4275, %v4016
  %4368 = vst [vmem:[%s9 + $0x310] sm:$0xff] %v4018
  %4369 = vst [vmem:[%s9 + $0x318] sm:$0xff] %v4020
  %4370 = vst [vmem:[%s9 + $0x320] sm:$0xff] %v4022
  %4371 = vst [vmem:[%s9 + $0x328] sm:$0xff] %v4024
  %4372 = vst [vmem:[%s9 + $0x330] sm:$0xff] %v4026
  %4373 = vst [vmem:[%s9 + $0x338] sm:$0xff] %v4028
  %4374 = vst.msk [vmem:[%s9 + $0x340] sm:$0xff] %vm4275, %v4030
  %4375 = vst [vmem:[%s9 + $0x348] sm:$0xff] %v4032
  %4376 = vst [vmem:[%s9 + $0x350] sm:$0xff] %v4034
  %4377 = vst [vmem:[%s9 + $0x358] sm:$0xff] %v4036
  %4378 = vst [vmem:[%s9 + $0x360] sm:$0xff] %v4038
  %4379 = vst [vmem:[%s9 + $0x368] sm:$0xff] %v4040
  %4380 = vst [vmem:[%s9 + $0x370] sm:$0xff] %v4042
  %4381 = vst.msk [vmem:[%s9 + $0x378] sm:$0xff] %vm4275, %v4044
  %4382 = vst [vmem:[%s9 + $0x380] sm:$0xff] %v4046
  %4383 = vst [vmem:[%s9 + $0x388] sm:$0xff] %v4048
  %4384 = vst [vmem:[%s9 + $0x390] sm:$0xff] %v4050
  %4385 = vst [vmem:[%s9 + $0x398] sm:$0xff] %v4052
  %4386 = vst [vmem:[%s9 + $0x3a0] sm:$0xff] %v4054
  %4387 = vst [vmem:[%s9 + $0x3a8] sm:$0xff] %v4056
  %4388 = vst.msk [vmem:[%s9 + $0x3b0] sm:$0xff] %vm4275, %v4058
  %4389 = vst [vmem:[%s9 + $0x3b8] sm:$0xff] %v4060
  %4390 = vst [vmem:[%s9 + $0x3c0] sm:$0xff] %v4062
  %4391 = vst [vmem:[%s9 + $0x3c8] sm:$0xff] %v4064
  %4392 = vst [vmem:[%s9 + $0x3d0] sm:$0xff] %v4066
  %4393 = vst [vmem:[%s9 + $0x3d8] sm:$0xff] %v4068
  %4394 = vst [vmem:[%s9 + $0x3e0] sm:$0xff] %v4070
  %4395 = vst.msk [vmem:[%s9 + $0x3e8] sm:$0xff] %vm4275, %v4072
  %4396 = vst [vmem:[%s9 + $0x3f0] sm:$0xff] %v4074
  %4397 = vst [vmem:[%s9 + $0x3f8] sm:$0xff] %v4076
  %4398 = vst [vmem:[%s9 + $0x400] sm:$0xff] %v4078
  %4399 = vst [vmem:[%s9 + $0x408] sm:$0xff] %v4080
  %4400 = vst [vmem:[%s9 + $0x410] sm:$0xff] %v4082
  %4401 = vst [vmem:[%s9 + $0x418] sm:$0xff] %v4084
  %4402 = vst.msk [vmem:[%s9 + $0x420] sm:$0xff] %vm4275, %v4086
  %4403 = vst [vmem:[%s9 + $0x428] sm:$0xff] %v4088
  %4404 = vst [vmem:[%s9 + $0x430] sm:$0xff] %v4090
  %4405 = vst [vmem:[%s9 + $0x438] sm:$0xff] %v4092
  %4406 = vst [vmem:[%s9 + $0x440] sm:$0xff] %v4094
  %4407 = vst [vmem:[%s9 + $0x448] sm:$0xff] %v4096
  %4408 = vst [vmem:[%s9 + $0x450] sm:$0xff] %v4098
  %4409 = vst.msk [vmem:[%s9 + $0x458] sm:$0xff] %vm4275, %v4100
  %4410 = vst [vmem:[%s9 + $0x460] sm:$0xff] %v4102
  %4411 = vst [vmem:[%s9 + $0x468] sm:$0xff] %v4104
  %4412 = vst [vmem:[%s9 + $0x470] sm:$0xff] %v4106
  %4413 = vst [vmem:[%s9 + $0x478] sm:$0xff] %v4108
  %4414 = vst [vmem:[%s9 + $0x480] sm:$0xff] %v4110
  %4415 = vst [vmem:[%s9 + $0x488] sm:$0xff] %v4112
  %4416 = vst.msk [vmem:[%s9 + $0x490] sm:$0xff] %vm4275, %v4114
  %4417 = vst [vmem:[%s9 + $0x498] sm:$0xff] %v4116
  %4418 = vst [vmem:[%s9 + $0x4a0] sm:$0xff] %v4118
  %4419 = vst [vmem:[%s9 + $0x4a8] sm:$0xff] %v4120
  %4420 = vst [vmem:[%s9 + $0x4b0] sm:$0xff] %v4122
  %4421 = vst [vmem:[%s9 + $0x4b8] sm:$0xff] %v4124
  %4422 = vst [vmem:[%s9 + $0x4c0] sm:$0xff] %v4126
  %4423 = vst.msk [vmem:[%s9 + $0x4c8] sm:$0xff] %vm4275, %v4128
  %4424 = vst [vmem:[%s9 + $0x4d0] sm:$0xff] %v4130
  %4425 = vst [vmem:[%s9 + $0x4d8] sm:$0xff] %v4132
  %4426 = vst [vmem:[%s9 + $0x4e0] sm:$0xff] %v4134
  %4427 = vst [vmem:[%s9 + $0x4e8] sm:$0xff] %v4136
  %4428 = vst [vmem:[%s9 + $0x4f0] sm:$0xff] %v4138
  %4429 = vst [vmem:[%s9 + $0x4f8] sm:$0xff] %v4140
  %4430 = vst.msk [vmem:[%s9 + $0x500] sm:$0xff] %vm4275, %v4142
  %4431 = vst [vmem:[%s9 + $0x508] sm:$0xff] %v4144
  %4432 = vst [vmem:[%s9 + $0x510] sm:$0xff] %v4146
  %4433 = vst [vmem:[%s9 + $0x518] sm:$0xff] %v4148
  %4434 = vst [vmem:[%s9 + $0x520] sm:$0xff] %v4150
  %4435 = vst [vmem:[%s9 + $0x528] sm:$0xff] %v4152
  %4436 = vst [vmem:[%s9 + $0x530] sm:$0xff] %v4154
  %4437 = vst.msk [vmem:[%s9 + $0x538] sm:$0xff] %vm4275, %v4156
  %4438 = vst [vmem:[%s9 + $0x540] sm:$0xff] %v4158
  %4439 = vst [vmem:[%s9 + $0x548] sm:$0xff] %v4160
  %4440 = vst [vmem:[%s9 + $0x550] sm:$0xff] %v4162
  %4441 = vst [vmem:[%s9 + $0x558] sm:$0xff] %v4164
  %4442 = vst [vmem:[%s9 + $0x560] sm:$0xff] %v4166
  %4443 = vst [vmem:[%s9 + $0x568] sm:$0xff] %v4168
  %4444 = vst.msk [vmem:[%s9 + $0x570] sm:$0xff] %vm4275, %v4170
  %4445 = vst [vmem:[%s9 + $0x578] sm:$0xff] %v4172
  %4446 = vst [vmem:[%s9 + $0x580] sm:$0xff] %v4174
  %4447 = vst [vmem:[%s9 + $0x588] sm:$0xff] %v4176
  %4448 = vst [vmem:[%s9 + $0x590] sm:$0xff] %v4178
  %4449 = vst [vmem:[%s9 + $0x598] sm:$0xff] %v4180
  %4450 = vst [vmem:[%s9 + $0x5a0] sm:$0xff] %v4182
  %4451 = vst.msk [vmem:[%s9 + $0x5a8] sm:$0xff] %vm4275, %v4184
  %4452 = vst [vmem:[%s9 + $0x5b0] sm:$0xff] %v4186
  %4453 = vst [vmem:[%s9 + $0x5b8] sm:$0xff] %v4188
  %4454 = vst [vmem:[%s9 + $0x5c0] sm:$0xff] %v4190
  %4455 = vst [vmem:[%s9 + $0x5c8] sm:$0xff] %v4192
  %4456 = vst [vmem:[%s9 + $0x5d0] sm:$0xff] %v4194
  %4457 = vst [vmem:[%s9 + $0x5d8] sm:$0xff] %v4196
  %4458 = vst.msk [vmem:[%s9 + $0x5e0] sm:$0xff] %vm4275, %v4198
  %4459 = vst [vmem:[%s9 + $0x5e8] sm:$0xff] %v4200
  %4460 = vst [vmem:[%s9 + $0x5f0] sm:$0xff] %v4202
  %4461 = vst [vmem:[%s9 + $0x5f8] sm:$0xff] %v4204
  %4462 = vst [vmem:[%s9 + $0x600] sm:$0xff] %v4206
  %4463 = vst [vmem:[%s9 + $0x608] sm:$0xff] %v4208
  %4464 = vst [vmem:[%s9 + $0x610] sm:$0xff] %v4210
  %4465 = vst.msk [vmem:[%s9 + $0x618] sm:$0xff] %vm4275, %v4212
  %4466 = vst [vmem:[%s9 + $0x620] sm:$0xff] %v4214
  %4467 = vst [vmem:[%s9 + $0x628] sm:$0xff] %v4216
  %4468 = vst [vmem:[%s9 + $0x630] sm:$0xff] %v4218
  %4469 = vst [vmem:[%s9 + $0x638] sm:$0xff] %v4220
  %4470 = vst [vmem:[%s9 + $0x640] sm:$0xff] %v4222
  %4471 = vst [vmem:[%s9 + $0x648] sm:$0xff] %v4224
  %4472 = vst.msk [vmem:[%s9 + $0x650] sm:$0xff] %vm4275, %v4226
  %4473 = vst [vmem:[%s9 + $0x658] sm:$0xff] %v4228
  %4474 = vst [vmem:[%s9 + $0x660] sm:$0xff] %v4230
  %4475 = vst [vmem:[%s9 + $0x668] sm:$0xff] %v4232
  %4476 = vst [vmem:[%s9 + $0x670] sm:$0xff] %v4234
  %4477 = vst [vmem:[%s9 + $0x678] sm:$0xff] %v4236
  %4478 = vst [vmem:[%s9 + $0x680] sm:$0xff] %v4238
  %4479 = vst.msk [vmem:[%s9 + $0x688] sm:$0xff] %vm4275, %v4240
  %4480 = vst [vmem:[%s9 + $0x690] sm:$0xff] %v4242
  %4481 = vst [vmem:[%s9 + $0x698] sm:$0xff] %v4244
  %4482 = vst [vmem:[%s9 + $0x6a0] sm:$0xff] %v4246
  %4483 = vst [vmem:[%s9 + $0x6a8] sm:$0xff] %v4248
  %4484 = vst [vmem:[%s9 + $0x6b0] sm:$0xff] %v4250
  %4485 = vst [vmem:[%s9 + $0x6b8] sm:$0xff] %v4252
  %4486 = vst.msk [vmem:[%s9 + $0x6c0] sm:$0xff] %vm4275, %v4254
  %4487 = vst [vmem:[%s9 + $0x6c8] sm:$0xff] %v4256
  %4488 = vst [vmem:[%s9 + $0x6d0] sm:$0xff] %v4258
  %4489 = vst [vmem:[%s9 + $0x6d8] sm:$0xff] %v4260
  %4490 = vst [vmem:[%s9 + $0x6e0] sm:$0xff] %v4262
  %4491 = vst [vmem:[%s9 + $0x6e8] sm:$0xff] %v4264
  %4492 = vst [vmem:[%s9 + $0x6f0] sm:$0xff] %v4266
  %4493 = vst.msk [vmem:[%s9 + $0x6f8] sm:$0xff] %vm4275, %v4268
  // Predicated region
  $region38: #{tpu_custom_call.1} parent=0 // pred_check
    _
  $region39: #{tpu_custom_call.1} parent=0 // pred_check_branch
    %4495 = sbr.rel (0) target = $region41
  $region40: #{tpu_custom_call.1} parent=0 // pred_region
    _
  $region41: #{tpu_custom_call.1} parent=0 // pred_fallthru
    _
  // Predicated region
  $region42: #{tpu_custom_call.1} parent=0 // pred_check
    _
  $region43: #{tpu_custom_call.1} parent=0 // pred_check_branch
    %4497 = sbr.rel (0) target = $region45
  $region44: #{tpu_custom_call.1} parent=0 // pred_region
    _
  $region45: #{tpu_custom_call.1} parent=0 // pred_fallthru
    _

</llo_original>
